<compile_context>
chip_gen: v5e
topology: v5e:2x2
jax: 0.10.0
libtpu: 0.0.40
codegen_flags: <defaults>
</compile_context>

<pallas_src>
import jax
import jax.numpy as jnp
import numpy as np
from jax.experimental import pallas as pl
from jax.experimental.pallas import tpu as pltpu


# --------------------------------------------------------------------------- #
# Pallas kernel
# --------------------------------------------------------------------------- #
def _seqlab_kernel(x_ref,                       # (T*B, H) embeddings, time-major rows
                   len_ref,                     # (B, 1) int32
                   sent_ref,                    # (B, S)
                   tw_ref, tbias_ref,           # (S, H), (1, H)
                   wih0_ref,                    # (H, 8H)  layer-0 input weights (fwd|bwd)
                   whh0f_ref, whh0b_ref,        # (H, 4H) each
                   b0_ref,                      # (1, 8H)
                   w1top_ref, w1bot_ref,        # (H, 8H) each (rows for l0-fwd / l0-bwd)
                   whh1f_ref, whh1b_ref,        # (H, 4H) each
                   b1_ref,                      # (1, 8H)
                   fcw_ref, fcb_ref,            # (2H, O), (1, O)
                   out_ref,                     # (B, O)
                   xg0_ref, xg1_ref,            # scratch (T*B, 8H) each
                   l0f_ref, l0b_ref):           # scratch (T*B, H) each
    TB, H = x_ref.shape
    B = len_ref.shape[0]
    T = TB // B
    G = 4 * H

    lengths = len_ref[...]                               # (B, 1) int32
    lens_f = lengths.astype(jnp.float32)
    t_last = jnp.max(lens_f, axis=0, keepdims=True) - 1.0  # (1, 1) = max(len) - 1

    # h_0 for every (layer, direction) = translate_sen(sentences); c_0 = 0
    h_init = (jnp.dot(sent_ref[...], tw_ref[...],
                      preferred_element_type=jnp.float32) + tbias_ref[...])
    c_zero = jnp.zeros_like(h_init)

    def cell(xg, h, c, w_hh):
        """One LSTM cell step; xg already contains x @ w_ih + b (PyTorch i,f,g,o)."""
        gates = xg + jnp.dot(h, w_hh, preferred_element_type=jnp.float32)  # (B, 4H)
        sg = jax.nn.sigmoid(gates)          # one full-vreg EUP push
        th = jnp.tanh(gates)                # one full-vreg EUP push
        i = sg[:, 0:H]
        f = sg[:, H:2 * H]
        g = th[:, 2 * H:3 * H]
        o = sg[:, 3 * H:4 * H]
        c_new = f * c + i * g
        h_new = o * jnp.tanh(c_new)
        return h_new, c_new

    # ---- hoisted layer-0 input-gate projections (both directions, bias folded) --
    xg0_ref[...] = (jnp.dot(x_ref[...], wih0_ref[...],
                            preferred_element_type=jnp.float32) + b0_ref[...])

    whh0f = whh0f_ref[...]
    whh0b = whh0b_ref[...]

    # ---- layer 0 : fwd + bwd fused, fully unrolled over T ------------------
    h_f, c_f = h_init, c_zero
    h_b, c_b = h_init, c_zero
    for k in range(T):
        t, tb = k, T - 1 - k
        xf = xg0_ref[t * B:(t + 1) * B, 0:G]
        xb = xg0_ref[tb * B:(tb + 1) * B, G:2 * G]
        hf_new, cf_new = cell(xf, h_f, c_f, whh0f)
        hb_new, cb_new = cell(xb, h_b, c_b, whh0b)
        vf = t < lengths                                  # (B, 1) validity masks
        vb = tb < lengths
        h_f = jnp.where(vf, hf_new, h_f)
        c_f = jnp.where(vf, cf_new, c_f)
        h_b = jnp.where(vb, hb_new, h_b)
        c_b = jnp.where(vb, cb_new, c_b)
        l0f_ref[t * B:(t + 1) * B, :] = jnp.where(vf, hf_new, 0.0)
        l0b_ref[tb * B:(tb + 1) * B, :] = jnp.where(vb, hb_new, 0.0)

    # ---- hoisted layer-1 input-gate projections -----------------------------
    xg1_ref[...] = (jnp.dot(l0f_ref[...], w1top_ref[...],
                            preferred_element_type=jnp.float32)
                    + jnp.dot(l0b_ref[...], w1bot_ref[...],
                              preferred_element_type=jnp.float32)
                    + b1_ref[...])

    whh1f = whh1f_ref[...]
    whh1b = whh1b_ref[...]

    # ---- layer 1 : fwd + bwd fused, fully unrolled over T ------------------
    h_f, c_f = h_init, c_zero
    h_b, c_b = h_init, c_zero
    hb_cap = jnp.zeros_like(h_init)         # backward output at t_last (vreg carry)
    for k in range(T):
        t, tb = k, T - 1 - k
        xf = xg1_ref[t * B:(t + 1) * B, 0:G]
        xb = xg1_ref[tb * B:(tb + 1) * B, G:2 * G]
        hf_new, cf_new = cell(xf, h_f, c_f, whh1f)
        hb_new, cb_new = cell(xb, h_b, c_b, whh1b)
        vf = t < lengths
        vb = tb < lengths
        h_f = jnp.where(vf, hf_new, h_f)
        c_f = jnp.where(vf, cf_new, c_f)
        h_b = jnp.where(vb, hb_new, h_b)
        c_b = jnp.where(vb, cb_new, c_b)
        hb_cap = jnp.where(jnp.logical_and(tb == t_last, vb), hb_new, hb_cap)

    # forward output at t_last: the forward carry stops updating after each
    # example's last valid step, so the final carry == h_new at t_last for
    # full-length examples; padded examples read zero (pad_packed_sequence).
    out_fwd = jnp.where(lens_f > t_last, h_f, 0.0)        # (B, H)

    fcw = fcw_ref[...]
    out_ref[...] = (jnp.dot(out_fwd, fcw[0:H, :], preferred_element_type=jnp.float32)
                    + jnp.dot(hb_cap, fcw[H:2 * H, :], preferred_element_type=jnp.float32)
                    + fcb_ref[...])


# --------------------------------------------------------------------------- #
# Wrapper
# --------------------------------------------------------------------------- #
def seqlab_forward(params, input_ids, lengths, sentences):
    B, T = input_ids.shape
    H = params["hidden"]
    G = 4 * H
    O = params["fcw"].shape[1]

    # Glue: embedding gather + time-major flatten (row t*B + b = token (b, t)).
    emb = jnp.take(params["emb"], input_ids, axis=0)                 # (B, T, H)
    x2 = jnp.transpose(emb, (1, 0, 2)).reshape(T * B, H).astype(jnp.float32)
    len2d = lengths.astype(jnp.int32).reshape(B, 1)

    # Concatenated / reorganized weights so the hoisted gate matmuls are
    # single well-shaped (H, 8H) products with biases folded in.
    wih0_cat = jnp.concatenate([params["w_ih0"][0], params["w_ih0"][1]], axis=1)  # (H, 8H)
    b0_cat = jnp.concatenate([params["b0"][0], params["b0"][1]], axis=1)          # (1, 8H)
    w1f, w1b = params["w_ih1"][0], params["w_ih1"][1]                              # (2H, 4H)
    w1_top = jnp.concatenate([w1f[:H], w1b[:H]], axis=1)                           # (H, 8H)
    w1_bot = jnp.concatenate([w1f[H:], w1b[H:]], axis=1)                           # (H, 8H)
    b1_cat = jnp.concatenate([params["b1"][0], params["b1"][1]], axis=1)           # (1, 8H)

    in_arrays = (
        x2, len2d, sentences.astype(jnp.float32),
        params["tw"], params["tb"].reshape(1, H),
        wih0_cat, params["w_hh0"][0], params["w_hh0"][1], b0_cat,
        w1_top, w1_bot, params["w_hh1"][0], params["w_hh1"][1], b1_cat,
        params["fcw"], params["fcb"].reshape(1, O),
    )

    def full(shape):
        n = len(shape)
        return pl.BlockSpec(shape, lambda i, _n=n: (0,) * _n)

    grid_spec = pltpu.PrefetchScalarGridSpec(
        num_scalar_prefetch=0,
        grid=(1,),
        in_specs=[full(a.shape) for a in in_arrays],
        out_specs=full((B, O)),
        scratch_shapes=[
            pltpu.VMEM((T * B, 2 * G), jnp.float32),   # layer-0 x-gates (fwd|bwd)
            pltpu.VMEM((T * B, 2 * G), jnp.float32),   # layer-1 x-gates (fwd|bwd)
            pltpu.VMEM((T * B, H), jnp.float32),       # layer-0 forward outputs
            pltpu.VMEM((T * B, H), jnp.float32),       # layer-0 backward outputs
        ],
    )

    return pl.pallas_call(
        _seqlab_kernel,
        out_shape=jax.ShapeDtypeStruct((B, O), jnp.float32),
        grid_spec=grid_spec,
        compiler_params=pltpu.CompilerParams(dimension_semantics=("arbitrary",)),
    )(*in_arrays)


# --------------------------------------------------------------------------- #
# Deterministic parameter init (shapes follow ModelSeqLab3.__init__)
# --------------------------------------------------------------------------- #
def init_params(key, vocab, H, S, O):
    ks = jax.random.split(key, 16)
    kb = 1.0 / np.sqrt(H)

    def u(k, shape, bound):
        return jax.random.uniform(k, shape, jnp.float32, -bound, bound)

    def lstm_dir(k, in_dim):
        k1, k2, k3, k4 = jax.random.split(k, 4)
        w_ih = u(k1, (in_dim, 4 * H), kb)          # stored transposed: (in, 4H)
        w_hh = u(k2, (H, 4 * H), kb)
        bias = u(k3, (4 * H,), kb) + u(k4, (4 * H,), kb)   # b_ih + b_hh
        return w_ih, w_hh, bias

    wi0f, wh0f, b0f = lstm_dir(ks[5], H)
    wi0b, wh0b, b0b = lstm_dir(ks[6], H)
    wi1f, wh1f, b1f = lstm_dir(ks[7], 2 * H)
    wi1b, wh1b, b1b = lstm_dir(ks[8], 2 * H)

    return {
        "hidden": H,
        "emb": jax.random.normal(ks[0], (vocab, H), jnp.float32),
        "tw": u(ks[1], (S, H), 1.0 / np.sqrt(S)),
        "tb": u(ks[2], (H,), 1.0 / np.sqrt(S)),
        "fcw": u(ks[3], (2 * H, O), 1.0 / np.sqrt(2 * H)),
        "fcb": u(ks[4], (O,), 1.0 / np.sqrt(2 * H)),
        "w_ih0": jnp.stack([wi0f, wi0b]),              # (2, H, 4H)
        "w_hh0": jnp.stack([wh0f, wh0b]),              # (2, H, 4H)
        "b0": jnp.stack([b0f, b0b])[:, None, :],       # (2, 1, 4H)
        "w_ih1": jnp.stack([wi1f, wi1b]),              # (2, 2H, 4H)
        "w_hh1": jnp.stack([wh1f, wh1b]),              # (2, H, 4H)
        "b1": jnp.stack([b1f, b1b])[:, None, :],       # (2, 1, 4H)
    }


# --------------------------------------------------------------------------- #
# Pure-JAX reference (same packed-LSTM semantics) for correctness check
# --------------------------------------------------------------------------- #
def reference_forward(params, input_ids, lengths, sentences):
    H = params["hidden"]
    emb = jnp.take(params["emb"], input_ids, axis=0)           # (B, T, H)
    B, T, _ = emb.shape
    h0 = sentences @ params["tw"] + params["tb"]
    lens = jnp.asarray(lengths)

    def run_dir(xs, w_ih, w_hh, b, reverse):
        h, c = h0, jnp.zeros_like(h0)
        outs = [None] * T
        order = range(T - 1, -1, -1) if reverse else range(T)
        for t in order:
            g = xs[:, t] @ w_ih + h @ w_hh + b
            i = jax.nn.sigmoid(g[:, :H])
            f = jax.nn.sigmoid(g[:, H:2 * H])
            gg = jnp.tanh(g[:, 2 * H:3 * H])
            o = jax.nn.sigmoid(g[:, 3 * H:])
            c_new = f * c + i * gg
            h_new = o * jnp.tanh(c_new)
            valid = (t < lens)[:, None]
            h = jnp.where(valid, h_new, h)
            c = jnp.where(valid, c_new, c)
            outs[t] = jnp.where(valid, h_new, 0.0)
        return jnp.stack(outs, axis=1)                         # (B, T, H)

    f0 = run_dir(emb, params["w_ih0"][0], params["w_hh0"][0], params["b0"][0, 0], False)
    r0 = run_dir(emb, params["w_ih0"][1], params["w_hh0"][1], params["b0"][1, 0], True)
    l1 = jnp.concatenate([f0, r0], axis=-1)
    f1 = run_dir(l1, params["w_ih1"][0], params["w_hh1"][0], params["b1"][0, 0], False)
    r1 = run_dir(l1, params["w_ih1"][1], params["w_hh1"][1], params["b1"][1, 0], True)
    out = jnp.concatenate([f1, r1], axis=-1)
    t_last = int(jnp.max(lens)) - 1
    return out[:, t_last, :] @ params["fcw"] + params["fcb"]


# --------------------------------------------------------------------------- #
if __name__ == "__main__":
    VOCAB, H, S, O = 50, 32, 768, 16     # small hidden/output; sentence_size fixed at 768
    B, T = 2, 8

    key = jax.random.PRNGKey(0)
    kp, ki, ks = jax.random.split(key, 3)
    params = init_params(kp, VOCAB, H, S, O)

    input_ids = jax.random.randint(ki, (B, T), 0, VOCAB, jnp.int32)
    lengths = jnp.array([6, 8], dtype=jnp.int32)           # padded batch, unsorted OK
    sentences = jax.random.normal(ks, (B, S), jnp.float32)

    out = seqlab_forward(params, input_ids, lengths, sentences)
    out = jax.block_until_ready(out)

    ref = reference_forward(params, input_ids, lengths, sentences)
    assert out.shape == (B, O)
    max_diff = float(np.max(np.abs(np.asarray(out) - np.asarray(ref))))
    assert np.allclose(np.asarray(out), np.asarray(ref), atol=2e-2, rtol=2e-2), \
        f"mismatch vs reference, max diff {max_diff}"

    print("KERNEL_OK")
</pallas_src>

<mosaic_0001>
module attributes {stable_mosaic.version = 11 : i64} {
  func.func @_seqlab_kernel(%arg0: i32, %arg1: memref<16x32xf32, #tpu.memory_space<vmem>>, %arg2: memref<2x1xi32, #tpu.memory_space<vmem>>, %arg3: memref<2x768xf32, #tpu.memory_space<vmem>>, %arg4: memref<768x32xf32, #tpu.memory_space<vmem>>, %arg5: memref<1x32xf32, #tpu.memory_space<vmem>>, %arg6: memref<32x256xf32, #tpu.memory_space<vmem>>, %arg7: memref<32x128xf32, #tpu.memory_space<vmem>>, %arg8: memref<32x128xf32, #tpu.memory_space<vmem>>, %arg9: memref<1x256xf32, #tpu.memory_space<vmem>>, %arg10: memref<32x256xf32, #tpu.memory_space<vmem>>, %arg11: memref<32x256xf32, #tpu.memory_space<vmem>>, %arg12: memref<32x128xf32, #tpu.memory_space<vmem>>, %arg13: memref<32x128xf32, #tpu.memory_space<vmem>>, %arg14: memref<1x256xf32, #tpu.memory_space<vmem>>, %arg15: memref<64x16xf32, #tpu.memory_space<vmem>>, %arg16: memref<1x16xf32, #tpu.memory_space<vmem>>, %arg17: memref<2x16xf32, #tpu.memory_space<vmem>>, %arg18: memref<16x256xf32, #tpu.memory_space<vmem>>, %arg19: memref<16x256xf32, #tpu.memory_space<vmem>>, %arg20: memref<16x32xf32, #tpu.memory_space<vmem>>, %arg21: memref<16x32xf32, #tpu.memory_space<vmem>>) attributes {dimension_semantics = [#tpu.dimension_semantics<arbitrary>], iteration_bounds = array<i64: 1>, scalar_prefetch = 0 : i64, scratch_operands = 4 : i64, tpu.core_type = #tpu.core_type<tc>, window_params = [{pipeline_mode = #tpu.pipeline_mode<synchronous>, transform_indices = @transform_0, window_bounds = array<i64: 16, 32>}, {pipeline_mode = #tpu.pipeline_mode<synchronous>, transform_indices = @transform_1, window_bounds = array<i64: 2, 1>}, {pipeline_mode = #tpu.pipeline_mode<synchronous>, transform_indices = @transform_2, window_bounds = array<i64: 2, 768>}, {pipeline_mode = #tpu.pipeline_mode<synchronous>, transform_indices = @transform_3, window_bounds = array<i64: 768, 32>}, {pipeline_mode = #tpu.pipeline_mode<synchronous>, transform_indices = @transform_4, window_bounds = array<i64: 1, 32>}, {pipeline_mode = #tpu.pipeline_mode<synchronous>, transform_indices = @transform_5, window_bounds = array<i64: 32, 256>}, {pipeline_mode = #tpu.pipeline_mode<synchronous>, transform_indices = @transform_6, window_bounds = array<i64: 32, 128>}, {pipeline_mode = #tpu.pipeline_mode<synchronous>, transform_indices = @transform_7, window_bounds = array<i64: 32, 128>}, {pipeline_mode = #tpu.pipeline_mode<synchronous>, transform_indices = @transform_8, window_bounds = array<i64: 1, 256>}, {pipeline_mode = #tpu.pipeline_mode<synchronous>, transform_indices = @transform_9, window_bounds = array<i64: 32, 256>}, {pipeline_mode = #tpu.pipeline_mode<synchronous>, transform_indices = @transform_10, window_bounds = array<i64: 32, 256>}, {pipeline_mode = #tpu.pipeline_mode<synchronous>, transform_indices = @transform_11, window_bounds = array<i64: 32, 128>}, {pipeline_mode = #tpu.pipeline_mode<synchronous>, transform_indices = @transform_12, window_bounds = array<i64: 32, 128>}, {pipeline_mode = #tpu.pipeline_mode<synchronous>, transform_indices = @transform_13, window_bounds = array<i64: 1, 256>}, {pipeline_mode = #tpu.pipeline_mode<synchronous>, transform_indices = @transform_14, window_bounds = array<i64: 64, 16>}, {pipeline_mode = #tpu.pipeline_mode<synchronous>, transform_indices = @transform_15, window_bounds = array<i64: 1, 16>}, {pipeline_mode = #tpu.pipeline_mode<synchronous>, transform_indices = @transform_16, window_bounds = array<i64: 2, 16>}]} {
    %c0 = arith.constant 0 : index
    %c0_0 = arith.constant 0 : index
    %0 = vector.load %arg2[%c0, %c0_0] : memref<2x1xi32, #tpu.memory_space<vmem>>, vector<2x1xi32>
    %1 = arith.sitofp %0 : vector<2x1xi32> to vector<2x1xf32>
    %cst = arith.constant dense<0xFF800000> : vector<1xf32>
    %2 = vector.multi_reduction <maximumf>, %1, %cst [0] : vector<2x1xf32> to vector<1xf32>
    %3 = vector.shape_cast %2 : vector<1xf32> to vector<1x1xf32>
    %cst_1 = arith.constant 1.000000e+00 : f32
    %4 = vector.broadcast %cst_1 : f32 to vector<1x1xf32>
    %5 = arith.subf %3, %4 : vector<1x1xf32>
    %c0_2 = arith.constant 0 : index
    %c0_3 = arith.constant 0 : index
    %6 = vector.load %arg3[%c0_2, %c0_3] : memref<2x768xf32, #tpu.memory_space<vmem>>, vector<2x768xf32>
    %c0_4 = arith.constant 0 : index
    %c0_5 = arith.constant 0 : index
    %7 = vector.load %arg4[%c0_4, %c0_5] : memref<768x32xf32, #tpu.memory_space<vmem>>, vector<768x32xf32>
    %cst_6 = arith.constant dense<0.000000e+00> : vector<2x32xf32>
    %8 = tpu.matmul %6, %7, %cst_6 {dimension_numbers = #tpu.dot_dimension_numbers<[1], [0], [0], [1], [0, 0, 1, 1], [], []>} : vector<2x768xf32>, vector<768x32xf32>, vector<2x32xf32> -> vector<2x32xf32>
    %c0_7 = arith.constant 0 : index
    %c0_8 = arith.constant 0 : index
    %9 = vector.load %arg5[%c0_7, %c0_8] : memref<1x32xf32, #tpu.memory_space<vmem>>, vector<1x32xf32>
    %10 = vector.broadcast %9 : vector<1x32xf32> to vector<2x32xf32>
    %11 = arith.addf %8, %10 : vector<2x32xf32>
    %cst_9 = arith.constant 0.000000e+00 : f32
    %12 = vector.broadcast %cst_9 : f32 to vector<2x32xf32>
    %c0_10 = arith.constant 0 : index
    %c0_11 = arith.constant 0 : index
    %13 = vector.load %arg1[%c0_10, %c0_11] : memref<16x32xf32, #tpu.memory_space<vmem>>, vector<16x32xf32>
    %c0_12 = arith.constant 0 : index
    %c0_13 = arith.constant 0 : index
    %14 = vector.load %arg6[%c0_12, %c0_13] : memref<32x256xf32, #tpu.memory_space<vmem>>, vector<32x256xf32>
    %cst_14 = arith.constant dense<0.000000e+00> : vector<16x256xf32>
    %15 = tpu.matmul %13, %14, %cst_14 {dimension_numbers = #tpu.dot_dimension_numbers<[1], [0], [0], [1], [0, 0, 1, 1], [], []>} : vector<16x32xf32>, vector<32x256xf32>, vector<16x256xf32> -> vector<16x256xf32>
    %c0_15 = arith.constant 0 : index
    %c0_16 = arith.constant 0 : index
    %16 = vector.load %arg9[%c0_15, %c0_16] : memref<1x256xf32, #tpu.memory_space<vmem>>, vector<1x256xf32>
    %17 = vector.broadcast %16 : vector<1x256xf32> to vector<16x256xf32>
    %18 = arith.addf %15, %17 : vector<16x256xf32>
    %c0_17 = arith.constant 0 : index
    %c0_18 = arith.constant 0 : index
    %19 = vector.load %arg18[%c0_17, %c0_18] : memref<16x256xf32, #tpu.memory_space<vmem>>, vector<16x256xf32>
    tpu.vector_store %arg18[%c0_17, %c0_18], %18 {strides = array<i32>} : memref<16x256xf32, #tpu.memory_space<vmem>>, vector<16x256xf32>,
    %c0_19 = arith.constant 0 : index
    %c0_20 = arith.constant 0 : index
    %20 = vector.load %arg7[%c0_19, %c0_20] : memref<32x128xf32, #tpu.memory_space<vmem>>, vector<32x128xf32>
    %c0_21 = arith.constant 0 : index
    %c0_22 = arith.constant 0 : index
    %21 = vector.load %arg8[%c0_21, %c0_22] : memref<32x128xf32, #tpu.memory_space<vmem>>, vector<32x128xf32>
    %c0_23 = arith.constant 0 : index
    %c0_24 = arith.constant 0 : index
    %22 = vector.load %arg18[%c0_23, %c0_24] : memref<16x256xf32, #tpu.memory_space<vmem>>, vector<2x128xf32>
    %c14 = arith.constant 14 : index
    %c128 = arith.constant 128 : index
    %23 = vector.load %arg18[%c14, %c128] : memref<16x256xf32, #tpu.memory_space<vmem>>, vector<2x128xf32>
    %cst_25 = arith.constant dense<0.000000e+00> : vector<2x128xf32>
    %24 = tpu.matmul %11, %20, %cst_25 {dimension_numbers = #tpu.dot_dimension_numbers<[1], [0], [0], [1], [0, 0, 1, 1], [], []>} : vector<2x32xf32>, vector<32x128xf32>, vector<2x128xf32> -> vector<2x128xf32>
    %25 = arith.addf %22, %24 : vector<2x128xf32>
    %26 = arith.negf %25 : vector<2x128xf32>
    %27 = math.exp %26 : vector<2x128xf32>
    %cst_26 = arith.constant 1.000000e+00 : f32
    %28 = vector.broadcast %cst_26 : f32 to vector<2x128xf32>
    %29 = arith.addf %28, %27 : vector<2x128xf32>
    %30 = arith.divf %28, %29 : vector<2x128xf32>
    %31 = math.tanh %25 : vector<2x128xf32>
    %32 = vector.extract_strided_slice %30 {offsets = [0, 0], sizes = [2, 32], strides = [1, 1]} : vector<2x128xf32> to vector<2x32xf32>
    %33 = vector.extract_strided_slice %30 {offsets = [0, 32], sizes = [2, 32], strides = [1, 1]} : vector<2x128xf32> to vector<2x32xf32>
    %34 = vector.extract_strided_slice %31 {offsets = [0, 64], sizes = [2, 32], strides = [1, 1]} : vector<2x128xf32> to vector<2x32xf32>
    %35 = vector.extract_strided_slice %30 {offsets = [0, 96], sizes = [2, 32], strides = [1, 1]} : vector<2x128xf32> to vector<2x32xf32>
    %36 = arith.mulf %33, %12 : vector<2x32xf32>
    %37 = arith.mulf %32, %34 : vector<2x32xf32>
    %38 = arith.addf %36, %37 : vector<2x32xf32>
    %39 = math.tanh %38 : vector<2x32xf32>
    %40 = arith.mulf %35, %39 : vector<2x32xf32>
    %cst_27 = arith.constant dense<0.000000e+00> : vector<2x128xf32>
    %41 = tpu.matmul %11, %21, %cst_27 {dimension_numbers = #tpu.dot_dimension_numbers<[1], [0], [0], [1], [0, 0, 1, 1], [], []>} : vector<2x32xf32>, vector<32x128xf32>, vector<2x128xf32> -> vector<2x128xf32>
    %42 = arith.addf %23, %41 : vector<2x128xf32>
    %43 = arith.negf %42 : vector<2x128xf32>
    %44 = math.exp %43 : vector<2x128xf32>
    %cst_28 = arith.constant 1.000000e+00 : f32
    %45 = vector.broadcast %cst_28 : f32 to vector<2x128xf32>
    %46 = arith.addf %45, %44 : vector<2x128xf32>
    %47 = arith.divf %45, %46 : vector<2x128xf32>
    %48 = math.tanh %42 : vector<2x128xf32>
    %49 = vector.extract_strided_slice %47 {offsets = [0, 0], sizes = [2, 32], strides = [1, 1]} : vector<2x128xf32> to vector<2x32xf32>
    %50 = vector.extract_strided_slice %47 {offsets = [0, 32], sizes = [2, 32], strides = [1, 1]} : vector<2x128xf32> to vector<2x32xf32>
    %51 = vector.extract_strided_slice %48 {offsets = [0, 64], sizes = [2, 32], strides = [1, 1]} : vector<2x128xf32> to vector<2x32xf32>
    %52 = vector.extract_strided_slice %47 {offsets = [0, 96], sizes = [2, 32], strides = [1, 1]} : vector<2x128xf32> to vector<2x32xf32>
    %53 = arith.mulf %50, %12 : vector<2x32xf32>
    %54 = arith.mulf %49, %51 : vector<2x32xf32>
    %55 = arith.addf %53, %54 : vector<2x32xf32>
    %56 = math.tanh %55 : vector<2x32xf32>
    %57 = arith.mulf %52, %56 : vector<2x32xf32>
    %c0_i32 = arith.constant 0 : i32
    %58 = vector.broadcast %c0_i32 : i32 to vector<2x1xi32>
    %59 = arith.cmpi sgt, %0, %58 : vector<2x1xi32>
    %c7_i32 = arith.constant 7 : i32
    %60 = vector.broadcast %c7_i32 : i32 to vector<2x1xi32>
    %61 = arith.cmpi sgt, %0, %60 : vector<2x1xi32>
    %62 = vector.shape_cast %59 : vector<2x1xi1> to vector<2x1xi1>
    %63 = vector.broadcast %62 : vector<2x1xi1> to vector<2x32xi1>
    %64 = arith.select %63, %40, %11 : vector<2x32xi1>, vector<2x32xf32>
    %65 = vector.shape_cast %59 : vector<2x1xi1> to vector<2x1xi1>
    %66 = vector.broadcast %65 : vector<2x1xi1> to vector<2x32xi1>
    %67 = arith.select %66, %38, %12 : vector<2x32xi1>, vector<2x32xf32>
    %68 = vector.shape_cast %61 : vector<2x1xi1> to vector<2x1xi1>
    %69 = vector.broadcast %68 : vector<2x1xi1> to vector<2x32xi1>
    %70 = arith.select %69, %57, %11 : vector<2x32xi1>, vector<2x32xf32>
    %71 = vector.shape_cast %61 : vector<2x1xi1> to vector<2x1xi1>
    %72 = vector.broadcast %71 : vector<2x1xi1> to vector<2x32xi1>
    %73 = arith.select %72, %55, %12 : vector<2x32xi1>, vector<2x32xf32>
    %cst_29 = arith.constant 0.000000e+00 : f32
    %74 = vector.shape_cast %59 : vector<2x1xi1> to vector<2x1xi1>
    %75 = vector.broadcast %74 : vector<2x1xi1> to vector<2x32xi1>
    %76 = vector.broadcast %cst_29 : f32 to vector<2x32xf32>
    %77 = arith.select %75, %40, %76 : vector<2x32xi1>, vector<2x32xf32>
    %c0_30 = arith.constant 0 : index
    %c0_31 = arith.constant 0 : index
    %78 = vector.load %arg20[%c0_30, %c0_31] : memref<16x32xf32, #tpu.memory_space<vmem>>, vector<2x32xf32>
    tpu.vector_store %arg20[%c0_30, %c0_31], %77 {strides = array<i32>} : memref<16x32xf32, #tpu.memory_space<vmem>>, vector<2x32xf32>,
    %cst_32 = arith.constant 0.000000e+00 : f32
    %79 = vector.shape_cast %61 : vector<2x1xi1> to vector<2x1xi1>
    %80 = vector.broadcast %79 : vector<2x1xi1> to vector<2x32xi1>
    %81 = vector.broadcast %cst_32 : f32 to vector<2x32xf32>
    %82 = arith.select %80, %57, %81 : vector<2x32xi1>, vector<2x32xf32>
    %c14_33 = arith.constant 14 : index
    %c0_34 = arith.constant 0 : index
    %83 = vector.load %arg21[%c14_33, %c0_34] : memref<16x32xf32, #tpu.memory_space<vmem>>, vector<2x32xf32>
    tpu.vector_store %arg21[%c14_33, %c0_34], %82 {strides = array<i32>} : memref<16x32xf32, #tpu.memory_space<vmem>>, vector<2x32xf32>,
    %c2 = arith.constant 2 : index
    %c0_35 = arith.constant 0 : index
    %84 = vector.load %arg18[%c2, %c0_35] : memref<16x256xf32, #tpu.memory_space<vmem>>, vector<2x128xf32>
    %c12 = arith.constant 12 : index
    %c128_36 = arith.constant 128 : index
    %85 = vector.load %arg18[%c12, %c128_36] : memref<16x256xf32, #tpu.memory_space<vmem>>, vector<2x128xf32>
    %cst_37 = arith.constant dense<0.000000e+00> : vector<2x128xf32>
    %86 = tpu.matmul %64, %20, %cst_37 {dimension_numbers = #tpu.dot_dimension_numbers<[1], [0], [0], [1], [0, 0, 1, 1], [], []>} : vector<2x32xf32>, vector<32x128xf32>, vector<2x128xf32> -> vector<2x128xf32>
    %87 = arith.addf %84, %86 : vector<2x128xf32>
    %88 = arith.negf %87 : vector<2x128xf32>
    %89 = math.exp %88 : vector<2x128xf32>
    %cst_38 = arith.constant 1.000000e+00 : f32
    %90 = vector.broadcast %cst_38 : f32 to vector<2x128xf32>
    %91 = arith.addf %90, %89 : vector<2x128xf32>
    %92 = arith.divf %90, %91 : vector<2x128xf32>
    %93 = math.tanh %87 : vector<2x128xf32>
    %94 = vector.extract_strided_slice %92 {offsets = [0, 0], sizes = [2, 32], strides = [1, 1]} : vector<2x128xf32> to vector<2x32xf32>
    %95 = vector.extract_strided_slice %92 {offsets = [0, 32], sizes = [2, 32], strides = [1, 1]} : vector<2x128xf32> to vector<2x32xf32>
    %96 = vector.extract_strided_slice %93 {offsets = [0, 64], sizes = [2, 32], strides = [1, 1]} : vector<2x128xf32> to vector<2x32xf32>
    %97 = vector.extract_strided_slice %92 {offsets = [0, 96], sizes = [2, 32], strides = [1, 1]} : vector<2x128xf32> to vector<2x32xf32>
    %98 = arith.mulf %95, %67 : vector<2x32xf32>
    %99 = arith.mulf %94, %96 : vector<2x32xf32>
    %100 = arith.addf %98, %99 : vector<2x32xf32>
    %101 = math.tanh %100 : vector<2x32xf32>
    %102 = arith.mulf %97, %101 : vector<2x32xf32>
    %cst_39 = arith.constant dense<0.000000e+00> : vector<2x128xf32>
    %103 = tpu.matmul %70, %21, %cst_39 {dimension_numbers = #tpu.dot_dimension_numbers<[1], [0], [0], [1], [0, 0, 1, 1], [], []>} : vector<2x32xf32>, vector<32x128xf32>, vector<2x128xf32> -> vector<2x128xf32>
    %104 = arith.addf %85, %103 : vector<2x128xf32>
    %105 = arith.negf %104 : vector<2x128xf32>
    %106 = math.exp %105 : vector<2x128xf32>
    %cst_40 = arith.constant 1.000000e+00 : f32
    %107 = vector.broadcast %cst_40 : f32 to vector<2x128xf32>
    %108 = arith.addf %107, %106 : vector<2x128xf32>
    %109 = arith.divf %107, %108 : vector<2x128xf32>
    %110 = math.tanh %104 : vector<2x128xf32>
    %111 = vector.extract_strided_slice %109 {offsets = [0, 0], sizes = [2, 32], strides = [1, 1]} : vector<2x128xf32> to vector<2x32xf32>
    %112 = vector.extract_strided_slice %109 {offsets = [0, 32], sizes = [2, 32], strides = [1, 1]} : vector<2x128xf32> to vector<2x32xf32>
    %113 = vector.extract_strided_slice %110 {offsets = [0, 64], sizes = [2, 32], strides = [1, 1]} : vector<2x128xf32> to vector<2x32xf32>
    %114 = vector.extract_strided_slice %109 {offsets = [0, 96], sizes = [2, 32], strides = [1, 1]} : vector<2x128xf32> to vector<2x32xf32>
    %115 = arith.mulf %112, %73 : vector<2x32xf32>
    %116 = arith.mulf %111, %113 : vector<2x32xf32>
    %117 = arith.addf %115, %116 : vector<2x32xf32>
    %118 = math.tanh %117 : vector<2x32xf32>
    %119 = arith.mulf %114, %118 : vector<2x32xf32>
    %c1_i32 = arith.constant 1 : i32
    %120 = vector.broadcast %c1_i32 : i32 to vector<2x1xi32>
    %121 = arith.cmpi sgt, %0, %120 : vector<2x1xi32>
    %c6_i32 = arith.constant 6 : i32
    %122 = vector.broadcast %c6_i32 : i32 to vector<2x1xi32>
    %123 = arith.cmpi sgt, %0, %122 : vector<2x1xi32>
    %124 = vector.shape_cast %121 : vector<2x1xi1> to vector<2x1xi1>
    %125 = vector.broadcast %124 : vector<2x1xi1> to vector<2x32xi1>
    %126 = arith.select %125, %102, %64 : vector<2x32xi1>, vector<2x32xf32>
    %127 = vector.shape_cast %121 : vector<2x1xi1> to vector<2x1xi1>
    %128 = vector.broadcast %127 : vector<2x1xi1> to vector<2x32xi1>
    %129 = arith.select %128, %100, %67 : vector<2x32xi1>, vector<2x32xf32>
    %130 = vector.shape_cast %123 : vector<2x1xi1> to vector<2x1xi1>
    %131 = vector.broadcast %130 : vector<2x1xi1> to vector<2x32xi1>
    %132 = arith.select %131, %119, %70 : vector<2x32xi1>, vector<2x32xf32>
    %133 = vector.shape_cast %123 : vector<2x1xi1> to vector<2x1xi1>
    %134 = vector.broadcast %133 : vector<2x1xi1> to vector<2x32xi1>
    %135 = arith.select %134, %117, %73 : vector<2x32xi1>, vector<2x32xf32>
    %cst_41 = arith.constant 0.000000e+00 : f32
    %136 = vector.shape_cast %121 : vector<2x1xi1> to vector<2x1xi1>
    %137 = vector.broadcast %136 : vector<2x1xi1> to vector<2x32xi1>
    %138 = vector.broadcast %cst_41 : f32 to vector<2x32xf32>
    %139 = arith.select %137, %102, %138 : vector<2x32xi1>, vector<2x32xf32>
    %c2_42 = arith.constant 2 : index
    %c0_43 = arith.constant 0 : index
    %140 = vector.load %arg20[%c2_42, %c0_43] : memref<16x32xf32, #tpu.memory_space<vmem>>, vector<2x32xf32>
    tpu.vector_store %arg20[%c2_42, %c0_43], %139 {strides = array<i32>} : memref<16x32xf32, #tpu.memory_space<vmem>>, vector<2x32xf32>,
    %cst_44 = arith.constant 0.000000e+00 : f32
    %141 = vector.shape_cast %123 : vector<2x1xi1> to vector<2x1xi1>
    %142 = vector.broadcast %141 : vector<2x1xi1> to vector<2x32xi1>
    %143 = vector.broadcast %cst_44 : f32 to vector<2x32xf32>
    %144 = arith.select %142, %119, %143 : vector<2x32xi1>, vector<2x32xf32>
    %c12_45 = arith.constant 12 : index
    %c0_46 = arith.constant 0 : index
    %145 = vector.load %arg21[%c12_45, %c0_46] : memref<16x32xf32, #tpu.memory_space<vmem>>, vector<2x32xf32>
    tpu.vector_store %arg21[%c12_45, %c0_46], %144 {strides = array<i32>} : memref<16x32xf32, #tpu.memory_space<vmem>>, vector<2x32xf32>,
    %c4 = arith.constant 4 : index
    %c0_47 = arith.constant 0 : index
    %146 = vector.load %arg18[%c4, %c0_47] : memref<16x256xf32, #tpu.memory_space<vmem>>, vector<2x128xf32>
    %c10 = arith.constant 10 : index
    %c128_48 = arith.constant 128 : index
    %147 = vector.load %arg18[%c10, %c128_48] : memref<16x256xf32, #tpu.memory_space<vmem>>, vector<2x128xf32>
    %cst_49 = arith.constant dense<0.000000e+00> : vector<2x128xf32>
    %148 = tpu.matmul %126, %20, %cst_49 {dimension_numbers = #tpu.dot_dimension_numbers<[1], [0], [0], [1], [0, 0, 1, 1], [], []>} : vector<2x32xf32>, vector<32x128xf32>, vector<2x128xf32> -> vector<2x128xf32>
    %149 = arith.addf %146, %148 : vector<2x128xf32>
    %150 = arith.negf %149 : vector<2x128xf32>
    %151 = math.exp %150 : vector<2x128xf32>
    %cst_50 = arith.constant 1.000000e+00 : f32
    %152 = vector.broadcast %cst_50 : f32 to vector<2x128xf32>
    %153 = arith.addf %152, %151 : vector<2x128xf32>
    %154 = arith.divf %152, %153 : vector<2x128xf32>
    %155 = math.tanh %149 : vector<2x128xf32>
    %156 = vector.extract_strided_slice %154 {offsets = [0, 0], sizes = [2, 32], strides = [1, 1]} : vector<2x128xf32> to vector<2x32xf32>
    %157 = vector.extract_strided_slice %154 {offsets = [0, 32], sizes = [2, 32], strides = [1, 1]} : vector<2x128xf32> to vector<2x32xf32>
    %158 = vector.extract_strided_slice %155 {offsets = [0, 64], sizes = [2, 32], strides = [1, 1]} : vector<2x128xf32> to vector<2x32xf32>
    %159 = vector.extract_strided_slice %154 {offsets = [0, 96], sizes = [2, 32], strides = [1, 1]} : vector<2x128xf32> to vector<2x32xf32>
    %160 = arith.mulf %157, %129 : vector<2x32xf32>
    %161 = arith.mulf %156, %158 : vector<2x32xf32>
    %162 = arith.addf %160, %161 : vector<2x32xf32>
    %163 = math.tanh %162 : vector<2x32xf32>
    %164 = arith.mulf %159, %163 : vector<2x32xf32>
    %cst_51 = arith.constant dense<0.000000e+00> : vector<2x128xf32>
    %165 = tpu.matmul %132, %21, %cst_51 {dimension_numbers = #tpu.dot_dimension_numbers<[1], [0], [0], [1], [0, 0, 1, 1], [], []>} : vector<2x32xf32>, vector<32x128xf32>, vector<2x128xf32> -> vector<2x128xf32>
    %166 = arith.addf %147, %165 : vector<2x128xf32>
    %167 = arith.negf %166 : vector<2x128xf32>
    %168 = math.exp %167 : vector<2x128xf32>
    %cst_52 = arith.constant 1.000000e+00 : f32
    %169 = vector.broadcast %cst_52 : f32 to vector<2x128xf32>
    %170 = arith.addf %169, %168 : vector<2x128xf32>
    %171 = arith.divf %169, %170 : vector<2x128xf32>
    %172 = math.tanh %166 : vector<2x128xf32>
    %173 = vector.extract_strided_slice %171 {offsets = [0, 0], sizes = [2, 32], strides = [1, 1]} : vector<2x128xf32> to vector<2x32xf32>
    %174 = vector.extract_strided_slice %171 {offsets = [0, 32], sizes = [2, 32], strides = [1, 1]} : vector<2x128xf32> to vector<2x32xf32>
    %175 = vector.extract_strided_slice %172 {offsets = [0, 64], sizes = [2, 32], strides = [1, 1]} : vector<2x128xf32> to vector<2x32xf32>
    %176 = vector.extract_strided_slice %171 {offsets = [0, 96], sizes = [2, 32], strides = [1, 1]} : vector<2x128xf32> to vector<2x32xf32>
    %177 = arith.mulf %174, %135 : vector<2x32xf32>
    %178 = arith.mulf %173, %175 : vector<2x32xf32>
    %179 = arith.addf %177, %178 : vector<2x32xf32>
    %180 = math.tanh %179 : vector<2x32xf32>
    %181 = arith.mulf %176, %180 : vector<2x32xf32>
    %c2_i32 = arith.constant 2 : i32
    %182 = vector.broadcast %c2_i32 : i32 to vector<2x1xi32>
    %183 = arith.cmpi sgt, %0, %182 : vector<2x1xi32>
    %c5_i32 = arith.constant 5 : i32
    %184 = vector.broadcast %c5_i32 : i32 to vector<2x1xi32>
    %185 = arith.cmpi sgt, %0, %184 : vector<2x1xi32>
    %186 = vector.shape_cast %183 : vector<2x1xi1> to vector<2x1xi1>
    %187 = vector.broadcast %186 : vector<2x1xi1> to vector<2x32xi1>
    %188 = arith.select %187, %164, %126 : vector<2x32xi1>, vector<2x32xf32>
    %189 = vector.shape_cast %183 : vector<2x1xi1> to vector<2x1xi1>
    %190 = vector.broadcast %189 : vector<2x1xi1> to vector<2x32xi1>
    %191 = arith.select %190, %162, %129 : vector<2x32xi1>, vector<2x32xf32>
    %192 = vector.shape_cast %185 : vector<2x1xi1> to vector<2x1xi1>
    %193 = vector.broadcast %192 : vector<2x1xi1> to vector<2x32xi1>
    %194 = arith.select %193, %181, %132 : vector<2x32xi1>, vector<2x32xf32>
    %195 = vector.shape_cast %185 : vector<2x1xi1> to vector<2x1xi1>
    %196 = vector.broadcast %195 : vector<2x1xi1> to vector<2x32xi1>
    %197 = arith.select %196, %179, %135 : vector<2x32xi1>, vector<2x32xf32>
    %cst_53 = arith.constant 0.000000e+00 : f32
    %198 = vector.shape_cast %183 : vector<2x1xi1> to vector<2x1xi1>
    %199 = vector.broadcast %198 : vector<2x1xi1> to vector<2x32xi1>
    %200 = vector.broadcast %cst_53 : f32 to vector<2x32xf32>
    %201 = arith.select %199, %164, %200 : vector<2x32xi1>, vector<2x32xf32>
    %c4_54 = arith.constant 4 : index
    %c0_55 = arith.constant 0 : index
    %202 = vector.load %arg20[%c4_54, %c0_55] : memref<16x32xf32, #tpu.memory_space<vmem>>, vector<2x32xf32>
    tpu.vector_store %arg20[%c4_54, %c0_55], %201 {strides = array<i32>} : memref<16x32xf32, #tpu.memory_space<vmem>>, vector<2x32xf32>,
    %cst_56 = arith.constant 0.000000e+00 : f32
    %203 = vector.shape_cast %185 : vector<2x1xi1> to vector<2x1xi1>
    %204 = vector.broadcast %203 : vector<2x1xi1> to vector<2x32xi1>
    %205 = vector.broadcast %cst_56 : f32 to vector<2x32xf32>
    %206 = arith.select %204, %181, %205 : vector<2x32xi1>, vector<2x32xf32>
    %c10_57 = arith.constant 10 : index
    %c0_58 = arith.constant 0 : index
    %207 = vector.load %arg21[%c10_57, %c0_58] : memref<16x32xf32, #tpu.memory_space<vmem>>, vector<2x32xf32>
    tpu.vector_store %arg21[%c10_57, %c0_58], %206 {strides = array<i32>} : memref<16x32xf32, #tpu.memory_space<vmem>>, vector<2x32xf32>,
    %c6 = arith.constant 6 : index
    %c0_59 = arith.constant 0 : index
    %208 = vector.load %arg18[%c6, %c0_59] : memref<16x256xf32, #tpu.memory_space<vmem>>, vector<2x128xf32>
    %c8 = arith.constant 8 : index
    %c128_60 = arith.constant 128 : index
    %209 = vector.load %arg18[%c8, %c128_60] : memref<16x256xf32, #tpu.memory_space<vmem>>, vector<2x128xf32>
    %cst_61 = arith.constant dense<0.000000e+00> : vector<2x128xf32>
    %210 = tpu.matmul %188, %20, %cst_61 {dimension_numbers = #tpu.dot_dimension_numbers<[1], [0], [0], [1], [0, 0, 1, 1], [], []>} : vector<2x32xf32>, vector<32x128xf32>, vector<2x128xf32> -> vector<2x128xf32>
    %211 = arith.addf %208, %210 : vector<2x128xf32>
    %212 = arith.negf %211 : vector<2x128xf32>
    %213 = math.exp %212 : vector<2x128xf32>
    %cst_62 = arith.constant 1.000000e+00 : f32
    %214 = vector.broadcast %cst_62 : f32 to vector<2x128xf32>
    %215 = arith.addf %214, %213 : vector<2x128xf32>
    %216 = arith.divf %214, %215 : vector<2x128xf32>
    %217 = math.tanh %211 : vector<2x128xf32>
    %218 = vector.extract_strided_slice %216 {offsets = [0, 0], sizes = [2, 32], strides = [1, 1]} : vector<2x128xf32> to vector<2x32xf32>
    %219 = vector.extract_strided_slice %216 {offsets = [0, 32], sizes = [2, 32], strides = [1, 1]} : vector<2x128xf32> to vector<2x32xf32>
    %220 = vector.extract_strided_slice %217 {offsets = [0, 64], sizes = [2, 32], strides = [1, 1]} : vector<2x128xf32> to vector<2x32xf32>
    %221 = vector.extract_strided_slice %216 {offsets = [0, 96], sizes = [2, 32], strides = [1, 1]} : vector<2x128xf32> to vector<2x32xf32>
    %222 = arith.mulf %219, %191 : vector<2x32xf32>
    %223 = arith.mulf %218, %220 : vector<2x32xf32>
    %224 = arith.addf %222, %223 : vector<2x32xf32>
    %225 = math.tanh %224 : vector<2x32xf32>
    %226 = arith.mulf %221, %225 : vector<2x32xf32>
    %cst_63 = arith.constant dense<0.000000e+00> : vector<2x128xf32>
    %227 = tpu.matmul %194, %21, %cst_63 {dimension_numbers = #tpu.dot_dimension_numbers<[1], [0], [0], [1], [0, 0, 1, 1], [], []>} : vector<2x32xf32>, vector<32x128xf32>, vector<2x128xf32> -> vector<2x128xf32>
    %228 = arith.addf %209, %227 : vector<2x128xf32>
    %229 = arith.negf %228 : vector<2x128xf32>
    %230 = math.exp %229 : vector<2x128xf32>
    %cst_64 = arith.constant 1.000000e+00 : f32
    %231 = vector.broadcast %cst_64 : f32 to vector<2x128xf32>
    %232 = arith.addf %231, %230 : vector<2x128xf32>
    %233 = arith.divf %231, %232 : vector<2x128xf32>
    %234 = math.tanh %228 : vector<2x128xf32>
    %235 = vector.extract_strided_slice %233 {offsets = [0, 0], sizes = [2, 32], strides = [1, 1]} : vector<2x128xf32> to vector<2x32xf32>
    %236 = vector.extract_strided_slice %233 {offsets = [0, 32], sizes = [2, 32], strides = [1, 1]} : vector<2x128xf32> to vector<2x32xf32>
    %237 = vector.extract_strided_slice %234 {offsets = [0, 64], sizes = [2, 32], strides = [1, 1]} : vector<2x128xf32> to vector<2x32xf32>
    %238 = vector.extract_strided_slice %233 {offsets = [0, 96], sizes = [2, 32], strides = [1, 1]} : vector<2x128xf32> to vector<2x32xf32>
    %239 = arith.mulf %236, %197 : vector<2x32xf32>
    %240 = arith.mulf %235, %237 : vector<2x32xf32>
    %241 = arith.addf %239, %240 : vector<2x32xf32>
    %242 = math.tanh %241 : vector<2x32xf32>
    %243 = arith.mulf %238, %242 : vector<2x32xf32>
    %c3_i32 = arith.constant 3 : i32
    %244 = vector.broadcast %c3_i32 : i32 to vector<2x1xi32>
    %245 = arith.cmpi sgt, %0, %244 : vector<2x1xi32>
    %c4_i32 = arith.constant 4 : i32
    %246 = vector.broadcast %c4_i32 : i32 to vector<2x1xi32>
    %247 = arith.cmpi sgt, %0, %246 : vector<2x1xi32>
    %248 = vector.shape_cast %245 : vector<2x1xi1> to vector<2x1xi1>
    %249 = vector.broadcast %248 : vector<2x1xi1> to vector<2x32xi1>
    %250 = arith.select %249, %226, %188 : vector<2x32xi1>, vector<2x32xf32>
    %251 = vector.shape_cast %245 : vector<2x1xi1> to vector<2x1xi1>
    %252 = vector.broadcast %251 : vector<2x1xi1> to vector<2x32xi1>
    %253 = arith.select %252, %224, %191 : vector<2x32xi1>, vector<2x32xf32>
    %254 = vector.shape_cast %247 : vector<2x1xi1> to vector<2x1xi1>
    %255 = vector.broadcast %254 : vector<2x1xi1> to vector<2x32xi1>
    %256 = arith.select %255, %243, %194 : vector<2x32xi1>, vector<2x32xf32>
    %257 = vector.shape_cast %247 : vector<2x1xi1> to vector<2x1xi1>
    %258 = vector.broadcast %257 : vector<2x1xi1> to vector<2x32xi1>
    %259 = arith.select %258, %241, %197 : vector<2x32xi1>, vector<2x32xf32>
    %cst_65 = arith.constant 0.000000e+00 : f32
    %260 = vector.shape_cast %245 : vector<2x1xi1> to vector<2x1xi1>
    %261 = vector.broadcast %260 : vector<2x1xi1> to vector<2x32xi1>
    %262 = vector.broadcast %cst_65 : f32 to vector<2x32xf32>
    %263 = arith.select %261, %226, %262 : vector<2x32xi1>, vector<2x32xf32>
    %c6_66 = arith.constant 6 : index
    %c0_67 = arith.constant 0 : index
    %264 = vector.load %arg20[%c6_66, %c0_67] : memref<16x32xf32, #tpu.memory_space<vmem>>, vector<2x32xf32>
    tpu.vector_store %arg20[%c6_66, %c0_67], %263 {strides = array<i32>} : memref<16x32xf32, #tpu.memory_space<vmem>>, vector<2x32xf32>,
    %cst_68 = arith.constant 0.000000e+00 : f32
    %265 = vector.shape_cast %247 : vector<2x1xi1> to vector<2x1xi1>
    %266 = vector.broadcast %265 : vector<2x1xi1> to vector<2x32xi1>
    %267 = vector.broadcast %cst_68 : f32 to vector<2x32xf32>
    %268 = arith.select %266, %243, %267 : vector<2x32xi1>, vector<2x32xf32>
    %c8_69 = arith.constant 8 : index
    %c0_70 = arith.constant 0 : index
    %269 = vector.load %arg21[%c8_69, %c0_70] : memref<16x32xf32, #tpu.memory_space<vmem>>, vector<2x32xf32>
    tpu.vector_store %arg21[%c8_69, %c0_70], %268 {strides = array<i32>} : memref<16x32xf32, #tpu.memory_space<vmem>>, vector<2x32xf32>,
    %c8_71 = arith.constant 8 : index
    %c0_72 = arith.constant 0 : index
    %270 = vector.load %arg18[%c8_71, %c0_72] : memref<16x256xf32, #tpu.memory_space<vmem>>, vector<2x128xf32>
    %c6_73 = arith.constant 6 : index
    %c128_74 = arith.constant 128 : index
    %271 = vector.load %arg18[%c6_73, %c128_74] : memref<16x256xf32, #tpu.memory_space<vmem>>, vector<2x128xf32>
    %cst_75 = arith.constant dense<0.000000e+00> : vector<2x128xf32>
    %272 = tpu.matmul %250, %20, %cst_75 {dimension_numbers = #tpu.dot_dimension_numbers<[1], [0], [0], [1], [0, 0, 1, 1], [], []>} : vector<2x32xf32>, vector<32x128xf32>, vector<2x128xf32> -> vector<2x128xf32>
    %273 = arith.addf %270, %272 : vector<2x128xf32>
    %274 = arith.negf %273 : vector<2x128xf32>
    %275 = math.exp %274 : vector<2x128xf32>
    %cst_76 = arith.constant 1.000000e+00 : f32
    %276 = vector.broadcast %cst_76 : f32 to vector<2x128xf32>
    %277 = arith.addf %276, %275 : vector<2x128xf32>
    %278 = arith.divf %276, %277 : vector<2x128xf32>
    %279 = math.tanh %273 : vector<2x128xf32>
    %280 = vector.extract_strided_slice %278 {offsets = [0, 0], sizes = [2, 32], strides = [1, 1]} : vector<2x128xf32> to vector<2x32xf32>
    %281 = vector.extract_strided_slice %278 {offsets = [0, 32], sizes = [2, 32], strides = [1, 1]} : vector<2x128xf32> to vector<2x32xf32>
    %282 = vector.extract_strided_slice %279 {offsets = [0, 64], sizes = [2, 32], strides = [1, 1]} : vector<2x128xf32> to vector<2x32xf32>
    %283 = vector.extract_strided_slice %278 {offsets = [0, 96], sizes = [2, 32], strides = [1, 1]} : vector<2x128xf32> to vector<2x32xf32>
    %284 = arith.mulf %281, %253 : vector<2x32xf32>
    %285 = arith.mulf %280, %282 : vector<2x32xf32>
    %286 = arith.addf %284, %285 : vector<2x32xf32>
    %287 = math.tanh %286 : vector<2x32xf32>
    %288 = arith.mulf %283, %287 : vector<2x32xf32>
    %cst_77 = arith.constant dense<0.000000e+00> : vector<2x128xf32>
    %289 = tpu.matmul %256, %21, %cst_77 {dimension_numbers = #tpu.dot_dimension_numbers<[1], [0], [0], [1], [0, 0, 1, 1], [], []>} : vector<2x32xf32>, vector<32x128xf32>, vector<2x128xf32> -> vector<2x128xf32>
    %290 = arith.addf %271, %289 : vector<2x128xf32>
    %291 = arith.negf %290 : vector<2x128xf32>
    %292 = math.exp %291 : vector<2x128xf32>
    %cst_78 = arith.constant 1.000000e+00 : f32
    %293 = vector.broadcast %cst_78 : f32 to vector<2x128xf32>
    %294 = arith.addf %293, %292 : vector<2x128xf32>
    %295 = arith.divf %293, %294 : vector<2x128xf32>
    %296 = math.tanh %290 : vector<2x128xf32>
    %297 = vector.extract_strided_slice %295 {offsets = [0, 0], sizes = [2, 32], strides = [1, 1]} : vector<2x128xf32> to vector<2x32xf32>
    %298 = vector.extract_strided_slice %295 {offsets = [0, 32], sizes = [2, 32], strides = [1, 1]} : vector<2x128xf32> to vector<2x32xf32>
    %299 = vector.extract_strided_slice %296 {offsets = [0, 64], sizes = [2, 32], strides = [1, 1]} : vector<2x128xf32> to vector<2x32xf32>
    %300 = vector.extract_strided_slice %295 {offsets = [0, 96], sizes = [2, 32], strides = [1, 1]} : vector<2x128xf32> to vector<2x32xf32>
    %301 = arith.mulf %298, %259 : vector<2x32xf32>
    %302 = arith.mulf %297, %299 : vector<2x32xf32>
    %303 = arith.addf %301, %302 : vector<2x32xf32>
    %304 = math.tanh %303 : vector<2x32xf32>
    %305 = arith.mulf %300, %304 : vector<2x32xf32>
    %c4_i32_79 = arith.constant 4 : i32
    %306 = vector.broadcast %c4_i32_79 : i32 to vector<2x1xi32>
    %307 = arith.cmpi sgt, %0, %306 : vector<2x1xi32>
    %c3_i32_80 = arith.constant 3 : i32
    %308 = vector.broadcast %c3_i32_80 : i32 to vector<2x1xi32>
    %309 = arith.cmpi sgt, %0, %308 : vector<2x1xi32>
    %310 = vector.shape_cast %307 : vector<2x1xi1> to vector<2x1xi1>
    %311 = vector.broadcast %310 : vector<2x1xi1> to vector<2x32xi1>
    %312 = arith.select %311, %288, %250 : vector<2x32xi1>, vector<2x32xf32>
    %313 = vector.shape_cast %307 : vector<2x1xi1> to vector<2x1xi1>
    %314 = vector.broadcast %313 : vector<2x1xi1> to vector<2x32xi1>
    %315 = arith.select %314, %286, %253 : vector<2x32xi1>, vector<2x32xf32>
    %316 = vector.shape_cast %309 : vector<2x1xi1> to vector<2x1xi1>
    %317 = vector.broadcast %316 : vector<2x1xi1> to vector<2x32xi1>
    %318 = arith.select %317, %305, %256 : vector<2x32xi1>, vector<2x32xf32>
    %319 = vector.shape_cast %309 : vector<2x1xi1> to vector<2x1xi1>
    %320 = vector.broadcast %319 : vector<2x1xi1> to vector<2x32xi1>
    %321 = arith.select %320, %303, %259 : vector<2x32xi1>, vector<2x32xf32>
    %cst_81 = arith.constant 0.000000e+00 : f32
    %322 = vector.shape_cast %307 : vector<2x1xi1> to vector<2x1xi1>
    %323 = vector.broadcast %322 : vector<2x1xi1> to vector<2x32xi1>
    %324 = vector.broadcast %cst_81 : f32 to vector<2x32xf32>
    %325 = arith.select %323, %288, %324 : vector<2x32xi1>, vector<2x32xf32>
    %c8_82 = arith.constant 8 : index
    %c0_83 = arith.constant 0 : index
    %326 = vector.load %arg20[%c8_82, %c0_83] : memref<16x32xf32, #tpu.memory_space<vmem>>, vector<2x32xf32>
    tpu.vector_store %arg20[%c8_82, %c0_83], %325 {strides = array<i32>} : memref<16x32xf32, #tpu.memory_space<vmem>>, vector<2x32xf32>,
    %cst_84 = arith.constant 0.000000e+00 : f32
    %327 = vector.shape_cast %309 : vector<2x1xi1> to vector<2x1xi1>
    %328 = vector.broadcast %327 : vector<2x1xi1> to vector<2x32xi1>
    %329 = vector.broadcast %cst_84 : f32 to vector<2x32xf32>
    %330 = arith.select %328, %305, %329 : vector<2x32xi1>, vector<2x32xf32>
    %c6_85 = arith.constant 6 : index
    %c0_86 = arith.constant 0 : index
    %331 = vector.load %arg21[%c6_85, %c0_86] : memref<16x32xf32, #tpu.memory_space<vmem>>, vector<2x32xf32>
    tpu.vector_store %arg21[%c6_85, %c0_86], %330 {strides = array<i32>} : memref<16x32xf32, #tpu.memory_space<vmem>>, vector<2x32xf32>,
    %c10_87 = arith.constant 10 : index
    %c0_88 = arith.constant 0 : index
    %332 = vector.load %arg18[%c10_87, %c0_88] : memref<16x256xf32, #tpu.memory_space<vmem>>, vector<2x128xf32>
    %c4_89 = arith.constant 4 : index
    %c128_90 = arith.constant 128 : index
    %333 = vector.load %arg18[%c4_89, %c128_90] : memref<16x256xf32, #tpu.memory_space<vmem>>, vector<2x128xf32>
    %cst_91 = arith.constant dense<0.000000e+00> : vector<2x128xf32>
    %334 = tpu.matmul %312, %20, %cst_91 {dimension_numbers = #tpu.dot_dimension_numbers<[1], [0], [0], [1], [0, 0, 1, 1], [], []>} : vector<2x32xf32>, vector<32x128xf32>, vector<2x128xf32> -> vector<2x128xf32>
    %335 = arith.addf %332, %334 : vector<2x128xf32>
    %336 = arith.negf %335 : vector<2x128xf32>
    %337 = math.exp %336 : vector<2x128xf32>
    %cst_92 = arith.constant 1.000000e+00 : f32
    %338 = vector.broadcast %cst_92 : f32 to vector<2x128xf32>
    %339 = arith.addf %338, %337 : vector<2x128xf32>
    %340 = arith.divf %338, %339 : vector<2x128xf32>
    %341 = math.tanh %335 : vector<2x128xf32>
    %342 = vector.extract_strided_slice %340 {offsets = [0, 0], sizes = [2, 32], strides = [1, 1]} : vector<2x128xf32> to vector<2x32xf32>
    %343 = vector.extract_strided_slice %340 {offsets = [0, 32], sizes = [2, 32], strides = [1, 1]} : vector<2x128xf32> to vector<2x32xf32>
    %344 = vector.extract_strided_slice %341 {offsets = [0, 64], sizes = [2, 32], strides = [1, 1]} : vector<2x128xf32> to vector<2x32xf32>
    %345 = vector.extract_strided_slice %340 {offsets = [0, 96], sizes = [2, 32], strides = [1, 1]} : vector<2x128xf32> to vector<2x32xf32>
    %346 = arith.mulf %343, %315 : vector<2x32xf32>
    %347 = arith.mulf %342, %344 : vector<2x32xf32>
    %348 = arith.addf %346, %347 : vector<2x32xf32>
    %349 = math.tanh %348 : vector<2x32xf32>
    %350 = arith.mulf %345, %349 : vector<2x32xf32>
    %cst_93 = arith.constant dense<0.000000e+00> : vector<2x128xf32>
    %351 = tpu.matmul %318, %21, %cst_93 {dimension_numbers = #tpu.dot_dimension_numbers<[1], [0], [0], [1], [0, 0, 1, 1], [], []>} : vector<2x32xf32>, vector<32x128xf32>, vector<2x128xf32> -> vector<2x128xf32>
    %352 = arith.addf %333, %351 : vector<2x128xf32>
    %353 = arith.negf %352 : vector<2x128xf32>
    %354 = math.exp %353 : vector<2x128xf32>
    %cst_94 = arith.constant 1.000000e+00 : f32
    %355 = vector.broadcast %cst_94 : f32 to vector<2x128xf32>
    %356 = arith.addf %355, %354 : vector<2x128xf32>
    %357 = arith.divf %355, %356 : vector<2x128xf32>
    %358 = math.tanh %352 : vector<2x128xf32>
    %359 = vector.extract_strided_slice %357 {offsets = [0, 0], sizes = [2, 32], strides = [1, 1]} : vector<2x128xf32> to vector<2x32xf32>
    %360 = vector.extract_strided_slice %357 {offsets = [0, 32], sizes = [2, 32], strides = [1, 1]} : vector<2x128xf32> to vector<2x32xf32>
    %361 = vector.extract_strided_slice %358 {offsets = [0, 64], sizes = [2, 32], strides = [1, 1]} : vector<2x128xf32> to vector<2x32xf32>
    %362 = vector.extract_strided_slice %357 {offsets = [0, 96], sizes = [2, 32], strides = [1, 1]} : vector<2x128xf32> to vector<2x32xf32>
    %363 = arith.mulf %360, %321 : vector<2x32xf32>
    %364 = arith.mulf %359, %361 : vector<2x32xf32>
    %365 = arith.addf %363, %364 : vector<2x32xf32>
    %366 = math.tanh %365 : vector<2x32xf32>
    %367 = arith.mulf %362, %366 : vector<2x32xf32>
    %c5_i32_95 = arith.constant 5 : i32
    %368 = vector.broadcast %c5_i32_95 : i32 to vector<2x1xi32>
    %369 = arith.cmpi sgt, %0, %368 : vector<2x1xi32>
    %c2_i32_96 = arith.constant 2 : i32
    %370 = vector.broadcast %c2_i32_96 : i32 to vector<2x1xi32>
    %371 = arith.cmpi sgt, %0, %370 : vector<2x1xi32>
    %372 = vector.shape_cast %369 : vector<2x1xi1> to vector<2x1xi1>
    %373 = vector.broadcast %372 : vector<2x1xi1> to vector<2x32xi1>
    %374 = arith.select %373, %350, %312 : vector<2x32xi1>, vector<2x32xf32>
    %375 = vector.shape_cast %369 : vector<2x1xi1> to vector<2x1xi1>
    %376 = vector.broadcast %375 : vector<2x1xi1> to vector<2x32xi1>
    %377 = arith.select %376, %348, %315 : vector<2x32xi1>, vector<2x32xf32>
    %378 = vector.shape_cast %371 : vector<2x1xi1> to vector<2x1xi1>
    %379 = vector.broadcast %378 : vector<2x1xi1> to vector<2x32xi1>
    %380 = arith.select %379, %367, %318 : vector<2x32xi1>, vector<2x32xf32>
    %381 = vector.shape_cast %371 : vector<2x1xi1> to vector<2x1xi1>
    %382 = vector.broadcast %381 : vector<2x1xi1> to vector<2x32xi1>
    %383 = arith.select %382, %365, %321 : vector<2x32xi1>, vector<2x32xf32>
    %cst_97 = arith.constant 0.000000e+00 : f32
    %384 = vector.shape_cast %369 : vector<2x1xi1> to vector<2x1xi1>
    %385 = vector.broadcast %384 : vector<2x1xi1> to vector<2x32xi1>
    %386 = vector.broadcast %cst_97 : f32 to vector<2x32xf32>
    %387 = arith.select %385, %350, %386 : vector<2x32xi1>, vector<2x32xf32>
    %c10_98 = arith.constant 10 : index
    %c0_99 = arith.constant 0 : index
    %388 = vector.load %arg20[%c10_98, %c0_99] : memref<16x32xf32, #tpu.memory_space<vmem>>, vector<2x32xf32>
    tpu.vector_store %arg20[%c10_98, %c0_99], %387 {strides = array<i32>} : memref<16x32xf32, #tpu.memory_space<vmem>>, vector<2x32xf32>,
    %cst_100 = arith.constant 0.000000e+00 : f32
    %389 = vector.shape_cast %371 : vector<2x1xi1> to vector<2x1xi1>
    %390 = vector.broadcast %389 : vector<2x1xi1> to vector<2x32xi1>
    %391 = vector.broadcast %cst_100 : f32 to vector<2x32xf32>
    %392 = arith.select %390, %367, %391 : vector<2x32xi1>, vector<2x32xf32>
    %c4_101 = arith.constant 4 : index
    %c0_102 = arith.constant 0 : index
    %393 = vector.load %arg21[%c4_101, %c0_102] : memref<16x32xf32, #tpu.memory_space<vmem>>, vector<2x32xf32>
    tpu.vector_store %arg21[%c4_101, %c0_102], %392 {strides = array<i32>} : memref<16x32xf32, #tpu.memory_space<vmem>>, vector<2x32xf32>,
    %c12_103 = arith.constant 12 : index
    %c0_104 = arith.constant 0 : index
    %394 = vector.load %arg18[%c12_103, %c0_104] : memref<16x256xf32, #tpu.memory_space<vmem>>, vector<2x128xf32>
    %c2_105 = arith.constant 2 : index
    %c128_106 = arith.constant 128 : index
    %395 = vector.load %arg18[%c2_105, %c128_106] : memref<16x256xf32, #tpu.memory_space<vmem>>, vector<2x128xf32>
    %cst_107 = arith.constant dense<0.000000e+00> : vector<2x128xf32>
    %396 = tpu.matmul %374, %20, %cst_107 {dimension_numbers = #tpu.dot_dimension_numbers<[1], [0], [0], [1], [0, 0, 1, 1], [], []>} : vector<2x32xf32>, vector<32x128xf32>, vector<2x128xf32> -> vector<2x128xf32>
    %397 = arith.addf %394, %396 : vector<2x128xf32>
    %398 = arith.negf %397 : vector<2x128xf32>
    %399 = math.exp %398 : vector<2x128xf32>
    %cst_108 = arith.constant 1.000000e+00 : f32
    %400 = vector.broadcast %cst_108 : f32 to vector<2x128xf32>
    %401 = arith.addf %400, %399 : vector<2x128xf32>
    %402 = arith.divf %400, %401 : vector<2x128xf32>
    %403 = math.tanh %397 : vector<2x128xf32>
    %404 = vector.extract_strided_slice %402 {offsets = [0, 0], sizes = [2, 32], strides = [1, 1]} : vector<2x128xf32> to vector<2x32xf32>
    %405 = vector.extract_strided_slice %402 {offsets = [0, 32], sizes = [2, 32], strides = [1, 1]} : vector<2x128xf32> to vector<2x32xf32>
    %406 = vector.extract_strided_slice %403 {offsets = [0, 64], sizes = [2, 32], strides = [1, 1]} : vector<2x128xf32> to vector<2x32xf32>
    %407 = vector.extract_strided_slice %402 {offsets = [0, 96], sizes = [2, 32], strides = [1, 1]} : vector<2x128xf32> to vector<2x32xf32>
    %408 = arith.mulf %405, %377 : vector<2x32xf32>
    %409 = arith.mulf %404, %406 : vector<2x32xf32>
    %410 = arith.addf %408, %409 : vector<2x32xf32>
    %411 = math.tanh %410 : vector<2x32xf32>
    %412 = arith.mulf %407, %411 : vector<2x32xf32>
    %cst_109 = arith.constant dense<0.000000e+00> : vector<2x128xf32>
    %413 = tpu.matmul %380, %21, %cst_109 {dimension_numbers = #tpu.dot_dimension_numbers<[1], [0], [0], [1], [0, 0, 1, 1], [], []>} : vector<2x32xf32>, vector<32x128xf32>, vector<2x128xf32> -> vector<2x128xf32>
    %414 = arith.addf %395, %413 : vector<2x128xf32>
    %415 = arith.negf %414 : vector<2x128xf32>
    %416 = math.exp %415 : vector<2x128xf32>
    %cst_110 = arith.constant 1.000000e+00 : f32
    %417 = vector.broadcast %cst_110 : f32 to vector<2x128xf32>
    %418 = arith.addf %417, %416 : vector<2x128xf32>
    %419 = arith.divf %417, %418 : vector<2x128xf32>
    %420 = math.tanh %414 : vector<2x128xf32>
    %421 = vector.extract_strided_slice %419 {offsets = [0, 0], sizes = [2, 32], strides = [1, 1]} : vector<2x128xf32> to vector<2x32xf32>
    %422 = vector.extract_strided_slice %419 {offsets = [0, 32], sizes = [2, 32], strides = [1, 1]} : vector<2x128xf32> to vector<2x32xf32>
    %423 = vector.extract_strided_slice %420 {offsets = [0, 64], sizes = [2, 32], strides = [1, 1]} : vector<2x128xf32> to vector<2x32xf32>
    %424 = vector.extract_strided_slice %419 {offsets = [0, 96], sizes = [2, 32], strides = [1, 1]} : vector<2x128xf32> to vector<2x32xf32>
    %425 = arith.mulf %422, %383 : vector<2x32xf32>
    %426 = arith.mulf %421, %423 : vector<2x32xf32>
    %427 = arith.addf %425, %426 : vector<2x32xf32>
    %428 = math.tanh %427 : vector<2x32xf32>
    %429 = arith.mulf %424, %428 : vector<2x32xf32>
    %c6_i32_111 = arith.constant 6 : i32
    %430 = vector.broadcast %c6_i32_111 : i32 to vector<2x1xi32>
    %431 = arith.cmpi sgt, %0, %430 : vector<2x1xi32>
    %c1_i32_112 = arith.constant 1 : i32
    %432 = vector.broadcast %c1_i32_112 : i32 to vector<2x1xi32>
    %433 = arith.cmpi sgt, %0, %432 : vector<2x1xi32>
    %434 = vector.shape_cast %431 : vector<2x1xi1> to vector<2x1xi1>
    %435 = vector.broadcast %434 : vector<2x1xi1> to vector<2x32xi1>
    %436 = arith.select %435, %412, %374 : vector<2x32xi1>, vector<2x32xf32>
    %437 = vector.shape_cast %431 : vector<2x1xi1> to vector<2x1xi1>
    %438 = vector.broadcast %437 : vector<2x1xi1> to vector<2x32xi1>
    %439 = arith.select %438, %410, %377 : vector<2x32xi1>, vector<2x32xf32>
    %440 = vector.shape_cast %433 : vector<2x1xi1> to vector<2x1xi1>
    %441 = vector.broadcast %440 : vector<2x1xi1> to vector<2x32xi1>
    %442 = arith.select %441, %429, %380 : vector<2x32xi1>, vector<2x32xf32>
    %443 = vector.shape_cast %433 : vector<2x1xi1> to vector<2x1xi1>
    %444 = vector.broadcast %443 : vector<2x1xi1> to vector<2x32xi1>
    %445 = arith.select %444, %427, %383 : vector<2x32xi1>, vector<2x32xf32>
    %cst_113 = arith.constant 0.000000e+00 : f32
    %446 = vector.shape_cast %431 : vector<2x1xi1> to vector<2x1xi1>
    %447 = vector.broadcast %446 : vector<2x1xi1> to vector<2x32xi1>
    %448 = vector.broadcast %cst_113 : f32 to vector<2x32xf32>
    %449 = arith.select %447, %412, %448 : vector<2x32xi1>, vector<2x32xf32>
    %c12_114 = arith.constant 12 : index
    %c0_115 = arith.constant 0 : index
    %450 = vector.load %arg20[%c12_114, %c0_115] : memref<16x32xf32, #tpu.memory_space<vmem>>, vector<2x32xf32>
    tpu.vector_store %arg20[%c12_114, %c0_115], %449 {strides = array<i32>} : memref<16x32xf32, #tpu.memory_space<vmem>>, vector<2x32xf32>,
    %cst_116 = arith.constant 0.000000e+00 : f32
    %451 = vector.shape_cast %433 : vector<2x1xi1> to vector<2x1xi1>
    %452 = vector.broadcast %451 : vector<2x1xi1> to vector<2x32xi1>
    %453 = vector.broadcast %cst_116 : f32 to vector<2x32xf32>
    %454 = arith.select %452, %429, %453 : vector<2x32xi1>, vector<2x32xf32>
    %c2_117 = arith.constant 2 : index
    %c0_118 = arith.constant 0 : index
    %455 = vector.load %arg21[%c2_117, %c0_118] : memref<16x32xf32, #tpu.memory_space<vmem>>, vector<2x32xf32>
    tpu.vector_store %arg21[%c2_117, %c0_118], %454 {strides = array<i32>} : memref<16x32xf32, #tpu.memory_space<vmem>>, vector<2x32xf32>,
    %c14_119 = arith.constant 14 : index
    %c0_120 = arith.constant 0 : index
    %456 = vector.load %arg18[%c14_119, %c0_120] : memref<16x256xf32, #tpu.memory_space<vmem>>, vector<2x128xf32>
    %c0_121 = arith.constant 0 : index
    %c128_122 = arith.constant 128 : index
    %457 = vector.load %arg18[%c0_121, %c128_122] : memref<16x256xf32, #tpu.memory_space<vmem>>, vector<2x128xf32>
    %cst_123 = arith.constant dense<0.000000e+00> : vector<2x128xf32>
    %458 = tpu.matmul %436, %20, %cst_123 {dimension_numbers = #tpu.dot_dimension_numbers<[1], [0], [0], [1], [0, 0, 1, 1], [], []>} : vector<2x32xf32>, vector<32x128xf32>, vector<2x128xf32> -> vector<2x128xf32>
    %459 = arith.addf %456, %458 : vector<2x128xf32>
    %460 = arith.negf %459 : vector<2x128xf32>
    %461 = math.exp %460 : vector<2x128xf32>
    %cst_124 = arith.constant 1.000000e+00 : f32
    %462 = vector.broadcast %cst_124 : f32 to vector<2x128xf32>
    %463 = arith.addf %462, %461 : vector<2x128xf32>
    %464 = arith.divf %462, %463 : vector<2x128xf32>
    %465 = math.tanh %459 : vector<2x128xf32>
    %466 = vector.extract_strided_slice %464 {offsets = [0, 0], sizes = [2, 32], strides = [1, 1]} : vector<2x128xf32> to vector<2x32xf32>
    %467 = vector.extract_strided_slice %464 {offsets = [0, 32], sizes = [2, 32], strides = [1, 1]} : vector<2x128xf32> to vector<2x32xf32>
    %468 = vector.extract_strided_slice %465 {offsets = [0, 64], sizes = [2, 32], strides = [1, 1]} : vector<2x128xf32> to vector<2x32xf32>
    %469 = vector.extract_strided_slice %464 {offsets = [0, 96], sizes = [2, 32], strides = [1, 1]} : vector<2x128xf32> to vector<2x32xf32>
    %470 = arith.mulf %467, %439 : vector<2x32xf32>
    %471 = arith.mulf %466, %468 : vector<2x32xf32>
    %472 = arith.addf %470, %471 : vector<2x32xf32>
    %473 = math.tanh %472 : vector<2x32xf32>
    %474 = arith.mulf %469, %473 : vector<2x32xf32>
    %cst_125 = arith.constant dense<0.000000e+00> : vector<2x128xf32>
    %475 = tpu.matmul %442, %21, %cst_125 {dimension_numbers = #tpu.dot_dimension_numbers<[1], [0], [0], [1], [0, 0, 1, 1], [], []>} : vector<2x32xf32>, vector<32x128xf32>, vector<2x128xf32> -> vector<2x128xf32>
    %476 = arith.addf %457, %475 : vector<2x128xf32>
    %477 = arith.negf %476 : vector<2x128xf32>
    %478 = math.exp %477 : vector<2x128xf32>
    %cst_126 = arith.constant 1.000000e+00 : f32
    %479 = vector.broadcast %cst_126 : f32 to vector<2x128xf32>
    %480 = arith.addf %479, %478 : vector<2x128xf32>
    %481 = arith.divf %479, %480 : vector<2x128xf32>
    %482 = math.tanh %476 : vector<2x128xf32>
    %483 = vector.extract_strided_slice %481 {offsets = [0, 0], sizes = [2, 32], strides = [1, 1]} : vector<2x128xf32> to vector<2x32xf32>
    %484 = vector.extract_strided_slice %481 {offsets = [0, 32], sizes = [2, 32], strides = [1, 1]} : vector<2x128xf32> to vector<2x32xf32>
    %485 = vector.extract_strided_slice %482 {offsets = [0, 64], sizes = [2, 32], strides = [1, 1]} : vector<2x128xf32> to vector<2x32xf32>
    %486 = vector.extract_strided_slice %481 {offsets = [0, 96], sizes = [2, 32], strides = [1, 1]} : vector<2x128xf32> to vector<2x32xf32>
    %487 = arith.mulf %484, %445 : vector<2x32xf32>
    %488 = arith.mulf %483, %485 : vector<2x32xf32>
    %489 = arith.addf %487, %488 : vector<2x32xf32>
    %490 = math.tanh %489 : vector<2x32xf32>
    %491 = arith.mulf %486, %490 : vector<2x32xf32>
    %c7_i32_127 = arith.constant 7 : i32
    %492 = vector.broadcast %c7_i32_127 : i32 to vector<2x1xi32>
    %493 = arith.cmpi sgt, %0, %492 : vector<2x1xi32>
    %c0_i32_128 = arith.constant 0 : i32
    %494 = vector.broadcast %c0_i32_128 : i32 to vector<2x1xi32>
    %495 = arith.cmpi sgt, %0, %494 : vector<2x1xi32>
    %cst_129 = arith.constant 0.000000e+00 : f32
    %496 = vector.shape_cast %493 : vector<2x1xi1> to vector<2x1xi1>
    %497 = vector.broadcast %496 : vector<2x1xi1> to vector<2x32xi1>
    %498 = vector.broadcast %cst_129 : f32 to vector<2x32xf32>
    %499 = arith.select %497, %474, %498 : vector<2x32xi1>, vector<2x32xf32>
    %c14_130 = arith.constant 14 : index
    %c0_131 = arith.constant 0 : index
    %500 = vector.load %arg20[%c14_130, %c0_131] : memref<16x32xf32, #tpu.memory_space<vmem>>, vector<2x32xf32>
    tpu.vector_store %arg20[%c14_130, %c0_131], %499 {strides = array<i32>} : memref<16x32xf32, #tpu.memory_space<vmem>>, vector<2x32xf32>,
    %cst_132 = arith.constant 0.000000e+00 : f32
    %501 = vector.shape_cast %495 : vector<2x1xi1> to vector<2x1xi1>
    %502 = vector.broadcast %501 : vector<2x1xi1> to vector<2x32xi1>
    %503 = vector.broadcast %cst_132 : f32 to vector<2x32xf32>
    %504 = arith.select %502, %491, %503 : vector<2x32xi1>, vector<2x32xf32>
    %c0_133 = arith.constant 0 : index
    %c0_134 = arith.constant 0 : index
    %505 = vector.load %arg21[%c0_133, %c0_134] : memref<16x32xf32, #tpu.memory_space<vmem>>, vector<2x32xf32>
    tpu.vector_store %arg21[%c0_133, %c0_134], %504 {strides = array<i32>} : memref<16x32xf32, #tpu.memory_space<vmem>>, vector<2x32xf32>,
    %c0_135 = arith.constant 0 : index
    %c0_136 = arith.constant 0 : index
    %506 = vector.load %arg20[%c0_135, %c0_136] : memref<16x32xf32, #tpu.memory_space<vmem>>, vector<16x32xf32>
    %c0_137 = arith.constant 0 : index
    %c0_138 = arith.constant 0 : index
    %507 = vector.load %arg10[%c0_137, %c0_138] : memref<32x256xf32, #tpu.memory_space<vmem>>, vector<32x256xf32>
    %cst_139 = arith.constant dense<0.000000e+00> : vector<16x256xf32>
    %508 = tpu.matmul %506, %507, %cst_139 {dimension_numbers = #tpu.dot_dimension_numbers<[1], [0], [0], [1], [0, 0, 1, 1], [], []>} : vector<16x32xf32>, vector<32x256xf32>, vector<16x256xf32> -> vector<16x256xf32>
    %c0_140 = arith.constant 0 : index
    %c0_141 = arith.constant 0 : index
    %509 = vector.load %arg21[%c0_140, %c0_141] : memref<16x32xf32, #tpu.memory_space<vmem>>, vector<16x32xf32>
    %c0_142 = arith.constant 0 : index
    %c0_143 = arith.constant 0 : index
    %510 = vector.load %arg11[%c0_142, %c0_143] : memref<32x256xf32, #tpu.memory_space<vmem>>, vector<32x256xf32>
    %cst_144 = arith.constant dense<0.000000e+00> : vector<16x256xf32>
    %511 = tpu.matmul %509, %510, %cst_144 {dimension_numbers = #tpu.dot_dimension_numbers<[1], [0], [0], [1], [0, 0, 1, 1], [], []>} : vector<16x32xf32>, vector<32x256xf32>, vector<16x256xf32> -> vector<16x256xf32>
    %512 = arith.addf %508, %511 : vector<16x256xf32>
    %c0_145 = arith.constant 0 : index
    %c0_146 = arith.constant 0 : index
    %513 = vector.load %arg14[%c0_145, %c0_146] : memref<1x256xf32, #tpu.memory_space<vmem>>, vector<1x256xf32>
    %514 = vector.broadcast %513 : vector<1x256xf32> to vector<16x256xf32>
    %515 = arith.addf %512, %514 : vector<16x256xf32>
    %c0_147 = arith.constant 0 : index
    %c0_148 = arith.constant 0 : index
    %516 = vector.load %arg19[%c0_147, %c0_148] : memref<16x256xf32, #tpu.memory_space<vmem>>, vector<16x256xf32>
    tpu.vector_store %arg19[%c0_147, %c0_148], %515 {strides = array<i32>} : memref<16x256xf32, #tpu.memory_space<vmem>>, vector<16x256xf32>,
    %c0_149 = arith.constant 0 : index
    %c0_150 = arith.constant 0 : index
    %517 = vector.load %arg12[%c0_149, %c0_150] : memref<32x128xf32, #tpu.memory_space<vmem>>, vector<32x128xf32>
    %c0_151 = arith.constant 0 : index
    %c0_152 = arith.constant 0 : index
    %518 = vector.load %arg13[%c0_151, %c0_152] : memref<32x128xf32, #tpu.memory_space<vmem>>, vector<32x128xf32>
    %cst_153 = arith.constant 0.000000e+00 : f32
    %519 = vector.broadcast %cst_153 : f32 to vector<2x32xf32>
    %c0_154 = arith.constant 0 : index
    %c0_155 = arith.constant 0 : index
    %520 = vector.load %arg19[%c0_154, %c0_155] : memref<16x256xf32, #tpu.memory_space<vmem>>, vector<2x128xf32>
    %c14_156 = arith.constant 14 : index
    %c128_157 = arith.constant 128 : index
    %521 = vector.load %arg19[%c14_156, %c128_157] : memref<16x256xf32, #tpu.memory_space<vmem>>, vector<2x128xf32>
    %cst_158 = arith.constant dense<0.000000e+00> : vector<2x128xf32>
    %522 = tpu.matmul %11, %517, %cst_158 {dimension_numbers = #tpu.dot_dimension_numbers<[1], [0], [0], [1], [0, 0, 1, 1], [], []>} : vector<2x32xf32>, vector<32x128xf32>, vector<2x128xf32> -> vector<2x128xf32>
    %523 = arith.addf %520, %522 : vector<2x128xf32>
    %524 = arith.negf %523 : vector<2x128xf32>
    %525 = math.exp %524 : vector<2x128xf32>
    %cst_159 = arith.constant 1.000000e+00 : f32
    %526 = vector.broadcast %cst_159 : f32 to vector<2x128xf32>
    %527 = arith.addf %526, %525 : vector<2x128xf32>
    %528 = arith.divf %526, %527 : vector<2x128xf32>
    %529 = math.tanh %523 : vector<2x128xf32>
    %530 = vector.extract_strided_slice %528 {offsets = [0, 0], sizes = [2, 32], strides = [1, 1]} : vector<2x128xf32> to vector<2x32xf32>
    %531 = vector.extract_strided_slice %528 {offsets = [0, 32], sizes = [2, 32], strides = [1, 1]} : vector<2x128xf32> to vector<2x32xf32>
    %532 = vector.extract_strided_slice %529 {offsets = [0, 64], sizes = [2, 32], strides = [1, 1]} : vector<2x128xf32> to vector<2x32xf32>
    %533 = vector.extract_strided_slice %528 {offsets = [0, 96], sizes = [2, 32], strides = [1, 1]} : vector<2x128xf32> to vector<2x32xf32>
    %534 = arith.mulf %531, %12 : vector<2x32xf32>
    %535 = arith.mulf %530, %532 : vector<2x32xf32>
    %536 = arith.addf %534, %535 : vector<2x32xf32>
    %537 = math.tanh %536 : vector<2x32xf32>
    %538 = arith.mulf %533, %537 : vector<2x32xf32>
    %cst_160 = arith.constant dense<0.000000e+00> : vector<2x128xf32>
    %539 = tpu.matmul %11, %518, %cst_160 {dimension_numbers = #tpu.dot_dimension_numbers<[1], [0], [0], [1], [0, 0, 1, 1], [], []>} : vector<2x32xf32>, vector<32x128xf32>, vector<2x128xf32> -> vector<2x128xf32>
    %540 = arith.addf %521, %539 : vector<2x128xf32>
    %541 = arith.negf %540 : vector<2x128xf32>
    %542 = math.exp %541 : vector<2x128xf32>
    %cst_161 = arith.constant 1.000000e+00 : f32
    %543 = vector.broadcast %cst_161 : f32 to vector<2x128xf32>
    %544 = arith.addf %543, %542 : vector<2x128xf32>
    %545 = arith.divf %543, %544 : vector<2x128xf32>
    %546 = math.tanh %540 : vector<2x128xf32>
    %547 = vector.extract_strided_slice %545 {offsets = [0, 0], sizes = [2, 32], strides = [1, 1]} : vector<2x128xf32> to vector<2x32xf32>
    %548 = vector.extract_strided_slice %545 {offsets = [0, 32], sizes = [2, 32], strides = [1, 1]} : vector<2x128xf32> to vector<2x32xf32>
    %549 = vector.extract_strided_slice %546 {offsets = [0, 64], sizes = [2, 32], strides = [1, 1]} : vector<2x128xf32> to vector<2x32xf32>
    %550 = vector.extract_strided_slice %545 {offsets = [0, 96], sizes = [2, 32], strides = [1, 1]} : vector<2x128xf32> to vector<2x32xf32>
    %551 = arith.mulf %548, %12 : vector<2x32xf32>
    %552 = arith.mulf %547, %549 : vector<2x32xf32>
    %553 = arith.addf %551, %552 : vector<2x32xf32>
    %554 = math.tanh %553 : vector<2x32xf32>
    %555 = arith.mulf %550, %554 : vector<2x32xf32>
    %c0_i32_162 = arith.constant 0 : i32
    %556 = vector.broadcast %c0_i32_162 : i32 to vector<2x1xi32>
    %557 = arith.cmpi sgt, %0, %556 : vector<2x1xi32>
    %c7_i32_163 = arith.constant 7 : i32
    %558 = vector.broadcast %c7_i32_163 : i32 to vector<2x1xi32>
    %559 = arith.cmpi sgt, %0, %558 : vector<2x1xi32>
    %560 = vector.shape_cast %557 : vector<2x1xi1> to vector<2x1xi1>
    %561 = vector.broadcast %560 : vector<2x1xi1> to vector<2x32xi1>
    %562 = arith.select %561, %538, %11 : vector<2x32xi1>, vector<2x32xf32>
    %563 = vector.shape_cast %557 : vector<2x1xi1> to vector<2x1xi1>
    %564 = vector.broadcast %563 : vector<2x1xi1> to vector<2x32xi1>
    %565 = arith.select %564, %536, %12 : vector<2x32xi1>, vector<2x32xf32>
    %566 = vector.shape_cast %559 : vector<2x1xi1> to vector<2x1xi1>
    %567 = vector.broadcast %566 : vector<2x1xi1> to vector<2x32xi1>
    %568 = arith.select %567, %555, %11 : vector<2x32xi1>, vector<2x32xf32>
    %569 = vector.shape_cast %559 : vector<2x1xi1> to vector<2x1xi1>
    %570 = vector.broadcast %569 : vector<2x1xi1> to vector<2x32xi1>
    %571 = arith.select %570, %553, %12 : vector<2x32xi1>, vector<2x32xf32>
    %cst_164 = arith.constant 7.000000e+00 : f32
    %572 = vector.broadcast %cst_164 : f32 to vector<1x1xf32>
    %573 = arith.cmpf oeq, %5, %572 : vector<1x1xf32>
    %574 = vector.broadcast %573 : vector<1x1xi1> to vector<2x1xi1>
    %575 = arith.andi %574, %559 : vector<2x1xi1>
    %576 = vector.shape_cast %575 : vector<2x1xi1> to vector<2x1xi1>
    %577 = vector.broadcast %576 : vector<2x1xi1> to vector<2x32xi1>
    %578 = arith.select %577, %555, %519 : vector<2x32xi1>, vector<2x32xf32>
    %c2_165 = arith.constant 2 : index
    %c0_166 = arith.constant 0 : index
    %579 = vector.load %arg19[%c2_165, %c0_166] : memref<16x256xf32, #tpu.memory_space<vmem>>, vector<2x128xf32>
    %c12_167 = arith.constant 12 : index
    %c128_168 = arith.constant 128 : index
    %580 = vector.load %arg19[%c12_167, %c128_168] : memref<16x256xf32, #tpu.memory_space<vmem>>, vector<2x128xf32>
    %cst_169 = arith.constant dense<0.000000e+00> : vector<2x128xf32>
    %581 = tpu.matmul %562, %517, %cst_169 {dimension_numbers = #tpu.dot_dimension_numbers<[1], [0], [0], [1], [0, 0, 1, 1], [], []>} : vector<2x32xf32>, vector<32x128xf32>, vector<2x128xf32> -> vector<2x128xf32>
    %582 = arith.addf %579, %581 : vector<2x128xf32>
    %583 = arith.negf %582 : vector<2x128xf32>
    %584 = math.exp %583 : vector<2x128xf32>
    %cst_170 = arith.constant 1.000000e+00 : f32
    %585 = vector.broadcast %cst_170 : f32 to vector<2x128xf32>
    %586 = arith.addf %585, %584 : vector<2x128xf32>
    %587 = arith.divf %585, %586 : vector<2x128xf32>
    %588 = math.tanh %582 : vector<2x128xf32>
    %589 = vector.extract_strided_slice %587 {offsets = [0, 0], sizes = [2, 32], strides = [1, 1]} : vector<2x128xf32> to vector<2x32xf32>
    %590 = vector.extract_strided_slice %587 {offsets = [0, 32], sizes = [2, 32], strides = [1, 1]} : vector<2x128xf32> to vector<2x32xf32>
    %591 = vector.extract_strided_slice %588 {offsets = [0, 64], sizes = [2, 32], strides = [1, 1]} : vector<2x128xf32> to vector<2x32xf32>
    %592 = vector.extract_strided_slice %587 {offsets = [0, 96], sizes = [2, 32], strides = [1, 1]} : vector<2x128xf32> to vector<2x32xf32>
    %593 = arith.mulf %590, %565 : vector<2x32xf32>
    %594 = arith.mulf %589, %591 : vector<2x32xf32>
    %595 = arith.addf %593, %594 : vector<2x32xf32>
    %596 = math.tanh %595 : vector<2x32xf32>
    %597 = arith.mulf %592, %596 : vector<2x32xf32>
    %cst_171 = arith.constant dense<0.000000e+00> : vector<2x128xf32>
    %598 = tpu.matmul %568, %518, %cst_171 {dimension_numbers = #tpu.dot_dimension_numbers<[1], [0], [0], [1], [0, 0, 1, 1], [], []>} : vector<2x32xf32>, vector<32x128xf32>, vector<2x128xf32> -> vector<2x128xf32>
    %599 = arith.addf %580, %598 : vector<2x128xf32>
    %600 = arith.negf %599 : vector<2x128xf32>
    %601 = math.exp %600 : vector<2x128xf32>
    %cst_172 = arith.constant 1.000000e+00 : f32
    %602 = vector.broadcast %cst_172 : f32 to vector<2x128xf32>
    %603 = arith.addf %602, %601 : vector<2x128xf32>
    %604 = arith.divf %602, %603 : vector<2x128xf32>
    %605 = math.tanh %599 : vector<2x128xf32>
    %606 = vector.extract_strided_slice %604 {offsets = [0, 0], sizes = [2, 32], strides = [1, 1]} : vector<2x128xf32> to vector<2x32xf32>
    %607 = vector.extract_strided_slice %604 {offsets = [0, 32], sizes = [2, 32], strides = [1, 1]} : vector<2x128xf32> to vector<2x32xf32>
    %608 = vector.extract_strided_slice %605 {offsets = [0, 64], sizes = [2, 32], strides = [1, 1]} : vector<2x128xf32> to vector<2x32xf32>
    %609 = vector.extract_strided_slice %604 {offsets = [0, 96], sizes = [2, 32], strides = [1, 1]} : vector<2x128xf32> to vector<2x32xf32>
    %610 = arith.mulf %607, %571 : vector<2x32xf32>
    %611 = arith.mulf %606, %608 : vector<2x32xf32>
    %612 = arith.addf %610, %611 : vector<2x32xf32>
    %613 = math.tanh %612 : vector<2x32xf32>
    %614 = arith.mulf %609, %613 : vector<2x32xf32>
    %c1_i32_173 = arith.constant 1 : i32
    %615 = vector.broadcast %c1_i32_173 : i32 to vector<2x1xi32>
    %616 = arith.cmpi sgt, %0, %615 : vector<2x1xi32>
    %c6_i32_174 = arith.constant 6 : i32
    %617 = vector.broadcast %c6_i32_174 : i32 to vector<2x1xi32>
    %618 = arith.cmpi sgt, %0, %617 : vector<2x1xi32>
    %619 = vector.shape_cast %616 : vector<2x1xi1> to vector<2x1xi1>
    %620 = vector.broadcast %619 : vector<2x1xi1> to vector<2x32xi1>
    %621 = arith.select %620, %597, %562 : vector<2x32xi1>, vector<2x32xf32>
    %622 = vector.shape_cast %616 : vector<2x1xi1> to vector<2x1xi1>
    %623 = vector.broadcast %622 : vector<2x1xi1> to vector<2x32xi1>
    %624 = arith.select %623, %595, %565 : vector<2x32xi1>, vector<2x32xf32>
    %625 = vector.shape_cast %618 : vector<2x1xi1> to vector<2x1xi1>
    %626 = vector.broadcast %625 : vector<2x1xi1> to vector<2x32xi1>
    %627 = arith.select %626, %614, %568 : vector<2x32xi1>, vector<2x32xf32>
    %628 = vector.shape_cast %618 : vector<2x1xi1> to vector<2x1xi1>
    %629 = vector.broadcast %628 : vector<2x1xi1> to vector<2x32xi1>
    %630 = arith.select %629, %612, %571 : vector<2x32xi1>, vector<2x32xf32>
    %cst_175 = arith.constant 6.000000e+00 : f32
    %631 = vector.broadcast %cst_175 : f32 to vector<1x1xf32>
    %632 = arith.cmpf oeq, %5, %631 : vector<1x1xf32>
    %633 = vector.broadcast %632 : vector<1x1xi1> to vector<2x1xi1>
    %634 = arith.andi %633, %618 : vector<2x1xi1>
    %635 = vector.shape_cast %634 : vector<2x1xi1> to vector<2x1xi1>
    %636 = vector.broadcast %635 : vector<2x1xi1> to vector<2x32xi1>
    %637 = arith.select %636, %614, %578 : vector<2x32xi1>, vector<2x32xf32>
    %c4_176 = arith.constant 4 : index
    %c0_177 = arith.constant 0 : index
    %638 = vector.load %arg19[%c4_176, %c0_177] : memref<16x256xf32, #tpu.memory_space<vmem>>, vector<2x128xf32>
    %c10_178 = arith.constant 10 : index
    %c128_179 = arith.constant 128 : index
    %639 = vector.load %arg19[%c10_178, %c128_179] : memref<16x256xf32, #tpu.memory_space<vmem>>, vector<2x128xf32>
    %cst_180 = arith.constant dense<0.000000e+00> : vector<2x128xf32>
    %640 = tpu.matmul %621, %517, %cst_180 {dimension_numbers = #tpu.dot_dimension_numbers<[1], [0], [0], [1], [0, 0, 1, 1], [], []>} : vector<2x32xf32>, vector<32x128xf32>, vector<2x128xf32> -> vector<2x128xf32>
    %641 = arith.addf %638, %640 : vector<2x128xf32>
    %642 = arith.negf %641 : vector<2x128xf32>
    %643 = math.exp %642 : vector<2x128xf32>
    %cst_181 = arith.constant 1.000000e+00 : f32
    %644 = vector.broadcast %cst_181 : f32 to vector<2x128xf32>
    %645 = arith.addf %644, %643 : vector<2x128xf32>
    %646 = arith.divf %644, %645 : vector<2x128xf32>
    %647 = math.tanh %641 : vector<2x128xf32>
    %648 = vector.extract_strided_slice %646 {offsets = [0, 0], sizes = [2, 32], strides = [1, 1]} : vector<2x128xf32> to vector<2x32xf32>
    %649 = vector.extract_strided_slice %646 {offsets = [0, 32], sizes = [2, 32], strides = [1, 1]} : vector<2x128xf32> to vector<2x32xf32>
    %650 = vector.extract_strided_slice %647 {offsets = [0, 64], sizes = [2, 32], strides = [1, 1]} : vector<2x128xf32> to vector<2x32xf32>
    %651 = vector.extract_strided_slice %646 {offsets = [0, 96], sizes = [2, 32], strides = [1, 1]} : vector<2x128xf32> to vector<2x32xf32>
    %652 = arith.mulf %649, %624 : vector<2x32xf32>
    %653 = arith.mulf %648, %650 : vector<2x32xf32>
    %654 = arith.addf %652, %653 : vector<2x32xf32>
    %655 = math.tanh %654 : vector<2x32xf32>
    %656 = arith.mulf %651, %655 : vector<2x32xf32>
    %cst_182 = arith.constant dense<0.000000e+00> : vector<2x128xf32>
    %657 = tpu.matmul %627, %518, %cst_182 {dimension_numbers = #tpu.dot_dimension_numbers<[1], [0], [0], [1], [0, 0, 1, 1], [], []>} : vector<2x32xf32>, vector<32x128xf32>, vector<2x128xf32> -> vector<2x128xf32>
    %658 = arith.addf %639, %657 : vector<2x128xf32>
    %659 = arith.negf %658 : vector<2x128xf32>
    %660 = math.exp %659 : vector<2x128xf32>
    %cst_183 = arith.constant 1.000000e+00 : f32
    %661 = vector.broadcast %cst_183 : f32 to vector<2x128xf32>
    %662 = arith.addf %661, %660 : vector<2x128xf32>
    %663 = arith.divf %661, %662 : vector<2x128xf32>
    %664 = math.tanh %658 : vector<2x128xf32>
    %665 = vector.extract_strided_slice %663 {offsets = [0, 0], sizes = [2, 32], strides = [1, 1]} : vector<2x128xf32> to vector<2x32xf32>
    %666 = vector.extract_strided_slice %663 {offsets = [0, 32], sizes = [2, 32], strides = [1, 1]} : vector<2x128xf32> to vector<2x32xf32>
    %667 = vector.extract_strided_slice %664 {offsets = [0, 64], sizes = [2, 32], strides = [1, 1]} : vector<2x128xf32> to vector<2x32xf32>
    %668 = vector.extract_strided_slice %663 {offsets = [0, 96], sizes = [2, 32], strides = [1, 1]} : vector<2x128xf32> to vector<2x32xf32>
    %669 = arith.mulf %666, %630 : vector<2x32xf32>
    %670 = arith.mulf %665, %667 : vector<2x32xf32>
    %671 = arith.addf %669, %670 : vector<2x32xf32>
    %672 = math.tanh %671 : vector<2x32xf32>
    %673 = arith.mulf %668, %672 : vector<2x32xf32>
    %c2_i32_184 = arith.constant 2 : i32
    %674 = vector.broadcast %c2_i32_184 : i32 to vector<2x1xi32>
    %675 = arith.cmpi sgt, %0, %674 : vector<2x1xi32>
    %c5_i32_185 = arith.constant 5 : i32
    %676 = vector.broadcast %c5_i32_185 : i32 to vector<2x1xi32>
    %677 = arith.cmpi sgt, %0, %676 : vector<2x1xi32>
    %678 = vector.shape_cast %675 : vector<2x1xi1> to vector<2x1xi1>
    %679 = vector.broadcast %678 : vector<2x1xi1> to vector<2x32xi1>
    %680 = arith.select %679, %656, %621 : vector<2x32xi1>, vector<2x32xf32>
    %681 = vector.shape_cast %675 : vector<2x1xi1> to vector<2x1xi1>
    %682 = vector.broadcast %681 : vector<2x1xi1> to vector<2x32xi1>
    %683 = arith.select %682, %654, %624 : vector<2x32xi1>, vector<2x32xf32>
    %684 = vector.shape_cast %677 : vector<2x1xi1> to vector<2x1xi1>
    %685 = vector.broadcast %684 : vector<2x1xi1> to vector<2x32xi1>
    %686 = arith.select %685, %673, %627 : vector<2x32xi1>, vector<2x32xf32>
    %687 = vector.shape_cast %677 : vector<2x1xi1> to vector<2x1xi1>
    %688 = vector.broadcast %687 : vector<2x1xi1> to vector<2x32xi1>
    %689 = arith.select %688, %671, %630 : vector<2x32xi1>, vector<2x32xf32>
    %cst_186 = arith.constant 5.000000e+00 : f32
    %690 = vector.broadcast %cst_186 : f32 to vector<1x1xf32>
    %691 = arith.cmpf oeq, %5, %690 : vector<1x1xf32>
    %692 = vector.broadcast %691 : vector<1x1xi1> to vector<2x1xi1>
    %693 = arith.andi %692, %677 : vector<2x1xi1>
    %694 = vector.shape_cast %693 : vector<2x1xi1> to vector<2x1xi1>
    %695 = vector.broadcast %694 : vector<2x1xi1> to vector<2x32xi1>
    %696 = arith.select %695, %673, %637 : vector<2x32xi1>, vector<2x32xf32>
    %c6_187 = arith.constant 6 : index
    %c0_188 = arith.constant 0 : index
    %697 = vector.load %arg19[%c6_187, %c0_188] : memref<16x256xf32, #tpu.memory_space<vmem>>, vector<2x128xf32>
    %c8_189 = arith.constant 8 : index
    %c128_190 = arith.constant 128 : index
    %698 = vector.load %arg19[%c8_189, %c128_190] : memref<16x256xf32, #tpu.memory_space<vmem>>, vector<2x128xf32>
    %cst_191 = arith.constant dense<0.000000e+00> : vector<2x128xf32>
    %699 = tpu.matmul %680, %517, %cst_191 {dimension_numbers = #tpu.dot_dimension_numbers<[1], [0], [0], [1], [0, 0, 1, 1], [], []>} : vector<2x32xf32>, vector<32x128xf32>, vector<2x128xf32> -> vector<2x128xf32>
    %700 = arith.addf %697, %699 : vector<2x128xf32>
    %701 = arith.negf %700 : vector<2x128xf32>
    %702 = math.exp %701 : vector<2x128xf32>
    %cst_192 = arith.constant 1.000000e+00 : f32
    %703 = vector.broadcast %cst_192 : f32 to vector<2x128xf32>
    %704 = arith.addf %703, %702 : vector<2x128xf32>
    %705 = arith.divf %703, %704 : vector<2x128xf32>
    %706 = math.tanh %700 : vector<2x128xf32>
    %707 = vector.extract_strided_slice %705 {offsets = [0, 0], sizes = [2, 32], strides = [1, 1]} : vector<2x128xf32> to vector<2x32xf32>
    %708 = vector.extract_strided_slice %705 {offsets = [0, 32], sizes = [2, 32], strides = [1, 1]} : vector<2x128xf32> to vector<2x32xf32>
    %709 = vector.extract_strided_slice %706 {offsets = [0, 64], sizes = [2, 32], strides = [1, 1]} : vector<2x128xf32> to vector<2x32xf32>
    %710 = vector.extract_strided_slice %705 {offsets = [0, 96], sizes = [2, 32], strides = [1, 1]} : vector<2x128xf32> to vector<2x32xf32>
    %711 = arith.mulf %708, %683 : vector<2x32xf32>
    %712 = arith.mulf %707, %709 : vector<2x32xf32>
    %713 = arith.addf %711, %712 : vector<2x32xf32>
    %714 = math.tanh %713 : vector<2x32xf32>
    %715 = arith.mulf %710, %714 : vector<2x32xf32>
    %cst_193 = arith.constant dense<0.000000e+00> : vector<2x128xf32>
    %716 = tpu.matmul %686, %518, %cst_193 {dimension_numbers = #tpu.dot_dimension_numbers<[1], [0], [0], [1], [0, 0, 1, 1], [], []>} : vector<2x32xf32>, vector<32x128xf32>, vector<2x128xf32> -> vector<2x128xf32>
    %717 = arith.addf %698, %716 : vector<2x128xf32>
    %718 = arith.negf %717 : vector<2x128xf32>
    %719 = math.exp %718 : vector<2x128xf32>
    %cst_194 = arith.constant 1.000000e+00 : f32
    %720 = vector.broadcast %cst_194 : f32 to vector<2x128xf32>
    %721 = arith.addf %720, %719 : vector<2x128xf32>
    %722 = arith.divf %720, %721 : vector<2x128xf32>
    %723 = math.tanh %717 : vector<2x128xf32>
    %724 = vector.extract_strided_slice %722 {offsets = [0, 0], sizes = [2, 32], strides = [1, 1]} : vector<2x128xf32> to vector<2x32xf32>
    %725 = vector.extract_strided_slice %722 {offsets = [0, 32], sizes = [2, 32], strides = [1, 1]} : vector<2x128xf32> to vector<2x32xf32>
    %726 = vector.extract_strided_slice %723 {offsets = [0, 64], sizes = [2, 32], strides = [1, 1]} : vector<2x128xf32> to vector<2x32xf32>
    %727 = vector.extract_strided_slice %722 {offsets = [0, 96], sizes = [2, 32], strides = [1, 1]} : vector<2x128xf32> to vector<2x32xf32>
    %728 = arith.mulf %725, %689 : vector<2x32xf32>
    %729 = arith.mulf %724, %726 : vector<2x32xf32>
    %730 = arith.addf %728, %729 : vector<2x32xf32>
    %731 = math.tanh %730 : vector<2x32xf32>
    %732 = arith.mulf %727, %731 : vector<2x32xf32>
    %c3_i32_195 = arith.constant 3 : i32
    %733 = vector.broadcast %c3_i32_195 : i32 to vector<2x1xi32>
    %734 = arith.cmpi sgt, %0, %733 : vector<2x1xi32>
    %c4_i32_196 = arith.constant 4 : i32
    %735 = vector.broadcast %c4_i32_196 : i32 to vector<2x1xi32>
    %736 = arith.cmpi sgt, %0, %735 : vector<2x1xi32>
    %737 = vector.shape_cast %734 : vector<2x1xi1> to vector<2x1xi1>
    %738 = vector.broadcast %737 : vector<2x1xi1> to vector<2x32xi1>
    %739 = arith.select %738, %715, %680 : vector<2x32xi1>, vector<2x32xf32>
    %740 = vector.shape_cast %734 : vector<2x1xi1> to vector<2x1xi1>
    %741 = vector.broadcast %740 : vector<2x1xi1> to vector<2x32xi1>
    %742 = arith.select %741, %713, %683 : vector<2x32xi1>, vector<2x32xf32>
    %743 = vector.shape_cast %736 : vector<2x1xi1> to vector<2x1xi1>
    %744 = vector.broadcast %743 : vector<2x1xi1> to vector<2x32xi1>
    %745 = arith.select %744, %732, %686 : vector<2x32xi1>, vector<2x32xf32>
    %746 = vector.shape_cast %736 : vector<2x1xi1> to vector<2x1xi1>
    %747 = vector.broadcast %746 : vector<2x1xi1> to vector<2x32xi1>
    %748 = arith.select %747, %730, %689 : vector<2x32xi1>, vector<2x32xf32>
    %cst_197 = arith.constant 4.000000e+00 : f32
    %749 = vector.broadcast %cst_197 : f32 to vector<1x1xf32>
    %750 = arith.cmpf oeq, %5, %749 : vector<1x1xf32>
    %751 = vector.broadcast %750 : vector<1x1xi1> to vector<2x1xi1>
    %752 = arith.andi %751, %736 : vector<2x1xi1>
    %753 = vector.shape_cast %752 : vector<2x1xi1> to vector<2x1xi1>
    %754 = vector.broadcast %753 : vector<2x1xi1> to vector<2x32xi1>
    %755 = arith.select %754, %732, %696 : vector<2x32xi1>, vector<2x32xf32>
    %c8_198 = arith.constant 8 : index
    %c0_199 = arith.constant 0 : index
    %756 = vector.load %arg19[%c8_198, %c0_199] : memref<16x256xf32, #tpu.memory_space<vmem>>, vector<2x128xf32>
    %c6_200 = arith.constant 6 : index
    %c128_201 = arith.constant 128 : index
    %757 = vector.load %arg19[%c6_200, %c128_201] : memref<16x256xf32, #tpu.memory_space<vmem>>, vector<2x128xf32>
    %cst_202 = arith.constant dense<0.000000e+00> : vector<2x128xf32>
    %758 = tpu.matmul %739, %517, %cst_202 {dimension_numbers = #tpu.dot_dimension_numbers<[1], [0], [0], [1], [0, 0, 1, 1], [], []>} : vector<2x32xf32>, vector<32x128xf32>, vector<2x128xf32> -> vector<2x128xf32>
    %759 = arith.addf %756, %758 : vector<2x128xf32>
    %760 = arith.negf %759 : vector<2x128xf32>
    %761 = math.exp %760 : vector<2x128xf32>
    %cst_203 = arith.constant 1.000000e+00 : f32
    %762 = vector.broadcast %cst_203 : f32 to vector<2x128xf32>
    %763 = arith.addf %762, %761 : vector<2x128xf32>
    %764 = arith.divf %762, %763 : vector<2x128xf32>
    %765 = math.tanh %759 : vector<2x128xf32>
    %766 = vector.extract_strided_slice %764 {offsets = [0, 0], sizes = [2, 32], strides = [1, 1]} : vector<2x128xf32> to vector<2x32xf32>
    %767 = vector.extract_strided_slice %764 {offsets = [0, 32], sizes = [2, 32], strides = [1, 1]} : vector<2x128xf32> to vector<2x32xf32>
    %768 = vector.extract_strided_slice %765 {offsets = [0, 64], sizes = [2, 32], strides = [1, 1]} : vector<2x128xf32> to vector<2x32xf32>
    %769 = vector.extract_strided_slice %764 {offsets = [0, 96], sizes = [2, 32], strides = [1, 1]} : vector<2x128xf32> to vector<2x32xf32>
    %770 = arith.mulf %767, %742 : vector<2x32xf32>
    %771 = arith.mulf %766, %768 : vector<2x32xf32>
    %772 = arith.addf %770, %771 : vector<2x32xf32>
    %773 = math.tanh %772 : vector<2x32xf32>
    %774 = arith.mulf %769, %773 : vector<2x32xf32>
    %cst_204 = arith.constant dense<0.000000e+00> : vector<2x128xf32>
    %775 = tpu.matmul %745, %518, %cst_204 {dimension_numbers = #tpu.dot_dimension_numbers<[1], [0], [0], [1], [0, 0, 1, 1], [], []>} : vector<2x32xf32>, vector<32x128xf32>, vector<2x128xf32> -> vector<2x128xf32>
    %776 = arith.addf %757, %775 : vector<2x128xf32>
    %777 = arith.negf %776 : vector<2x128xf32>
    %778 = math.exp %777 : vector<2x128xf32>
    %cst_205 = arith.constant 1.000000e+00 : f32
    %779 = vector.broadcast %cst_205 : f32 to vector<2x128xf32>
    %780 = arith.addf %779, %778 : vector<2x128xf32>
    %781 = arith.divf %779, %780 : vector<2x128xf32>
    %782 = math.tanh %776 : vector<2x128xf32>
    %783 = vector.extract_strided_slice %781 {offsets = [0, 0], sizes = [2, 32], strides = [1, 1]} : vector<2x128xf32> to vector<2x32xf32>
    %784 = vector.extract_strided_slice %781 {offsets = [0, 32], sizes = [2, 32], strides = [1, 1]} : vector<2x128xf32> to vector<2x32xf32>
    %785 = vector.extract_strided_slice %782 {offsets = [0, 64], sizes = [2, 32], strides = [1, 1]} : vector<2x128xf32> to vector<2x32xf32>
    %786 = vector.extract_strided_slice %781 {offsets = [0, 96], sizes = [2, 32], strides = [1, 1]} : vector<2x128xf32> to vector<2x32xf32>
    %787 = arith.mulf %784, %748 : vector<2x32xf32>
    %788 = arith.mulf %783, %785 : vector<2x32xf32>
    %789 = arith.addf %787, %788 : vector<2x32xf32>
    %790 = math.tanh %789 : vector<2x32xf32>
    %791 = arith.mulf %786, %790 : vector<2x32xf32>
    %c4_i32_206 = arith.constant 4 : i32
    %792 = vector.broadcast %c4_i32_206 : i32 to vector<2x1xi32>
    %793 = arith.cmpi sgt, %0, %792 : vector<2x1xi32>
    %c3_i32_207 = arith.constant 3 : i32
    %794 = vector.broadcast %c3_i32_207 : i32 to vector<2x1xi32>
    %795 = arith.cmpi sgt, %0, %794 : vector<2x1xi32>
    %796 = vector.shape_cast %793 : vector<2x1xi1> to vector<2x1xi1>
    %797 = vector.broadcast %796 : vector<2x1xi1> to vector<2x32xi1>
    %798 = arith.select %797, %774, %739 : vector<2x32xi1>, vector<2x32xf32>
    %799 = vector.shape_cast %793 : vector<2x1xi1> to vector<2x1xi1>
    %800 = vector.broadcast %799 : vector<2x1xi1> to vector<2x32xi1>
    %801 = arith.select %800, %772, %742 : vector<2x32xi1>, vector<2x32xf32>
    %802 = vector.shape_cast %795 : vector<2x1xi1> to vector<2x1xi1>
    %803 = vector.broadcast %802 : vector<2x1xi1> to vector<2x32xi1>
    %804 = arith.select %803, %791, %745 : vector<2x32xi1>, vector<2x32xf32>
    %805 = vector.shape_cast %795 : vector<2x1xi1> to vector<2x1xi1>
    %806 = vector.broadcast %805 : vector<2x1xi1> to vector<2x32xi1>
    %807 = arith.select %806, %789, %748 : vector<2x32xi1>, vector<2x32xf32>
    %cst_208 = arith.constant 3.000000e+00 : f32
    %808 = vector.broadcast %cst_208 : f32 to vector<1x1xf32>
    %809 = arith.cmpf oeq, %5, %808 : vector<1x1xf32>
    %810 = vector.broadcast %809 : vector<1x1xi1> to vector<2x1xi1>
    %811 = arith.andi %810, %795 : vector<2x1xi1>
    %812 = vector.shape_cast %811 : vector<2x1xi1> to vector<2x1xi1>
    %813 = vector.broadcast %812 : vector<2x1xi1> to vector<2x32xi1>
    %814 = arith.select %813, %791, %755 : vector<2x32xi1>, vector<2x32xf32>
    %c10_209 = arith.constant 10 : index
    %c0_210 = arith.constant 0 : index
    %815 = vector.load %arg19[%c10_209, %c0_210] : memref<16x256xf32, #tpu.memory_space<vmem>>, vector<2x128xf32>
    %c4_211 = arith.constant 4 : index
    %c128_212 = arith.constant 128 : index
    %816 = vector.load %arg19[%c4_211, %c128_212] : memref<16x256xf32, #tpu.memory_space<vmem>>, vector<2x128xf32>
    %cst_213 = arith.constant dense<0.000000e+00> : vector<2x128xf32>
    %817 = tpu.matmul %798, %517, %cst_213 {dimension_numbers = #tpu.dot_dimension_numbers<[1], [0], [0], [1], [0, 0, 1, 1], [], []>} : vector<2x32xf32>, vector<32x128xf32>, vector<2x128xf32> -> vector<2x128xf32>
    %818 = arith.addf %815, %817 : vector<2x128xf32>
    %819 = arith.negf %818 : vector<2x128xf32>
    %820 = math.exp %819 : vector<2x128xf32>
    %cst_214 = arith.constant 1.000000e+00 : f32
    %821 = vector.broadcast %cst_214 : f32 to vector<2x128xf32>
    %822 = arith.addf %821, %820 : vector<2x128xf32>
    %823 = arith.divf %821, %822 : vector<2x128xf32>
    %824 = math.tanh %818 : vector<2x128xf32>
    %825 = vector.extract_strided_slice %823 {offsets = [0, 0], sizes = [2, 32], strides = [1, 1]} : vector<2x128xf32> to vector<2x32xf32>
    %826 = vector.extract_strided_slice %823 {offsets = [0, 32], sizes = [2, 32], strides = [1, 1]} : vector<2x128xf32> to vector<2x32xf32>
    %827 = vector.extract_strided_slice %824 {offsets = [0, 64], sizes = [2, 32], strides = [1, 1]} : vector<2x128xf32> to vector<2x32xf32>
    %828 = vector.extract_strided_slice %823 {offsets = [0, 96], sizes = [2, 32], strides = [1, 1]} : vector<2x128xf32> to vector<2x32xf32>
    %829 = arith.mulf %826, %801 : vector<2x32xf32>
    %830 = arith.mulf %825, %827 : vector<2x32xf32>
    %831 = arith.addf %829, %830 : vector<2x32xf32>
    %832 = math.tanh %831 : vector<2x32xf32>
    %833 = arith.mulf %828, %832 : vector<2x32xf32>
    %cst_215 = arith.constant dense<0.000000e+00> : vector<2x128xf32>
    %834 = tpu.matmul %804, %518, %cst_215 {dimension_numbers = #tpu.dot_dimension_numbers<[1], [0], [0], [1], [0, 0, 1, 1], [], []>} : vector<2x32xf32>, vector<32x128xf32>, vector<2x128xf32> -> vector<2x128xf32>
    %835 = arith.addf %816, %834 : vector<2x128xf32>
    %836 = arith.negf %835 : vector<2x128xf32>
    %837 = math.exp %836 : vector<2x128xf32>
    %cst_216 = arith.constant 1.000000e+00 : f32
    %838 = vector.broadcast %cst_216 : f32 to vector<2x128xf32>
    %839 = arith.addf %838, %837 : vector<2x128xf32>
    %840 = arith.divf %838, %839 : vector<2x128xf32>
    %841 = math.tanh %835 : vector<2x128xf32>
    %842 = vector.extract_strided_slice %840 {offsets = [0, 0], sizes = [2, 32], strides = [1, 1]} : vector<2x128xf32> to vector<2x32xf32>
    %843 = vector.extract_strided_slice %840 {offsets = [0, 32], sizes = [2, 32], strides = [1, 1]} : vector<2x128xf32> to vector<2x32xf32>
    %844 = vector.extract_strided_slice %841 {offsets = [0, 64], sizes = [2, 32], strides = [1, 1]} : vector<2x128xf32> to vector<2x32xf32>
    %845 = vector.extract_strided_slice %840 {offsets = [0, 96], sizes = [2, 32], strides = [1, 1]} : vector<2x128xf32> to vector<2x32xf32>
    %846 = arith.mulf %843, %807 : vector<2x32xf32>
    %847 = arith.mulf %842, %844 : vector<2x32xf32>
    %848 = arith.addf %846, %847 : vector<2x32xf32>
    %849 = math.tanh %848 : vector<2x32xf32>
    %850 = arith.mulf %845, %849 : vector<2x32xf32>
    %c5_i32_217 = arith.constant 5 : i32
    %851 = vector.broadcast %c5_i32_217 : i32 to vector<2x1xi32>
    %852 = arith.cmpi sgt, %0, %851 : vector<2x1xi32>
    %c2_i32_218 = arith.constant 2 : i32
    %853 = vector.broadcast %c2_i32_218 : i32 to vector<2x1xi32>
    %854 = arith.cmpi sgt, %0, %853 : vector<2x1xi32>
    %855 = vector.shape_cast %852 : vector<2x1xi1> to vector<2x1xi1>
    %856 = vector.broadcast %855 : vector<2x1xi1> to vector<2x32xi1>
    %857 = arith.select %856, %833, %798 : vector<2x32xi1>, vector<2x32xf32>
    %858 = vector.shape_cast %852 : vector<2x1xi1> to vector<2x1xi1>
    %859 = vector.broadcast %858 : vector<2x1xi1> to vector<2x32xi1>
    %860 = arith.select %859, %831, %801 : vector<2x32xi1>, vector<2x32xf32>
    %861 = vector.shape_cast %854 : vector<2x1xi1> to vector<2x1xi1>
    %862 = vector.broadcast %861 : vector<2x1xi1> to vector<2x32xi1>
    %863 = arith.select %862, %850, %804 : vector<2x32xi1>, vector<2x32xf32>
    %864 = vector.shape_cast %854 : vector<2x1xi1> to vector<2x1xi1>
    %865 = vector.broadcast %864 : vector<2x1xi1> to vector<2x32xi1>
    %866 = arith.select %865, %848, %807 : vector<2x32xi1>, vector<2x32xf32>
    %cst_219 = arith.constant 2.000000e+00 : f32
    %867 = vector.broadcast %cst_219 : f32 to vector<1x1xf32>
    %868 = arith.cmpf oeq, %5, %867 : vector<1x1xf32>
    %869 = vector.broadcast %868 : vector<1x1xi1> to vector<2x1xi1>
    %870 = arith.andi %869, %854 : vector<2x1xi1>
    %871 = vector.shape_cast %870 : vector<2x1xi1> to vector<2x1xi1>
    %872 = vector.broadcast %871 : vector<2x1xi1> to vector<2x32xi1>
    %873 = arith.select %872, %850, %814 : vector<2x32xi1>, vector<2x32xf32>
    %c12_220 = arith.constant 12 : index
    %c0_221 = arith.constant 0 : index
    %874 = vector.load %arg19[%c12_220, %c0_221] : memref<16x256xf32, #tpu.memory_space<vmem>>, vector<2x128xf32>
    %c2_222 = arith.constant 2 : index
    %c128_223 = arith.constant 128 : index
    %875 = vector.load %arg19[%c2_222, %c128_223] : memref<16x256xf32, #tpu.memory_space<vmem>>, vector<2x128xf32>
    %cst_224 = arith.constant dense<0.000000e+00> : vector<2x128xf32>
    %876 = tpu.matmul %857, %517, %cst_224 {dimension_numbers = #tpu.dot_dimension_numbers<[1], [0], [0], [1], [0, 0, 1, 1], [], []>} : vector<2x32xf32>, vector<32x128xf32>, vector<2x128xf32> -> vector<2x128xf32>
    %877 = arith.addf %874, %876 : vector<2x128xf32>
    %878 = arith.negf %877 : vector<2x128xf32>
    %879 = math.exp %878 : vector<2x128xf32>
    %cst_225 = arith.constant 1.000000e+00 : f32
    %880 = vector.broadcast %cst_225 : f32 to vector<2x128xf32>
    %881 = arith.addf %880, %879 : vector<2x128xf32>
    %882 = arith.divf %880, %881 : vector<2x128xf32>
    %883 = math.tanh %877 : vector<2x128xf32>
    %884 = vector.extract_strided_slice %882 {offsets = [0, 0], sizes = [2, 32], strides = [1, 1]} : vector<2x128xf32> to vector<2x32xf32>
    %885 = vector.extract_strided_slice %882 {offsets = [0, 32], sizes = [2, 32], strides = [1, 1]} : vector<2x128xf32> to vector<2x32xf32>
    %886 = vector.extract_strided_slice %883 {offsets = [0, 64], sizes = [2, 32], strides = [1, 1]} : vector<2x128xf32> to vector<2x32xf32>
    %887 = vector.extract_strided_slice %882 {offsets = [0, 96], sizes = [2, 32], strides = [1, 1]} : vector<2x128xf32> to vector<2x32xf32>
    %888 = arith.mulf %885, %860 : vector<2x32xf32>
    %889 = arith.mulf %884, %886 : vector<2x32xf32>
    %890 = arith.addf %888, %889 : vector<2x32xf32>
    %891 = math.tanh %890 : vector<2x32xf32>
    %892 = arith.mulf %887, %891 : vector<2x32xf32>
    %cst_226 = arith.constant dense<0.000000e+00> : vector<2x128xf32>
    %893 = tpu.matmul %863, %518, %cst_226 {dimension_numbers = #tpu.dot_dimension_numbers<[1], [0], [0], [1], [0, 0, 1, 1], [], []>} : vector<2x32xf32>, vector<32x128xf32>, vector<2x128xf32> -> vector<2x128xf32>
    %894 = arith.addf %875, %893 : vector<2x128xf32>
    %895 = arith.negf %894 : vector<2x128xf32>
    %896 = math.exp %895 : vector<2x128xf32>
    %cst_227 = arith.constant 1.000000e+00 : f32
    %897 = vector.broadcast %cst_227 : f32 to vector<2x128xf32>
    %898 = arith.addf %897, %896 : vector<2x128xf32>
    %899 = arith.divf %897, %898 : vector<2x128xf32>
    %900 = math.tanh %894 : vector<2x128xf32>
    %901 = vector.extract_strided_slice %899 {offsets = [0, 0], sizes = [2, 32], strides = [1, 1]} : vector<2x128xf32> to vector<2x32xf32>
    %902 = vector.extract_strided_slice %899 {offsets = [0, 32], sizes = [2, 32], strides = [1, 1]} : vector<2x128xf32> to vector<2x32xf32>
    %903 = vector.extract_strided_slice %900 {offsets = [0, 64], sizes = [2, 32], strides = [1, 1]} : vector<2x128xf32> to vector<2x32xf32>
    %904 = vector.extract_strided_slice %899 {offsets = [0, 96], sizes = [2, 32], strides = [1, 1]} : vector<2x128xf32> to vector<2x32xf32>
    %905 = arith.mulf %902, %866 : vector<2x32xf32>
    %906 = arith.mulf %901, %903 : vector<2x32xf32>
    %907 = arith.addf %905, %906 : vector<2x32xf32>
    %908 = math.tanh %907 : vector<2x32xf32>
    %909 = arith.mulf %904, %908 : vector<2x32xf32>
    %c6_i32_228 = arith.constant 6 : i32
    %910 = vector.broadcast %c6_i32_228 : i32 to vector<2x1xi32>
    %911 = arith.cmpi sgt, %0, %910 : vector<2x1xi32>
    %c1_i32_229 = arith.constant 1 : i32
    %912 = vector.broadcast %c1_i32_229 : i32 to vector<2x1xi32>
    %913 = arith.cmpi sgt, %0, %912 : vector<2x1xi32>
    %914 = vector.shape_cast %911 : vector<2x1xi1> to vector<2x1xi1>
    %915 = vector.broadcast %914 : vector<2x1xi1> to vector<2x32xi1>
    %916 = arith.select %915, %892, %857 : vector<2x32xi1>, vector<2x32xf32>
    %917 = vector.shape_cast %911 : vector<2x1xi1> to vector<2x1xi1>
    %918 = vector.broadcast %917 : vector<2x1xi1> to vector<2x32xi1>
    %919 = arith.select %918, %890, %860 : vector<2x32xi1>, vector<2x32xf32>
    %920 = vector.shape_cast %913 : vector<2x1xi1> to vector<2x1xi1>
    %921 = vector.broadcast %920 : vector<2x1xi1> to vector<2x32xi1>
    %922 = arith.select %921, %909, %863 : vector<2x32xi1>, vector<2x32xf32>
    %923 = vector.shape_cast %913 : vector<2x1xi1> to vector<2x1xi1>
    %924 = vector.broadcast %923 : vector<2x1xi1> to vector<2x32xi1>
    %925 = arith.select %924, %907, %866 : vector<2x32xi1>, vector<2x32xf32>
    %cst_230 = arith.constant 1.000000e+00 : f32
    %926 = vector.broadcast %cst_230 : f32 to vector<1x1xf32>
    %927 = arith.cmpf oeq, %5, %926 : vector<1x1xf32>
    %928 = vector.broadcast %927 : vector<1x1xi1> to vector<2x1xi1>
    %929 = arith.andi %928, %913 : vector<2x1xi1>
    %930 = vector.shape_cast %929 : vector<2x1xi1> to vector<2x1xi1>
    %931 = vector.broadcast %930 : vector<2x1xi1> to vector<2x32xi1>
    %932 = arith.select %931, %909, %873 : vector<2x32xi1>, vector<2x32xf32>
    %c14_231 = arith.constant 14 : index
    %c0_232 = arith.constant 0 : index
    %933 = vector.load %arg19[%c14_231, %c0_232] : memref<16x256xf32, #tpu.memory_space<vmem>>, vector<2x128xf32>
    %c0_233 = arith.constant 0 : index
    %c128_234 = arith.constant 128 : index
    %934 = vector.load %arg19[%c0_233, %c128_234] : memref<16x256xf32, #tpu.memory_space<vmem>>, vector<2x128xf32>
    %cst_235 = arith.constant dense<0.000000e+00> : vector<2x128xf32>
    %935 = tpu.matmul %916, %517, %cst_235 {dimension_numbers = #tpu.dot_dimension_numbers<[1], [0], [0], [1], [0, 0, 1, 1], [], []>} : vector<2x32xf32>, vector<32x128xf32>, vector<2x128xf32> -> vector<2x128xf32>
    %936 = arith.addf %933, %935 : vector<2x128xf32>
    %937 = arith.negf %936 : vector<2x128xf32>
    %938 = math.exp %937 : vector<2x128xf32>
    %cst_236 = arith.constant 1.000000e+00 : f32
    %939 = vector.broadcast %cst_236 : f32 to vector<2x128xf32>
    %940 = arith.addf %939, %938 : vector<2x128xf32>
    %941 = arith.divf %939, %940 : vector<2x128xf32>
    %942 = math.tanh %936 : vector<2x128xf32>
    %943 = vector.extract_strided_slice %941 {offsets = [0, 0], sizes = [2, 32], strides = [1, 1]} : vector<2x128xf32> to vector<2x32xf32>
    %944 = vector.extract_strided_slice %941 {offsets = [0, 32], sizes = [2, 32], strides = [1, 1]} : vector<2x128xf32> to vector<2x32xf32>
    %945 = vector.extract_strided_slice %942 {offsets = [0, 64], sizes = [2, 32], strides = [1, 1]} : vector<2x128xf32> to vector<2x32xf32>
    %946 = vector.extract_strided_slice %941 {offsets = [0, 96], sizes = [2, 32], strides = [1, 1]} : vector<2x128xf32> to vector<2x32xf32>
    %947 = arith.mulf %944, %919 : vector<2x32xf32>
    %948 = arith.mulf %943, %945 : vector<2x32xf32>
    %949 = arith.addf %947, %948 : vector<2x32xf32>
    %950 = math.tanh %949 : vector<2x32xf32>
    %951 = arith.mulf %946, %950 : vector<2x32xf32>
    %cst_237 = arith.constant dense<0.000000e+00> : vector<2x128xf32>
    %952 = tpu.matmul %922, %518, %cst_237 {dimension_numbers = #tpu.dot_dimension_numbers<[1], [0], [0], [1], [0, 0, 1, 1], [], []>} : vector<2x32xf32>, vector<32x128xf32>, vector<2x128xf32> -> vector<2x128xf32>
    %953 = arith.addf %934, %952 : vector<2x128xf32>
    %954 = arith.negf %953 : vector<2x128xf32>
    %955 = math.exp %954 : vector<2x128xf32>
    %cst_238 = arith.constant 1.000000e+00 : f32
    %956 = vector.broadcast %cst_238 : f32 to vector<2x128xf32>
    %957 = arith.addf %956, %955 : vector<2x128xf32>
    %958 = arith.divf %956, %957 : vector<2x128xf32>
    %959 = math.tanh %953 : vector<2x128xf32>
    %960 = vector.extract_strided_slice %958 {offsets = [0, 0], sizes = [2, 32], strides = [1, 1]} : vector<2x128xf32> to vector<2x32xf32>
    %961 = vector.extract_strided_slice %958 {offsets = [0, 32], sizes = [2, 32], strides = [1, 1]} : vector<2x128xf32> to vector<2x32xf32>
    %962 = vector.extract_strided_slice %959 {offsets = [0, 64], sizes = [2, 32], strides = [1, 1]} : vector<2x128xf32> to vector<2x32xf32>
    %963 = vector.extract_strided_slice %958 {offsets = [0, 96], sizes = [2, 32], strides = [1, 1]} : vector<2x128xf32> to vector<2x32xf32>
    %964 = arith.mulf %961, %925 : vector<2x32xf32>
    %965 = arith.mulf %960, %962 : vector<2x32xf32>
    %966 = arith.addf %964, %965 : vector<2x32xf32>
    %967 = math.tanh %966 : vector<2x32xf32>
    %968 = arith.mulf %963, %967 : vector<2x32xf32>
    %c7_i32_239 = arith.constant 7 : i32
    %969 = vector.broadcast %c7_i32_239 : i32 to vector<2x1xi32>
    %970 = arith.cmpi sgt, %0, %969 : vector<2x1xi32>
    %c0_i32_240 = arith.constant 0 : i32
    %971 = vector.broadcast %c0_i32_240 : i32 to vector<2x1xi32>
    %972 = arith.cmpi sgt, %0, %971 : vector<2x1xi32>
    %973 = vector.shape_cast %970 : vector<2x1xi1> to vector<2x1xi1>
    %974 = vector.broadcast %973 : vector<2x1xi1> to vector<2x32xi1>
    %975 = arith.select %974, %951, %916 : vector<2x32xi1>, vector<2x32xf32>
    %cst_241 = arith.constant 0.000000e+00 : f32
    %976 = vector.broadcast %cst_241 : f32 to vector<1x1xf32>
    %977 = arith.cmpf oeq, %5, %976 : vector<1x1xf32>
    %978 = vector.broadcast %977 : vector<1x1xi1> to vector<2x1xi1>
    %979 = arith.andi %978, %972 : vector<2x1xi1>
    %980 = vector.shape_cast %979 : vector<2x1xi1> to vector<2x1xi1>
    %981 = vector.broadcast %980 : vector<2x1xi1> to vector<2x32xi1>
    %982 = arith.select %981, %968, %932 : vector<2x32xi1>, vector<2x32xf32>
    %983 = vector.broadcast %5 : vector<1x1xf32> to vector<2x1xf32>
    %984 = arith.cmpf ogt, %1, %983 : vector<2x1xf32>
    %cst_242 = arith.constant 0.000000e+00 : f32
    %985 = vector.shape_cast %984 : vector<2x1xi1> to vector<2x1xi1>
    %986 = vector.broadcast %985 : vector<2x1xi1> to vector<2x32xi1>
    %987 = vector.broadcast %cst_242 : f32 to vector<2x32xf32>
    %988 = arith.select %986, %975, %987 : vector<2x32xi1>, vector<2x32xf32>
    %c0_243 = arith.constant 0 : index
    %c0_244 = arith.constant 0 : index
    %989 = vector.load %arg15[%c0_243, %c0_244] : memref<64x16xf32, #tpu.memory_space<vmem>>, vector<64x16xf32>
    %990 = vector.extract_strided_slice %989 {offsets = [0, 0], sizes = [32, 16], strides = [1, 1]} : vector<64x16xf32> to vector<32x16xf32>
    %cst_245 = arith.constant dense<0.000000e+00> : vector<2x16xf32>
    %991 = tpu.matmul %988, %990, %cst_245 {dimension_numbers = #tpu.dot_dimension_numbers<[1], [0], [0], [1], [0, 0, 1, 1], [], []>} : vector<2x32xf32>, vector<32x16xf32>, vector<2x16xf32> -> vector<2x16xf32>
    %992 = vector.extract_strided_slice %989 {offsets = [32, 0], sizes = [32, 16], strides = [1, 1]} : vector<64x16xf32> to vector<32x16xf32>
    %cst_246 = arith.constant dense<0.000000e+00> : vector<2x16xf32>
    %993 = tpu.matmul %982, %992, %cst_246 {dimension_numbers = #tpu.dot_dimension_numbers<[1], [0], [0], [1], [0, 0, 1, 1], [], []>} : vector<2x32xf32>, vector<32x16xf32>, vector<2x16xf32> -> vector<2x16xf32>
    %994 = arith.addf %991, %993 : vector<2x16xf32>
    %c0_247 = arith.constant 0 : index
    %c0_248 = arith.constant 0 : index
    %995 = vector.load %arg16[%c0_247, %c0_248] : memref<1x16xf32, #tpu.memory_space<vmem>>, vector<1x16xf32>
    %996 = vector.broadcast %995 : vector<1x16xf32> to vector<2x16xf32>
    %997 = arith.addf %994, %996 : vector<2x16xf32>
    %c0_249 = arith.constant 0 : index
    %c0_250 = arith.constant 0 : index
    %998 = vector.load %arg17[%c0_249, %c0_250] : memref<2x16xf32, #tpu.memory_space<vmem>>, vector<2x16xf32>
    tpu.vector_store %arg17[%c0_249, %c0_250], %997 {strides = array<i32>} : memref<2x16xf32, #tpu.memory_space<vmem>>, vector<2x16xf32>,
    return
  }
  func.func @transform_0(%arg0: i32) -> (i32, i32) {
    %c0_i32 = arith.constant 0 : i32
    %c0_i32_0 = arith.constant 0 : i32
    %c0_i32_1 = arith.constant 0 : i32
    return %c0_i32, %c0_i32_0 : i32, i32
  }
  func.func @transform_1(%arg0: i32) -> (i32, i32) {
    %c0_i32 = arith.constant 0 : i32
    %c0_i32_0 = arith.constant 0 : i32
    %c0_i32_1 = arith.constant 0 : i32
    return %c0_i32, %c0_i32_0 : i32, i32
  }
  func.func @transform_2(%arg0: i32) -> (i32, i32) {
    %c0_i32 = arith.constant 0 : i32
    %c0_i32_0 = arith.constant 0 : i32
    %c0_i32_1 = arith.constant 0 : i32
    return %c0_i32, %c0_i32_0 : i32, i32
  }
  func.func @transform_3(%arg0: i32) -> (i32, i32) {
    %c0_i32 = arith.constant 0 : i32
    %c0_i32_0 = arith.constant 0 : i32
    %c0_i32_1 = arith.constant 0 : i32
    return %c0_i32, %c0_i32_0 : i32, i32
  }
  func.func @transform_4(%arg0: i32) -> (i32, i32) {
    %c0_i32 = arith.constant 0 : i32
    %c0_i32_0 = arith.constant 0 : i32
    %c0_i32_1 = arith.constant 0 : i32
    return %c0_i32, %c0_i32_0 : i32, i32
  }
  func.func @transform_5(%arg0: i32) -> (i32, i32) {
    %c0_i32 = arith.constant 0 : i32
    %c0_i32_0 = arith.constant 0 : i32
    %c0_i32_1 = arith.constant 0 : i32
    return %c0_i32, %c0_i32_0 : i32, i32
  }
  func.func @transform_6(%arg0: i32) -> (i32, i32) {
    %c0_i32 = arith.constant 0 : i32
    %c0_i32_0 = arith.constant 0 : i32
    %c0_i32_1 = arith.constant 0 : i32
    return %c0_i32, %c0_i32_0 : i32, i32
  }
  func.func @transform_7(%arg0: i32) -> (i32, i32) {
    %c0_i32 = arith.constant 0 : i32
    %c0_i32_0 = arith.constant 0 : i32
    %c0_i32_1 = arith.constant 0 : i32
    return %c0_i32, %c0_i32_0 : i32, i32
  }
  func.func @transform_8(%arg0: i32) -> (i32, i32) {
    %c0_i32 = arith.constant 0 : i32
    %c0_i32_0 = arith.constant 0 : i32
    %c0_i32_1 = arith.constant 0 : i32
    return %c0_i32, %c0_i32_0 : i32, i32
  }
  func.func @transform_9(%arg0: i32) -> (i32, i32) {
    %c0_i32 = arith.constant 0 : i32
    %c0_i32_0 = arith.constant 0 : i32
    %c0_i32_1 = arith.constant 0 : i32
    return %c0_i32, %c0_i32_0 : i32, i32
  }
  func.func @transform_10(%arg0: i32) -> (i32, i32) {
    %c0_i32 = arith.constant 0 : i32
    %c0_i32_0 = arith.constant 0 : i32
    %c0_i32_1 = arith.constant 0 : i32
    return %c0_i32, %c0_i32_0 : i32, i32
  }
  func.func @transform_11(%arg0: i32) -> (i32, i32) {
    %c0_i32 = arith.constant 0 : i32
    %c0_i32_0 = arith.constant 0 : i32
    %c0_i32_1 = arith.constant 0 : i32
    return %c0_i32, %c0_i32_0 : i32, i32
  }
  func.func @transform_12(%arg0: i32) -> (i32, i32) {
    %c0_i32 = arith.constant 0 : i32
    %c0_i32_0 = arith.constant 0 : i32
    %c0_i32_1 = arith.constant 0 : i32
    return %c0_i32, %c0_i32_0 : i32, i32
  }
  func.func @transform_13(%arg0: i32) -> (i32, i32) {
    %c0_i32 = arith.constant 0 : i32
    %c0_i32_0 = arith.constant 0 : i32
    %c0_i32_1 = arith.constant 0 : i32
    return %c0_i32, %c0_i32_0 : i32, i32
  }
  func.func @transform_14(%arg0: i32) -> (i32, i32) {
    %c0_i32 = arith.constant 0 : i32
    %c0_i32_0 = arith.constant 0 : i32
    %c0_i32_1 = arith.constant 0 : i32
    return %c0_i32, %c0_i32_0 : i32, i32
  }
  func.func @transform_15(%arg0: i32) -> (i32, i32) {
    %c0_i32 = arith.constant 0 : i32
    %c0_i32_0 = arith.constant 0 : i32
    %c0_i32_1 = arith.constant 0 : i32
    return %c0_i32, %c0_i32_0 : i32, i32
  }
  func.func @transform_16(%arg0: i32) -> (i32, i32) {
    %c0_i32 = arith.constant 0 : i32
    %c0_i32_0 = arith.constant 0 : i32
    %c0_i32_1 = arith.constant 0 : i32
    return %c0_i32, %c0_i32_0 : i32, i32
  }
}

</mosaic_0001>

<llo_original>
// kernel: tpu_custom_call.1
$region0: #{tpu_custom_call.1}
  #allocation0 [shape = 'u32[]', space=smem, size = 0x4, offset = 0x4, fixed_abs, tag = 'smem constant byte address 0x4 - core index']
  #allocation1 [shape = 'u32[72,128]{1,0:T(1,128)}', space=vmem, size = 0x9000, scoped, tag = 'internal scratch']
  #allocation2 [shape = 'f32[16,256]{1,0:T(8,128)}', space=vmem, size = 0x4000, scoped, tag = 'scratch operand']
  #allocation3 [shape = 'f32[16,256]{1,0:T(8,128)}', space=vmem, size = 0x4000, scoped, tag = 'scratch operand']
  #allocation4 [shape = 'f32[16,32]{1,0:T(8,128)}', space=vmem, size = 0x2000, scoped, tag = 'scratch operand']
  #allocation5 [shape = 'f32[16,32]{1,0:T(8,128)}', space=vmem, size = 0x2000, scoped, tag = 'scratch operand']
  %s0 = inlined_call_operand.vmem [shape: f32[16,32], index: 0, kind: input, shape index: {}]
  %s1 = inlined_call_operand.vmem [shape: s32[2,1], index: 1, kind: input, shape index: {}]
  %s2 = inlined_call_operand.vmem [shape: f32[2,768], index: 2, kind: input, shape index: {}]
  %s3 = inlined_call_operand.vmem [shape: f32[768,32], index: 3, kind: input, shape index: {}]
  %s4 = inlined_call_operand.vmem [shape: f32[1,32], index: 4, kind: input, shape index: {}]
  %s5 = inlined_call_operand.vmem [shape: f32[32,256], index: 5, kind: input, shape index: {}]
  %s6 = inlined_call_operand.vmem [shape: f32[32,128], index: 6, kind: input, shape index: {}]
  %s7 = inlined_call_operand.vmem [shape: f32[32,128], index: 7, kind: input, shape index: {}]
  %s8 = inlined_call_operand.vmem [shape: f32[1,256], index: 8, kind: input, shape index: {}]
  %s9 = inlined_call_operand.vmem [shape: f32[32,256], index: 9, kind: input, shape index: {}]
  %s10 = inlined_call_operand.vmem [shape: f32[32,256], index: 10, kind: input, shape index: {}]
  %s11 = inlined_call_operand.vmem [shape: f32[32,128], index: 11, kind: input, shape index: {}]
  %s12 = inlined_call_operand.vmem [shape: f32[32,128], index: 12, kind: input, shape index: {}]
  %s13 = inlined_call_operand.vmem [shape: f32[1,256], index: 13, kind: input, shape index: {}]
  %s14 = inlined_call_operand.vmem [shape: f32[64,16], index: 14, kind: input, shape index: {}]
  %s15 = inlined_call_operand.vmem [shape: f32[1,16], index: 15, kind: input, shape index: {}]
  %s16 = inlined_call_operand.hbm [shape: f32[2,16], index: 16, kind: output, shape index: {}]
  %s17 = sld [smem:[#allocation0]]
  $region74: #{tpu_custom_call.1} parent=0
    _
  %s19 = ssub.s32 1, %s17
  %s20 = scalar_select 0, %s19, %s17
  $region1: #{tpu_custom_call.1} parent=0
    #allocation6 [shape = 'u8[1024]{0}', space=vmem, size = 0x400, scoped, tag = 'output window, operand 0, single buffered']
    #allocation7 [shape = 's32[1]{0}', space=sflag, size = 0x4, scoped, tag = 'scoped memory for tpu_custom_call.1']
    %21 = vsyncpa [#allocation7], 0
    // Predicated region
    $region2: #{tpu_custom_call.1} parent=1 // pred_check
      _
    $region3: #{tpu_custom_call.1} parent=1 // pred_check_branch
      %23 = sbr.rel (0) target = $region5
    $region4: #{tpu_custom_call.1} parent=1 // pred_region
      _
    $region5: #{tpu_custom_call.1} parent=1 // pred_fallthru
      _
    // Predicated region
    $region6: #{tpu_custom_call.1} parent=1 // pred_check
      _
    $region7: #{tpu_custom_call.1} parent=1 // pred_check_branch
      %25 = sbr.rel (0) target = $region9
    $region8: #{tpu_custom_call.1} parent=1 // pred_region
      _
    $region9: #{tpu_custom_call.1} parent=1 // pred_fallthru
      _
    // Predicated region
    $region10: #{tpu_custom_call.1} parent=1 // pred_check
      _
    $region11: #{tpu_custom_call.1} parent=1 // pred_check_branch
      %27 = sbr.rel (0) target = $region13
    $region12: #{tpu_custom_call.1} parent=1 // pred_region
      _
    $region13: #{tpu_custom_call.1} parent=1 // pred_fallthru
      _
    // Predicated region
    $region14: #{tpu_custom_call.1} parent=1 // pred_check
      _
    $region15: #{tpu_custom_call.1} parent=1 // pred_check_branch
      %29 = sbr.rel (0) target = $region17
    $region16: #{tpu_custom_call.1} parent=1 // pred_region
      _
    $region17: #{tpu_custom_call.1} parent=1 // pred_fallthru
      _
    // Predicated region
    $region18: #{tpu_custom_call.1} parent=1 // pred_check
      _
    $region19: #{tpu_custom_call.1} parent=1 // pred_check_branch
      %31 = sbr.rel (0) target = $region21
    $region20: #{tpu_custom_call.1} parent=1 // pred_region
      _
    $region21: #{tpu_custom_call.1} parent=1 // pred_fallthru
      _
    // Predicated region
    $region22: #{tpu_custom_call.1} parent=1 // pred_check
      _
    $region23: #{tpu_custom_call.1} parent=1 // pred_check_branch
      %33 = sbr.rel (0) target = $region25
    $region24: #{tpu_custom_call.1} parent=1 // pred_region
      _
    $region25: #{tpu_custom_call.1} parent=1 // pred_fallthru
      _
    // Predicated region
    $region26: #{tpu_custom_call.1} parent=1 // pred_check
      _
    $region27: #{tpu_custom_call.1} parent=1 // pred_check_branch
      %35 = sbr.rel (0) target = $region29
    $region28: #{tpu_custom_call.1} parent=1 // pred_region
      _
    $region29: #{tpu_custom_call.1} parent=1 // pred_fallthru
      _
    // Predicated region
    $region30: #{tpu_custom_call.1} parent=1 // pred_check
      _
    $region31: #{tpu_custom_call.1} parent=1 // pred_check_branch
      %37 = sbr.rel (0) target = $region33
    $region32: #{tpu_custom_call.1} parent=1 // pred_region
      _
    $region33: #{tpu_custom_call.1} parent=1 // pred_fallthru
      _
    // Predicated region
    $region34: #{tpu_custom_call.1} parent=1 // pred_check
      _
    $region35: #{tpu_custom_call.1} parent=1 // pred_check_branch
      %39 = sbr.rel (0) target = $region37
    $region36: #{tpu_custom_call.1} parent=1 // pred_region
      _
    $region37: #{tpu_custom_call.1} parent=1 // pred_fallthru
      _
    // Predicated region
    $region38: #{tpu_custom_call.1} parent=1 // pred_check
      _
    $region39: #{tpu_custom_call.1} parent=1 // pred_check_branch
      %41 = sbr.rel (0) target = $region41
    $region40: #{tpu_custom_call.1} parent=1 // pred_region
      _
    $region41: #{tpu_custom_call.1} parent=1 // pred_fallthru
      _
    // Predicated region
    $region42: #{tpu_custom_call.1} parent=1 // pred_check
      _
    $region43: #{tpu_custom_call.1} parent=1 // pred_check_branch
      %43 = sbr.rel (0) target = $region45
    $region44: #{tpu_custom_call.1} parent=1 // pred_region
      _
    $region45: #{tpu_custom_call.1} parent=1 // pred_fallthru
      _
    // Predicated region
    $region46: #{tpu_custom_call.1} parent=1 // pred_check
      _
    $region47: #{tpu_custom_call.1} parent=1 // pred_check_branch
      %45 = sbr.rel (0) target = $region49
    $region48: #{tpu_custom_call.1} parent=1 // pred_region
      _
    $region49: #{tpu_custom_call.1} parent=1 // pred_fallthru
      _
    // Predicated region
    $region50: #{tpu_custom_call.1} parent=1 // pred_check
      _
    $region51: #{tpu_custom_call.1} parent=1 // pred_check_branch
      %47 = sbr.rel (0) target = $region53
    $region52: #{tpu_custom_call.1} parent=1 // pred_region
      _
    $region53: #{tpu_custom_call.1} parent=1 // pred_fallthru
      _
    // Predicated region
    $region54: #{tpu_custom_call.1} parent=1 // pred_check
      _
    $region55: #{tpu_custom_call.1} parent=1 // pred_check_branch
      %49 = sbr.rel (0) target = $region57
    $region56: #{tpu_custom_call.1} parent=1 // pred_region
      _
    $region57: #{tpu_custom_call.1} parent=1 // pred_fallthru
      _
    // Predicated region
    $region58: #{tpu_custom_call.1} parent=1 // pred_check
      _
    $region59: #{tpu_custom_call.1} parent=1 // pred_check_branch
      %51 = sbr.rel (0) target = $region61
    $region60: #{tpu_custom_call.1} parent=1 // pred_region
      _
    $region61: #{tpu_custom_call.1} parent=1 // pred_fallthru
      _
    // Predicated region
    $region62: #{tpu_custom_call.1} parent=1 // pred_check
      _
    $region63: #{tpu_custom_call.1} parent=1 // pred_check_branch
      %53 = sbr.rel (0) target = $region65
    $region64: #{tpu_custom_call.1} parent=1 // pred_region
      _
    $region65: #{tpu_custom_call.1} parent=1 // pred_fallthru
      _
    %v54 = vld [vmem:[%s1] sm:$0x3]
    %v55 = vcvt.s32.f32 %v54
    %vm56 = vcmask 1024
    %v57 = vsel %vm56, %v55, -inf
    %v58 = vrot.slane %v57, 4
    %v59 = vmax.f32 %v57, %v58
    %v60 = vrot.slane %v59, 2
    %v61 = vmax.f32 %v59, %v60
    %v62 = vrot.slane %v61, 1
    %v63 = vmax.f32 %v61, %v62
    %v64 = vsub.f32 %v63, 1.0
    %v65 = vld [vmem:[%s2] sm:$0xff]
    %v66 = vld [vmem:[%s2 + $0x8] sm:$0xf]
    %v67 = vld [vmem:[%s3] sm:$0xff]
    %v68 = vld [vmem:[%s3 + $0x8] sm:$0xff]
    %v69 = vld [vmem:[%s3 + $0x10] sm:$0xff]
    %v70 = vld [vmem:[%s3 + $0x18] sm:$0xff]
    %v71 = vld [vmem:[%s3 + $0x20] sm:$0xff]
    %v72 = vld [vmem:[%s3 + $0x28] sm:$0xff]
    %v73 = vld [vmem:[%s3 + $0x30] sm:$0xff]
    %v74 = vld [vmem:[%s3 + $0x38] sm:$0xff]
    %v75 = vld [vmem:[%s3 + $0x40] sm:$0xff]
    %v76 = vld [vmem:[%s3 + $0x48] sm:$0xff]
    %v77 = vld [vmem:[%s3 + $0x50] sm:$0xff]
    %v78 = vld [vmem:[%s3 + $0x58] sm:$0xff]
    %v79 = vld [vmem:[%s3 + $0x60] sm:$0xff]
    %v80 = vld [vmem:[%s3 + $0x68] sm:$0xff]
    %v81 = vld [vmem:[%s3 + $0x70] sm:$0xff]
    %v82 = vld [vmem:[%s3 + $0x78] sm:$0xff]
    %v83 = vld [vmem:[%s3 + $0x80] sm:$0xff]
    %v84 = vld [vmem:[%s3 + $0x88] sm:$0xff]
    %v85 = vld [vmem:[%s3 + $0x90] sm:$0xff]
    %v86 = vld [vmem:[%s3 + $0x98] sm:$0xff]
    %v87 = vld [vmem:[%s3 + $0xa0] sm:$0xff]
    %v88 = vld [vmem:[%s3 + $0xa8] sm:$0xff]
    %v89 = vld [vmem:[%s3 + $0xb0] sm:$0xff]
    %v90 = vld [vmem:[%s3 + $0xb8] sm:$0xff]
    %v91 = vld [vmem:[%s3 + $0xc0] sm:$0xff]
    %v92 = vld [vmem:[%s3 + $0xc8] sm:$0xff]
    %v93 = vld [vmem:[%s3 + $0xd0] sm:$0xff]
    %v94 = vld [vmem:[%s3 + $0xd8] sm:$0xff]
    %v95 = vld [vmem:[%s3 + $0xe0] sm:$0xff]
    %v96 = vld [vmem:[%s3 + $0xe8] sm:$0xff]
    %v97 = vld [vmem:[%s3 + $0xf0] sm:$0xff]
    %v98 = vld [vmem:[%s3 + $0xf8] sm:$0xff]
    %v99 = vld [vmem:[%s3 + $0x100] sm:$0xff]
    %v100 = vld [vmem:[%s3 + $0x108] sm:$0xff]
    %v101 = vld [vmem:[%s3 + $0x110] sm:$0xff]
    %v102 = vld [vmem:[%s3 + $0x118] sm:$0xff]
    %v103 = vld [vmem:[%s3 + $0x120] sm:$0xff]
    %v104 = vld [vmem:[%s3 + $0x128] sm:$0xff]
    %v105 = vld [vmem:[%s3 + $0x130] sm:$0xff]
    %v106 = vld [vmem:[%s3 + $0x138] sm:$0xff]
    %v107 = vld [vmem:[%s3 + $0x140] sm:$0xff]
    %v108 = vld [vmem:[%s3 + $0x148] sm:$0xff]
    %v109 = vld [vmem:[%s3 + $0x150] sm:$0xff]
    %v110 = vld [vmem:[%s3 + $0x158] sm:$0xff]
    %v111 = vld [vmem:[%s3 + $0x160] sm:$0xff]
    %v112 = vld [vmem:[%s3 + $0x168] sm:$0xff]
    %v113 = vld [vmem:[%s3 + $0x170] sm:$0xff]
    %v114 = vld [vmem:[%s3 + $0x178] sm:$0xff]
    %v115 = vld [vmem:[%s3 + $0x180] sm:$0xff]
    %v116 = vld [vmem:[%s3 + $0x188] sm:$0xff]
    %v117 = vld [vmem:[%s3 + $0x190] sm:$0xff]
    %v118 = vld [vmem:[%s3 + $0x198] sm:$0xff]
    %v119 = vld [vmem:[%s3 + $0x1a0] sm:$0xff]
    %v120 = vld [vmem:[%s3 + $0x1a8] sm:$0xff]
    %v121 = vld [vmem:[%s3 + $0x1b0] sm:$0xff]
    %v122 = vld [vmem:[%s3 + $0x1b8] sm:$0xff]
    %v123 = vld [vmem:[%s3 + $0x1c0] sm:$0xff]
    %v124 = vld [vmem:[%s3 + $0x1c8] sm:$0xff]
    %v125 = vld [vmem:[%s3 + $0x1d0] sm:$0xff]
    %v126 = vld [vmem:[%s3 + $0x1d8] sm:$0xff]
    %v127 = vld [vmem:[%s3 + $0x1e0] sm:$0xff]
    %v128 = vld [vmem:[%s3 + $0x1e8] sm:$0xff]
    %v129 = vld [vmem:[%s3 + $0x1f0] sm:$0xff]
    %v130 = vld [vmem:[%s3 + $0x1f8] sm:$0xff]
    %v131 = vld [vmem:[%s3 + $0x200] sm:$0xff]
    %v132 = vld [vmem:[%s3 + $0x208] sm:$0xff]
    %v133 = vld [vmem:[%s3 + $0x210] sm:$0xff]
    %v134 = vld [vmem:[%s3 + $0x218] sm:$0xff]
    %v135 = vld [vmem:[%s3 + $0x220] sm:$0xff]
    %v136 = vld [vmem:[%s3 + $0x228] sm:$0xff]
    %v137 = vld [vmem:[%s3 + $0x230] sm:$0xff]
    %v138 = vld [vmem:[%s3 + $0x238] sm:$0xff]
    %v139 = vld [vmem:[%s3 + $0x240] sm:$0xff]
    %v140 = vld [vmem:[%s3 + $0x248] sm:$0xff]
    %v141 = vld [vmem:[%s3 + $0x250] sm:$0xff]
    %v142 = vld [vmem:[%s3 + $0x258] sm:$0xff]
    %v143 = vld [vmem:[%s3 + $0x260] sm:$0xff]
    %v144 = vld [vmem:[%s3 + $0x268] sm:$0xff]
    %v145 = vld [vmem:[%s3 + $0x270] sm:$0xff]
    %v146 = vld [vmem:[%s3 + $0x278] sm:$0xff]
    %v147 = vld [vmem:[%s3 + $0x280] sm:$0xff]
    %v148 = vld [vmem:[%s3 + $0x288] sm:$0xff]
    %v149 = vld [vmem:[%s3 + $0x290] sm:$0xff]
    %v150 = vld [vmem:[%s3 + $0x298] sm:$0xff]
    %v151 = vld [vmem:[%s3 + $0x2a0] sm:$0xff]
    %v152 = vld [vmem:[%s3 + $0x2a8] sm:$0xff]
    %v153 = vld [vmem:[%s3 + $0x2b0] sm:$0xff]
    %v154 = vld [vmem:[%s3 + $0x2b8] sm:$0xff]
    %v155 = vld [vmem:[%s3 + $0x2c0] sm:$0xff]
    %v156 = vld [vmem:[%s3 + $0x2c8] sm:$0xff]
    %v157 = vld [vmem:[%s3 + $0x2d0] sm:$0xff]
    %v158 = vld [vmem:[%s3 + $0x2d8] sm:$0xff]
    %v159 = vld [vmem:[%s3 + $0x2e0] sm:$0xff]
    %v160 = vld [vmem:[%s3 + $0x2e8] sm:$0xff]
    %v161 = vld [vmem:[%s3 + $0x2f0] sm:$0xff]
    %v162 = vld [vmem:[%s3 + $0x2f8] sm:$0xff]
    %v163 = vld [vmem:[%s4] sm:$0x1]
    %v165 = vperm.slane %v163, 0
    %169 = vst [vmem:[#allocation1] ss:$4 sm:$0xff] %v65
    %s170 = scalar_lea.vmem [#allocation1], 32
    %171 = vst [vmem:[%s170] ss:$4 sm:$0xff] %v66
    %v172 = vld.sshfl [vmem:[#allocation1] sm:$0xff pattern:$0x73625140]
    %v173 = vld.sshfl [vmem:[#allocation1 + $0x8] sm:$0xff pattern:$0x73625140]
    %v174 = vld.sshfl [vmem:[#allocation1 + $0x10] sm:$0xff pattern:$0x73625140]
    %v175 = vld.sshfl [vmem:[#allocation1 + $0x18] sm:$0xff pattern:$0x73625140]
    %v176 = vld.sshfl [vmem:[#allocation1 + $0x20] sm:$0xff pattern:$0x73625140]
    %v177 = vld.sshfl [vmem:[#allocation1 + $0x28] sm:$0xff pattern:$0x73625140]
    %184 = vmatpush.msra.mxu0 %v82
    %185 = vmatpush.msra.mxu0 %v81
    %186 = vmatpush.msra.mxu0 %v80
    %187 = vmatpush.msra.mxu0 %v79
    %188 = vmatpush.msra.mxu0 %v78
    %189 = vmatpush.msra.mxu0 %v77
    %190 = vmatpush.msra.mxu0 %v76
    %191 = vmatpush.msra.mxu0 %v75
    %192 = vmatpush.msra.mxu0 %v74
    %193 = vmatpush.msra.mxu0 %v73
    %194 = vmatpush.msra.mxu0 %v72
    %195 = vmatpush.msra.mxu0 %v71
    %196 = vmatpush.msra.mxu0 %v70
    %197 = vmatpush.msra.mxu0 %v69
    %198 = vmatpush.msra.mxu0 %v68
    %199 = vmatpush.msra.mxu0 %v67
    %200 = vmatmul.f32.gmra.mxu0 %v172
    %v201 = vpop.f32.mrf.mxu0
    %v202 = vadd.f32 %v165, %v201
    %203 = vdwg.mxu0
    %204 = vmatpush.msra.mxu0 %v98
    %205 = vmatpush.msra.mxu0 %v97
    %206 = vmatpush.msra.mxu0 %v96
    %207 = vmatpush.msra.mxu0 %v95
    %208 = vmatpush.msra.mxu0 %v94
    %209 = vmatpush.msra.mxu0 %v93
    %210 = vmatpush.msra.mxu0 %v92
    %211 = vmatpush.msra.mxu0 %v91
    %212 = vmatpush.msra.mxu0 %v90
    %213 = vmatpush.msra.mxu0 %v89
    %214 = vmatpush.msra.mxu0 %v88
    %215 = vmatpush.msra.mxu0 %v87
    %216 = vmatpush.msra.mxu0 %v86
    %217 = vmatpush.msra.mxu0 %v85
    %218 = vmatpush.msra.mxu0 %v84
    %219 = vmatpush.msra.mxu0 %v83
    %220 = vmatmul.f32.gmra.mxu0 %v173
    %v221 = vpop.f32.mrf.mxu0
    %v222 = vadd.f32 %v202, %v221
    %223 = vdwg.mxu0
    %224 = vmatpush.msra.mxu0 %v114
    %225 = vmatpush.msra.mxu0 %v113
    %226 = vmatpush.msra.mxu0 %v112
    %227 = vmatpush.msra.mxu0 %v111
    %228 = vmatpush.msra.mxu0 %v110
    %229 = vmatpush.msra.mxu0 %v109
    %230 = vmatpush.msra.mxu0 %v108
    %231 = vmatpush.msra.mxu0 %v107
    %232 = vmatpush.msra.mxu0 %v106
    %233 = vmatpush.msra.mxu0 %v105
    %234 = vmatpush.msra.mxu0 %v104
    %235 = vmatpush.msra.mxu0 %v103
    %236 = vmatpush.msra.mxu0 %v102
    %237 = vmatpush.msra.mxu0 %v101
    %238 = vmatpush.msra.mxu0 %v100
    %239 = vmatpush.msra.mxu0 %v99
    %240 = vmatmul.f32.gmra.mxu0 %v174
    %v241 = vpop.f32.mrf.mxu0
    %v242 = vadd.f32 %v222, %v241
    %243 = vdwg.mxu0
    %244 = vmatpush.msra.mxu0 %v130
    %245 = vmatpush.msra.mxu0 %v129
    %246 = vmatpush.msra.mxu0 %v128
    %247 = vmatpush.msra.mxu0 %v127
    %248 = vmatpush.msra.mxu0 %v126
    %249 = vmatpush.msra.mxu0 %v125
    %250 = vmatpush.msra.mxu0 %v124
    %251 = vmatpush.msra.mxu0 %v123
    %252 = vmatpush.msra.mxu0 %v122
    %253 = vmatpush.msra.mxu0 %v121
    %254 = vmatpush.msra.mxu0 %v120
    %255 = vmatpush.msra.mxu0 %v119
    %256 = vmatpush.msra.mxu0 %v118
    %257 = vmatpush.msra.mxu0 %v117
    %258 = vmatpush.msra.mxu0 %v116
    %259 = vmatpush.msra.mxu0 %v115
    %260 = vmatmul.f32.gmra.mxu0 %v175
    %v261 = vpop.f32.mrf.mxu0
    %v262 = vadd.f32 %v242, %v261
    %263 = vdwg.mxu0
    %264 = vmatpush.msra.mxu0 %v146
    %265 = vmatpush.msra.mxu0 %v145
    %266 = vmatpush.msra.mxu0 %v144
    %267 = vmatpush.msra.mxu0 %v143
    %268 = vmatpush.msra.mxu0 %v142
    %269 = vmatpush.msra.mxu0 %v141
    %270 = vmatpush.msra.mxu0 %v140
    %271 = vmatpush.msra.mxu0 %v139
    %272 = vmatpush.msra.mxu0 %v138
    %273 = vmatpush.msra.mxu0 %v137
    %274 = vmatpush.msra.mxu0 %v136
    %275 = vmatpush.msra.mxu0 %v135
    %276 = vmatpush.msra.mxu0 %v134
    %277 = vmatpush.msra.mxu0 %v133
    %278 = vmatpush.msra.mxu0 %v132
    %279 = vmatpush.msra.mxu0 %v131
    %280 = vmatmul.f32.gmra.mxu0 %v176
    %v281 = vpop.f32.mrf.mxu0
    %v282 = vadd.f32 %v262, %v281
    %283 = vdwg.mxu0
    %284 = vmatpush.msra.mxu0 %v162
    %285 = vmatpush.msra.mxu0 %v161
    %286 = vmatpush.msra.mxu0 %v160
    %287 = vmatpush.msra.mxu0 %v159
    %288 = vmatpush.msra.mxu0 %v158
    %289 = vmatpush.msra.mxu0 %v157
    %290 = vmatpush.msra.mxu0 %v156
    %291 = vmatpush.msra.mxu0 %v155
    %292 = vmatpush.msra.mxu0 %v154
    %293 = vmatpush.msra.mxu0 %v153
    %294 = vmatpush.msra.mxu0 %v152
    %295 = vmatpush.msra.mxu0 %v151
    %296 = vmatpush.msra.mxu0 %v150
    %297 = vmatpush.msra.mxu0 %v149
    %298 = vmatpush.msra.mxu0 %v148
    %299 = vmatpush.msra.mxu0 %v147
    %300 = vmatmul.f32.gmra.mxu0 %v177
    %v301 = vpop.f32.mrf.mxu0
    %v302 = vadd.f32 %v282, %v301
    %303 = vdwg.mxu0
    %v304 = vld [vmem:[%s0] sm:$0xff]
    %v305 = vld [vmem:[%s0 + $0x8] sm:$0xff]
    %v306 = vld [vmem:[%s5] sm:$0xff]
    %v307 = vld [vmem:[%s5 + $0x8] sm:$0xff]
    %v308 = vld [vmem:[%s5 + $0x10] sm:$0xff]
    %v309 = vld [vmem:[%s5 + $0x18] sm:$0xff]
    %v310 = vld [vmem:[%s5 + $0x20] sm:$0xff]
    %v311 = vld [vmem:[%s5 + $0x28] sm:$0xff]
    %v312 = vld [vmem:[%s5 + $0x30] sm:$0xff]
    %v313 = vld [vmem:[%s5 + $0x38] sm:$0xff]
    %v314 = vld [vmem:[%s8] sm:$0x3]
    %v316 = vperm.slane %v314, 0
    %v317 = vperm.slane %v314, 1
    %vm320 = vcmask 261120
    %v322 = vsel %vm320, %v304, 0
    %v325 = vsel %vm320, %v305, 0
    %327 = vmatpush.msra.mxu0 0.0
    %328 = vmatpush.msra.mxu0 0.0
    %329 = vmatpush.msra.mxu0 0.0
    %330 = vmatpush.msra.mxu0 0.0
    %331 = vmatpush.msra.mxu0 0.0
    %332 = vmatpush.msra.mxu0 0.0
    %333 = vmatpush.msra.mxu0 0.0
    %334 = vmatpush.msra.mxu0 0.0
    %335 = vmatpush.msra.mxu0 0.0
    %336 = vmatpush.msra.mxu0 0.0
    %337 = vmatpush.msra.mxu0 0.0
    %338 = vmatpush.msra.mxu0 0.0
    %339 = vmatpush.msra.mxu0 %v312
    %340 = vmatpush.msra.mxu0 %v310
    %341 = vmatpush.msra.mxu0 %v308
    %342 = vmatpush.msra.mxu0 %v306
    %343 = vmatmul.f32.gmra.mxu0 %v322
    %v344 = vpop.f32.mrf.mxu0
    %v345 = vadd.f32 %v316, %v344
    %346 = vmatmul.f32.gmra.mxu0 %v325
    %v347 = vpop.f32.mrf.mxu0
    %v348 = vadd.f32 %v316, %v347
    %349 = vdwg.mxu0
    %350 = vmatpush.msra.mxu0 0.0
    %351 = vmatpush.msra.mxu0 0.0
    %352 = vmatpush.msra.mxu0 0.0
    %353 = vmatpush.msra.mxu0 0.0
    %354 = vmatpush.msra.mxu0 0.0
    %355 = vmatpush.msra.mxu0 0.0
    %356 = vmatpush.msra.mxu0 0.0
    %357 = vmatpush.msra.mxu0 0.0
    %358 = vmatpush.msra.mxu0 0.0
    %359 = vmatpush.msra.mxu0 0.0
    %360 = vmatpush.msra.mxu0 0.0
    %361 = vmatpush.msra.mxu0 0.0
    %362 = vmatpush.msra.mxu0 %v313
    %363 = vmatpush.msra.mxu0 %v311
    %364 = vmatpush.msra.mxu0 %v309
    %365 = vmatpush.msra.mxu0 %v307
    %366 = vmatmul.f32.gmra.mxu0 %v322
    %v367 = vpop.f32.mrf.mxu0
    %v368 = vadd.f32 %v317, %v367
    %369 = vmatmul.f32.gmra.mxu0 %v325
    %v370 = vpop.f32.mrf.mxu0
    %v371 = vadd.f32 %v317, %v370
    %372 = vdwg.mxu0
    %373 = vst [vmem:[#allocation2] sm:$0xff] %v345
    %374 = vst [vmem:[#allocation2 + $0x8] sm:$0xff] %v368
    %375 = vst [vmem:[#allocation2 + $0x10] sm:$0xff] %v348
    %376 = vst [vmem:[#allocation2 + $0x18] sm:$0xff] %v371
    %v377 = vld [vmem:[%s6] sm:$0xff]
    %v378 = vld [vmem:[%s6 + $0x8] sm:$0xff]
    %v379 = vld [vmem:[%s6 + $0x10] sm:$0xff]
    %v380 = vld [vmem:[%s6 + $0x18] sm:$0xff]
    %v381 = vld [vmem:[%s7] sm:$0xff]
    %v382 = vld [vmem:[%s7 + $0x8] sm:$0xff]
    %v383 = vld [vmem:[%s7 + $0x10] sm:$0xff]
    %v384 = vld [vmem:[%s7 + $0x18] sm:$0xff]
    %v385 = vld [vmem:[#allocation2] sm:$0x3]
    %v386 = vld [vmem:[#allocation2 + $0x18] sm:$0xc0]
    %v388 = vsel %vm320, %v302, 0
    %390 = vmatpush.msra.mxu0 0.0
    %391 = vmatpush.msra.mxu0 0.0
    %392 = vmatpush.msra.mxu0 0.0
    %393 = vmatpush.msra.mxu0 0.0
    %394 = vmatpush.msra.mxu0 0.0
    %395 = vmatpush.msra.mxu0 0.0
    %396 = vmatpush.msra.mxu0 0.0
    %397 = vmatpush.msra.mxu0 0.0
    %398 = vmatpush.msra.mxu0 0.0
    %399 = vmatpush.msra.mxu0 0.0
    %400 = vmatpush.msra.mxu0 0.0
    %401 = vmatpush.msra.mxu0 0.0
    %402 = vmatpush.msra.mxu0 %v380
    %403 = vmatpush.msra.mxu0 %v379
    %404 = vmatpush.msra.mxu0 %v378
    %405 = vmatpush.msra.mxu0 %v377
    %406 = vmatmul.f32.gmra.mxu0 %v388
    %v407 = vpop.f32.mrf.mxu0
    %v408 = vadd.f32 0.0, %v407
    %409 = vdwg.mxu0
    %v410 = vadd.f32 %v385, %v408
    %v411 = vxor.u32 %v410, 2147483648
    %v412 = vmul.f32 %v411, 1.442695
    %v413 = vpow.pop %v412
    %v414 = vadd.f32 %v413, 1.0
    %v415 = vrcp.pop %v414
    %v416 = vmul.f32 %v414, %v415
    %v417 = vsub.f32 1.0, %v416
    %v418 = vmul.f32 %v415, %v417
    %v419 = vadd.f32 %v415, %v418
    %vm420 = vweird.f32 %v414
    %vm421 = vweird.f32 %v415
    %vm422 = vmor %vm420, %vm421
    %v423 = vsel %vm422, %v415, %v419
    %v424 = vand.u32 2147483647, %v414
    %vm425 = vcmp.eq.f32.partialorder %v424, 8.507059e+37
    %v426 = vand.u32 %v414, 2147483648
    %v427 = vor.u32 1.1754944e-38, %v426
    %v428 = vsel %vm425, %v427, %v423
    %v429 = vmul.f32 1.0, %v428
    %v430 = vtanh.pop %v410
    %v431 = vmul.f32 %v429, 0.0
    %433 = vrot.lane.b32.xlu0 %v430, 64
    %v434 = vpop.permute.xlu0 %433
    %v436 = vmul.f32 %v429, %v434
    %438 = vrot.lane.b32.xlu0 %v436, 32
    %v439 = vpop.permute.xlu0 %438
    %v441 = vadd.f32 %v431, %v439
    %v442 = vtanh.pop %v441
    %444 = vrot.lane.b32.xlu0 %v442, 64
    %v445 = vpop.permute.xlu0 %444
    %v447 = vmul.f32 %v429, %v445
    %448 = vmatpush.msra.mxu0 0.0
    %449 = vmatpush.msra.mxu0 0.0
    %450 = vmatpush.msra.mxu0 0.0
    %451 = vmatpush.msra.mxu0 0.0
    %452 = vmatpush.msra.mxu0 0.0
    %453 = vmatpush.msra.mxu0 0.0
    %454 = vmatpush.msra.mxu0 0.0
    %455 = vmatpush.msra.mxu0 0.0
    %456 = vmatpush.msra.mxu0 0.0
    %457 = vmatpush.msra.mxu0 0.0
    %458 = vmatpush.msra.mxu0 0.0
    %459 = vmatpush.msra.mxu0 0.0
    %460 = vmatpush.msra.mxu0 %v384
    %461 = vmatpush.msra.mxu0 %v383
    %462 = vmatpush.msra.mxu0 %v382
    %463 = vmatpush.msra.mxu0 %v381
    %464 = vmatmul.f32.gmra.mxu0 %v388
    %v465 = vpop.f32.mrf.mxu0
    %v466 = vadd.f32 0.0, %v465
    %467 = vdwg.mxu0
    %v469 = vrot.slane %v466, 2
    %v471 = vadd.f32 %v386, %v469
    %v472 = vxor.u32 %v471, 2147483648
    %v473 = vmul.f32 %v472, 1.442695
    %v474 = vpow.pop %v473
    %v475 = vadd.f32 %v474, 1.0
    %v476 = vrcp.pop %v475
    %v477 = vmul.f32 %v475, %v476
    %v478 = vsub.f32 1.0, %v477
    %v479 = vmul.f32 %v476, %v478
    %v480 = vadd.f32 %v476, %v479
    %vm481 = vweird.f32 %v475
    %vm482 = vweird.f32 %v476
    %vm483 = vmor %vm481, %vm482
    %v484 = vsel %vm483, %v476, %v480
    %v485 = vand.u32 2147483647, %v475
    %vm486 = vcmp.eq.f32.partialorder %v485, 8.507059e+37
    %v487 = vand.u32 %v475, 2147483648
    %v488 = vor.u32 1.1754944e-38, %v487
    %v489 = vsel %vm486, %v488, %v484
    %v490 = vmul.f32 1.0, %v489
    %v491 = vtanh.pop %v471
    %v492 = vmul.f32 %v490, 0.0
    %494 = vrot.lane.b32.xlu0 %v491, 64
    %v495 = vpop.permute.xlu0 %494
    %v497 = vmul.f32 %v490, %v495
    %499 = vrot.lane.b32.xlu0 %v497, 32
    %v500 = vpop.permute.xlu0 %499
    %v502 = vadd.f32 %v492, %v500
    %v503 = vtanh.pop %v502
    %505 = vrot.lane.b32.xlu0 %v503, 64
    %v506 = vpop.permute.xlu0 %505
    %v508 = vmul.f32 %v490, %v506
    %vm509 = vcmp.gt.s32.totalorder %v54, 0
    %vm510 = vcmp.gt.s32.totalorder %v54, 7
    %v511 = vsel %vm509, 1, 0
    %512 = vset.pattern.permute.xlu0 0
    %513 = vperm.xlu0 %512, %v511
    %v514 = vpop.permute.xlu0 %513
    %vm515 = vcmp.eq.s32.totalorder %v514, 1
    %516 = vrot.lane.b32.xlu0 %v302, 96
    %v517 = vpop.permute.xlu0 %516
    %v519 = vsel %vm515, %v447, %v517
    %v520 = vsel %vm515, %v441, 0.0
    %v521 = vsel %vm510, 1, 0
    %522 = vset.pattern.permute.xlu0 0
    %523 = vperm.xlu0 %522, %v521
    %v524 = vpop.permute.xlu0 %523
    %vm525 = vcmp.eq.s32.totalorder %v524, 1
    %v527 = vrot.slane %v508, 6
    %528 = vrot.lane.b32.xlu0 %v527, 32
    %v529 = vpop.permute.xlu0 %528
    %v531 = vsel %vm525, %v529, %v302
    %v533 = vrot.slane %v502, 6
    %534 = vrot.lane.b32.xlu0 %v533, 96
    %v535 = vpop.permute.xlu0 %534
    %v537 = vsel %vm525, %v535, 0.0
    %v538 = vsel %vm515, %v447, 0.0
    %540 = vrot.lane.b32.xlu0 %v538, 32
    %v541 = vpop.permute.xlu0 %540
    %vm543 = vcmask 254976
    %544 = vst.msk [vmem:[#allocation4] sm:$0x3] %vm543, %v541
    %v545 = vsel %vm525, %v529, 0.0
    %546 = vst.msk [vmem:[#allocation5 + $0xe] sm:$0x3] %vm543, %v545
    %v547 = vld [vmem:[#allocation2] sm:$0xc]
    %v548 = vld [vmem:[#allocation2 + $0x18] sm:$0x30]
    %550 = vrot.lane.b32.xlu0 %v519, 32
    %v551 = vpop.permute.xlu0 %550
    %v552 = vsel %vm320, %v551, 0
    %554 = vmatpush.msra.mxu0 0.0
    %555 = vmatpush.msra.mxu0 0.0
    %556 = vmatpush.msra.mxu0 0.0
    %557 = vmatpush.msra.mxu0 0.0
    %558 = vmatpush.msra.mxu0 0.0
    %559 = vmatpush.msra.mxu0 0.0
    %560 = vmatpush.msra.mxu0 0.0
    %561 = vmatpush.msra.mxu0 0.0
    %562 = vmatpush.msra.mxu0 0.0
    %563 = vmatpush.msra.mxu0 0.0
    %564 = vmatpush.msra.mxu0 0.0
    %565 = vmatpush.msra.mxu0 0.0
    %566 = vmatpush.msra.mxu0 %v380
    %567 = vmatpush.msra.mxu0 %v379
    %568 = vmatpush.msra.mxu0 %v378
    %569 = vmatpush.msra.mxu0 %v377
    %570 = vmatmul.f32.gmra.mxu0 %v552
    %v571 = vpop.f32.mrf.mxu0
    %v572 = vadd.f32 0.0, %v571
    %573 = vdwg.mxu0
    %v575 = vrot.slane %v572, 6
    %v577 = vadd.f32 %v547, %v575
    %v578 = vxor.u32 %v577, 2147483648
    %v579 = vmul.f32 %v578, 1.442695
    %v580 = vpow.pop %v579
    %v581 = vadd.f32 %v580, 1.0
    %v582 = vrcp.pop %v581
    %v583 = vmul.f32 %v581, %v582
    %v584 = vsub.f32 1.0, %v583
    %v585 = vmul.f32 %v582, %v584
    %v586 = vadd.f32 %v582, %v585
    %vm587 = vweird.f32 %v581
    %vm588 = vweird.f32 %v582
    %vm589 = vmor %vm587, %vm588
    %v590 = vsel %vm589, %v582, %v586
    %v591 = vand.u32 2147483647, %v581
    %vm592 = vcmp.eq.f32.partialorder %v591, 8.507059e+37
    %v593 = vand.u32 %v581, 2147483648
    %v594 = vor.u32 1.1754944e-38, %v593
    %v595 = vsel %vm592, %v594, %v590
    %v596 = vmul.f32 1.0, %v595
    %v597 = vtanh.pop %v577
    %v599 = vrot.slane %v520, 6
    %v601 = vmul.f32 %v596, %v599
    %603 = vrot.lane.b32.xlu0 %v597, 64
    %v604 = vpop.permute.xlu0 %603
    %v606 = vmul.f32 %v596, %v604
    %608 = vrot.lane.b32.xlu0 %v606, 32
    %v609 = vpop.permute.xlu0 %608
    %v611 = vadd.f32 %v601, %v609
    %v612 = vtanh.pop %v611
    %614 = vrot.lane.b32.xlu0 %v612, 64
    %v615 = vpop.permute.xlu0 %614
    %v617 = vmul.f32 %v596, %v615
    %v619 = vsel %vm320, %v531, 0
    %621 = vmatpush.msra.mxu0 0.0
    %622 = vmatpush.msra.mxu0 0.0
    %623 = vmatpush.msra.mxu0 0.0
    %624 = vmatpush.msra.mxu0 0.0
    %625 = vmatpush.msra.mxu0 0.0
    %626 = vmatpush.msra.mxu0 0.0
    %627 = vmatpush.msra.mxu0 0.0
    %628 = vmatpush.msra.mxu0 0.0
    %629 = vmatpush.msra.mxu0 0.0
    %630 = vmatpush.msra.mxu0 0.0
    %631 = vmatpush.msra.mxu0 0.0
    %632 = vmatpush.msra.mxu0 0.0
    %633 = vmatpush.msra.mxu0 %v384
    %634 = vmatpush.msra.mxu0 %v383
    %635 = vmatpush.msra.mxu0 %v382
    %636 = vmatpush.msra.mxu0 %v381
    %637 = vmatmul.f32.gmra.mxu0 %v619
    %v638 = vpop.f32.mrf.mxu0
    %v639 = vadd.f32 0.0, %v638
    %640 = vdwg.mxu0
    %v642 = vrot.slane %v639, 4
    %v644 = vadd.f32 %v548, %v642
    %v645 = vxor.u32 %v644, 2147483648
    %v646 = vmul.f32 %v645, 1.442695
    %v647 = vpow.pop %v646
    %v648 = vadd.f32 %v647, 1.0
    %v649 = vrcp.pop %v648
    %v650 = vmul.f32 %v648, %v649
    %v651 = vsub.f32 1.0, %v650
    %v652 = vmul.f32 %v649, %v651
    %v653 = vadd.f32 %v649, %v652
    %vm654 = vweird.f32 %v648
    %vm655 = vweird.f32 %v649
    %vm656 = vmor %vm654, %vm655
    %v657 = vsel %vm656, %v649, %v653
    %v658 = vand.u32 2147483647, %v648
    %vm659 = vcmp.eq.f32.partialorder %v658, 8.507059e+37
    %v660 = vand.u32 %v648, 2147483648
    %v661 = vor.u32 1.1754944e-38, %v660
    %v662 = vsel %vm659, %v661, %v657
    %v663 = vmul.f32 1.0, %v662
    %v664 = vtanh.pop %v644
    %v666 = vrot.slane %v537, 4
    %667 = vrot.lane.b32.xlu0 %v666, 32
    %v668 = vpop.permute.xlu0 %667
    %v670 = vmul.f32 %v663, %v668
    %672 = vrot.lane.b32.xlu0 %v664, 64
    %v673 = vpop.permute.xlu0 %672
    %v675 = vmul.f32 %v663, %v673
    %677 = vrot.lane.b32.xlu0 %v675, 32
    %v678 = vpop.permute.xlu0 %677
    %v680 = vadd.f32 %v670, %v678
    %v681 = vtanh.pop %v680
    %683 = vrot.lane.b32.xlu0 %v681, 64
    %v684 = vpop.permute.xlu0 %683
    %v686 = vmul.f32 %v663, %v684
    %vm687 = vcmp.gt.s32.totalorder %v54, 1
    %vm688 = vcmp.gt.s32.totalorder %v54, 6
    %v689 = vsel %vm687, 1, 0
    %690 = vset.pattern.permute.xlu0 0
    %691 = vperm.xlu0 %690, %v689
    %v692 = vpop.permute.xlu0 %691
    %vm693 = vcmp.eq.s32.totalorder %v692, 1
    %v695 = vrot.slane %v617, 2
    %696 = vrot.lane.b32.xlu0 %v695, 32
    %v697 = vpop.permute.xlu0 %696
    %v700 = vsel %vm693, %v697, %v551
    %v702 = vrot.slane %v611, 2
    %703 = vrot.lane.b32.xlu0 %v702, 96
    %v704 = vpop.permute.xlu0 %703
    %706 = vrot.lane.b32.xlu0 %v520, 96
    %v707 = vpop.permute.xlu0 %706
    %v709 = vsel %vm693, %v704, %v707
    %v710 = vsel %vm688, 1, 0
    %711 = vset.pattern.permute.xlu0 0
    %712 = vperm.xlu0 %711, %v710
    %v713 = vpop.permute.xlu0 %712
    %vm714 = vcmp.eq.s32.totalorder %v713, 1
    %v716 = vrot.slane %v686, 4
    %717 = vrot.lane.b32.xlu0 %v716, 32
    %v718 = vpop.permute.xlu0 %717
    %v720 = vsel %vm714, %v718, %v531
    %v722 = vrot.slane %v680, 4
    %723 = vrot.lane.b32.xlu0 %v722, 96
    %v724 = vpop.permute.xlu0 %723
    %v726 = vsel %vm714, %v724, %v537
    %v727 = vsel %vm693, %v697, 0.0
    %728 = vst.msk [vmem:[#allocation4 + $0x2] sm:$0x3] %vm543, %v727
    %v729 = vsel %vm714, %v718, 0.0
    %730 = vst.msk [vmem:[#allocation5 + $0xc] sm:$0x3] %vm543, %v729
    %v731 = vld [vmem:[#allocation2] sm:$0x30]
    %v732 = vld [vmem:[#allocation2 + $0x18] sm:$0xc]
    %v734 = vsel %vm320, %v700, 0
    %736 = vmatpush.msra.mxu0 0.0
    %737 = vmatpush.msra.mxu0 0.0
    %738 = vmatpush.msra.mxu0 0.0
    %739 = vmatpush.msra.mxu0 0.0
    %740 = vmatpush.msra.mxu0 0.0
    %741 = vmatpush.msra.mxu0 0.0
    %742 = vmatpush.msra.mxu0 0.0
    %743 = vmatpush.msra.mxu0 0.0
    %744 = vmatpush.msra.mxu0 0.0
    %745 = vmatpush.msra.mxu0 0.0
    %746 = vmatpush.msra.mxu0 0.0
    %747 = vmatpush.msra.mxu0 0.0
    %748 = vmatpush.msra.mxu0 %v380
    %749 = vmatpush.msra.mxu0 %v379
    %750 = vmatpush.msra.mxu0 %v378
    %751 = vmatpush.msra.mxu0 %v377
    %752 = vmatmul.f32.gmra.mxu0 %v734
    %v753 = vpop.f32.mrf.mxu0
    %v754 = vadd.f32 0.0, %v753
    %755 = vdwg.mxu0
    %v757 = vrot.slane %v754, 4
    %v759 = vadd.f32 %v731, %v757
    %v760 = vxor.u32 %v759, 2147483648
    %v761 = vmul.f32 %v760, 1.442695
    %v762 = vpow.pop %v761
    %v763 = vadd.f32 %v762, 1.0
    %v764 = vrcp.pop %v763
    %v765 = vmul.f32 %v763, %v764
    %v766 = vsub.f32 1.0, %v765
    %v767 = vmul.f32 %v764, %v766
    %v768 = vadd.f32 %v764, %v767
    %vm769 = vweird.f32 %v763
    %vm770 = vweird.f32 %v764
    %vm771 = vmor %vm769, %vm770
    %v772 = vsel %vm771, %v764, %v768
    %v773 = vand.u32 2147483647, %v763
    %vm774 = vcmp.eq.f32.partialorder %v773, 8.507059e+37
    %v775 = vand.u32 %v763, 2147483648
    %v776 = vor.u32 1.1754944e-38, %v775
    %v777 = vsel %vm774, %v776, %v772
    %v778 = vmul.f32 1.0, %v777
    %v779 = vtanh.pop %v759
    %v781 = vrot.slane %v709, 4
    %782 = vrot.lane.b32.xlu0 %v781, 32
    %v783 = vpop.permute.xlu0 %782
    %v785 = vmul.f32 %v778, %v783
    %787 = vrot.lane.b32.xlu0 %v779, 64
    %v788 = vpop.permute.xlu0 %787
    %v790 = vmul.f32 %v778, %v788
    %792 = vrot.lane.b32.xlu0 %v790, 32
    %v793 = vpop.permute.xlu0 %792
    %v795 = vadd.f32 %v785, %v793
    %v796 = vtanh.pop %v795
    %798 = vrot.lane.b32.xlu0 %v796, 64
    %v799 = vpop.permute.xlu0 %798
    %v801 = vmul.f32 %v778, %v799
    %v803 = vsel %vm320, %v720, 0
    %805 = vmatpush.msra.mxu0 0.0
    %806 = vmatpush.msra.mxu0 0.0
    %807 = vmatpush.msra.mxu0 0.0
    %808 = vmatpush.msra.mxu0 0.0
    %809 = vmatpush.msra.mxu0 0.0
    %810 = vmatpush.msra.mxu0 0.0
    %811 = vmatpush.msra.mxu0 0.0
    %812 = vmatpush.msra.mxu0 0.0
    %813 = vmatpush.msra.mxu0 0.0
    %814 = vmatpush.msra.mxu0 0.0
    %815 = vmatpush.msra.mxu0 0.0
    %816 = vmatpush.msra.mxu0 0.0
    %817 = vmatpush.msra.mxu0 %v384
    %818 = vmatpush.msra.mxu0 %v383
    %819 = vmatpush.msra.mxu0 %v382
    %820 = vmatpush.msra.mxu0 %v381
    %821 = vmatmul.f32.gmra.mxu0 %v803
    %v822 = vpop.f32.mrf.mxu0
    %v823 = vadd.f32 0.0, %v822
    %824 = vdwg.mxu0
    %v826 = vrot.slane %v823, 6
    %v828 = vadd.f32 %v732, %v826
    %v829 = vxor.u32 %v828, 2147483648
    %v830 = vmul.f32 %v829, 1.442695
    %v831 = vpow.pop %v830
    %v832 = vadd.f32 %v831, 1.0
    %v833 = vrcp.pop %v832
    %v834 = vmul.f32 %v832, %v833
    %v835 = vsub.f32 1.0, %v834
    %v836 = vmul.f32 %v833, %v835
    %v837 = vadd.f32 %v833, %v836
    %vm838 = vweird.f32 %v832
    %vm839 = vweird.f32 %v833
    %vm840 = vmor %vm838, %vm839
    %v841 = vsel %vm840, %v833, %v837
    %v842 = vand.u32 2147483647, %v832
    %vm843 = vcmp.eq.f32.partialorder %v842, 8.507059e+37
    %v844 = vand.u32 %v832, 2147483648
    %v845 = vor.u32 1.1754944e-38, %v844
    %v846 = vsel %vm843, %v845, %v841
    %v847 = vmul.f32 1.0, %v846
    %v848 = vtanh.pop %v828
    %v850 = vrot.slane %v726, 6
    %851 = vrot.lane.b32.xlu0 %v850, 32
    %v852 = vpop.permute.xlu0 %851
    %v854 = vmul.f32 %v847, %v852
    %856 = vrot.lane.b32.xlu0 %v848, 64
    %v857 = vpop.permute.xlu0 %856
    %v859 = vmul.f32 %v847, %v857
    %861 = vrot.lane.b32.xlu0 %v859, 32
    %v862 = vpop.permute.xlu0 %861
    %v864 = vadd.f32 %v854, %v862
    %v865 = vtanh.pop %v864
    %867 = vrot.lane.b32.xlu0 %v865, 64
    %v868 = vpop.permute.xlu0 %867
    %v870 = vmul.f32 %v847, %v868
    %vm871 = vcmp.gt.s32.totalorder %v54, 2
    %vm872 = vcmp.gt.s32.totalorder %v54, 5
    %v873 = vsel %vm871, 1, 0
    %874 = vset.pattern.permute.xlu0 0
    %875 = vperm.xlu0 %874, %v873
    %v876 = vpop.permute.xlu0 %875
    %vm877 = vcmp.eq.s32.totalorder %v876, 1
    %v879 = vrot.slane %v801, 4
    %880 = vrot.lane.b32.xlu0 %v879, 32
    %v881 = vpop.permute.xlu0 %880
    %v883 = vsel %vm877, %v881, %v700
    %v885 = vrot.slane %v795, 4
    %886 = vrot.lane.b32.xlu0 %v885, 96
    %v887 = vpop.permute.xlu0 %886
    %v889 = vsel %vm877, %v887, %v709
    %v890 = vsel %vm872, 1, 0
    %891 = vset.pattern.permute.xlu0 0
    %892 = vperm.xlu0 %891, %v890
    %v893 = vpop.permute.xlu0 %892
    %vm894 = vcmp.eq.s32.totalorder %v893, 1
    %v896 = vrot.slane %v870, 2
    %897 = vrot.lane.b32.xlu0 %v896, 32
    %v898 = vpop.permute.xlu0 %897
    %v900 = vsel %vm894, %v898, %v720
    %v902 = vrot.slane %v864, 2
    %903 = vrot.lane.b32.xlu0 %v902, 96
    %v904 = vpop.permute.xlu0 %903
    %v906 = vsel %vm894, %v904, %v726
    %v907 = vsel %vm877, %v881, 0.0
    %908 = vst.msk [vmem:[#allocation4 + $0x4] sm:$0x3] %vm543, %v907
    %v909 = vsel %vm894, %v898, 0.0
    %910 = vst.msk [vmem:[#allocation5 + $0xa] sm:$0x3] %vm543, %v909
    %v911 = vld [vmem:[#allocation2] sm:$0xc0]
    %v912 = vld [vmem:[#allocation2 + $0x18] sm:$0x3]
    %v914 = vsel %vm320, %v883, 0
    %916 = vmatpush.msra.mxu0 0.0
    %917 = vmatpush.msra.mxu0 0.0
    %918 = vmatpush.msra.mxu0 0.0
    %919 = vmatpush.msra.mxu0 0.0
    %920 = vmatpush.msra.mxu0 0.0
    %921 = vmatpush.msra.mxu0 0.0
    %922 = vmatpush.msra.mxu0 0.0
    %923 = vmatpush.msra.mxu0 0.0
    %924 = vmatpush.msra.mxu0 0.0
    %925 = vmatpush.msra.mxu0 0.0
    %926 = vmatpush.msra.mxu0 0.0
    %927 = vmatpush.msra.mxu0 0.0
    %928 = vmatpush.msra.mxu0 %v380
    %929 = vmatpush.msra.mxu0 %v379
    %930 = vmatpush.msra.mxu0 %v378
    %931 = vmatpush.msra.mxu0 %v377
    %932 = vmatmul.f32.gmra.mxu0 %v914
    %v933 = vpop.f32.mrf.mxu0
    %v934 = vadd.f32 0.0, %v933
    %935 = vdwg.mxu0
    %v937 = vrot.slane %v934, 2
    %v939 = vadd.f32 %v911, %v937
    %v940 = vxor.u32 %v939, 2147483648
    %v941 = vmul.f32 %v940, 1.442695
    %v942 = vpow.pop %v941
    %v943 = vadd.f32 %v942, 1.0
    %v944 = vrcp.pop %v943
    %v945 = vmul.f32 %v943, %v944
    %v946 = vsub.f32 1.0, %v945
    %v947 = vmul.f32 %v944, %v946
    %v948 = vadd.f32 %v944, %v947
    %vm949 = vweird.f32 %v943
    %vm950 = vweird.f32 %v944
    %vm951 = vmor %vm949, %vm950
    %v952 = vsel %vm951, %v944, %v948
    %v953 = vand.u32 2147483647, %v943
    %vm954 = vcmp.eq.f32.partialorder %v953, 8.507059e+37
    %v955 = vand.u32 %v943, 2147483648
    %v956 = vor.u32 1.1754944e-38, %v955
    %v957 = vsel %vm954, %v956, %v952
    %v958 = vmul.f32 1.0, %v957
    %v959 = vtanh.pop %v939
    %v961 = vrot.slane %v889, 2
    %962 = vrot.lane.b32.xlu0 %v961, 32
    %v963 = vpop.permute.xlu0 %962
    %v965 = vmul.f32 %v958, %v963
    %967 = vrot.lane.b32.xlu0 %v959, 64
    %v968 = vpop.permute.xlu0 %967
    %v970 = vmul.f32 %v958, %v968
    %972 = vrot.lane.b32.xlu0 %v970, 32
    %v973 = vpop.permute.xlu0 %972
    %v975 = vadd.f32 %v965, %v973
    %v976 = vtanh.pop %v975
    %978 = vrot.lane.b32.xlu0 %v976, 64
    %v979 = vpop.permute.xlu0 %978
    %v981 = vmul.f32 %v958, %v979
    %v983 = vsel %vm320, %v900, 0
    %985 = vmatpush.msra.mxu0 0.0
    %986 = vmatpush.msra.mxu0 0.0
    %987 = vmatpush.msra.mxu0 0.0
    %988 = vmatpush.msra.mxu0 0.0
    %989 = vmatpush.msra.mxu0 0.0
    %990 = vmatpush.msra.mxu0 0.0
    %991 = vmatpush.msra.mxu0 0.0
    %992 = vmatpush.msra.mxu0 0.0
    %993 = vmatpush.msra.mxu0 0.0
    %994 = vmatpush.msra.mxu0 0.0
    %995 = vmatpush.msra.mxu0 0.0
    %996 = vmatpush.msra.mxu0 0.0
    %997 = vmatpush.msra.mxu0 %v384
    %998 = vmatpush.msra.mxu0 %v383
    %999 = vmatpush.msra.mxu0 %v382
    %1000 = vmatpush.msra.mxu0 %v381
    %1001 = vmatmul.f32.gmra.mxu0 %v983
    %v1002 = vpop.f32.mrf.mxu0
    %v1003 = vadd.f32 0.0, %v1002
    %1004 = vdwg.mxu0
    %v1005 = vadd.f32 %v912, %v1003
    %v1006 = vxor.u32 %v1005, 2147483648
    %v1007 = vmul.f32 %v1006, 1.442695
    %v1008 = vpow.pop %v1007
    %v1009 = vadd.f32 %v1008, 1.0
    %v1010 = vrcp.pop %v1009
    %v1011 = vmul.f32 %v1009, %v1010
    %v1012 = vsub.f32 1.0, %v1011
    %v1013 = vmul.f32 %v1010, %v1012
    %v1014 = vadd.f32 %v1010, %v1013
    %vm1015 = vweird.f32 %v1009
    %vm1016 = vweird.f32 %v1010
    %vm1017 = vmor %vm1015, %vm1016
    %v1018 = vsel %vm1017, %v1010, %v1014
    %v1019 = vand.u32 2147483647, %v1009
    %vm1020 = vcmp.eq.f32.partialorder %v1019, 8.507059e+37
    %v1021 = vand.u32 %v1009, 2147483648
    %v1022 = vor.u32 1.1754944e-38, %v1021
    %v1023 = vsel %vm1020, %v1022, %v1018
    %v1024 = vmul.f32 1.0, %v1023
    %v1025 = vtanh.pop %v1005
    %1027 = vrot.lane.b32.xlu0 %v906, 32
    %v1028 = vpop.permute.xlu0 %1027
    %v1030 = vmul.f32 %v1024, %v1028
    %1032 = vrot.lane.b32.xlu0 %v1025, 64
    %v1033 = vpop.permute.xlu0 %1032
    %v1035 = vmul.f32 %v1024, %v1033
    %1037 = vrot.lane.b32.xlu0 %v1035, 32
    %v1038 = vpop.permute.xlu0 %1037
    %v1040 = vadd.f32 %v1030, %v1038
    %v1041 = vtanh.pop %v1040
    %1043 = vrot.lane.b32.xlu0 %v1041, 64
    %v1044 = vpop.permute.xlu0 %1043
    %v1046 = vmul.f32 %v1024, %v1044
    %vm1047 = vcmp.gt.s32.totalorder %v54, 3
    %vm1048 = vcmp.gt.s32.totalorder %v54, 4
    %v1049 = vsel %vm1047, 1, 0
    %1050 = vset.pattern.permute.xlu0 0
    %1051 = vperm.xlu0 %1050, %v1049
    %v1052 = vpop.permute.xlu0 %1051
    %vm1053 = vcmp.eq.s32.totalorder %v1052, 1
    %v1055 = vrot.slane %v981, 6
    %1056 = vrot.lane.b32.xlu0 %v1055, 32
    %v1057 = vpop.permute.xlu0 %1056
    %v1059 = vsel %vm1053, %v1057, %v883
    %v1061 = vrot.slane %v975, 6
    %1062 = vrot.lane.b32.xlu0 %v1061, 96
    %v1063 = vpop.permute.xlu0 %1062
    %v1065 = vsel %vm1053, %v1063, %v889
    %v1066 = vsel %vm1048, 1, 0
    %1067 = vset.pattern.permute.xlu0 0
    %1068 = vperm.xlu0 %1067, %v1066
    %v1069 = vpop.permute.xlu0 %1068
    %vm1070 = vcmp.eq.s32.totalorder %v1069, 1
    %1071 = vrot.lane.b32.xlu0 %v900, 96
    %v1072 = vpop.permute.xlu0 %1071
    %v1074 = vsel %vm1070, %v1046, %v1072
    %v1075 = vsel %vm1070, %v1040, %v1028
    %v1076 = vsel %vm1053, %v1057, 0.0
    %1077 = vst.msk [vmem:[#allocation4 + $0x6] sm:$0x3] %vm543, %v1076
    %v1078 = vsel %vm1070, %v1046, 0.0
    %1080 = vrot.lane.b32.xlu0 %v1078, 32
    %v1081 = vpop.permute.xlu0 %1080
    %1083 = vst.msk [vmem:[#allocation5 + $0x8] sm:$0x3] %vm543, %v1081
    %v1084 = vld [vmem:[#allocation2 + $0x10] sm:$0x3]
    %v1085 = vld [vmem:[#allocation2 + $0x8] sm:$0xc0]
    %v1087 = vsel %vm320, %v1059, 0
    %1089 = vmatpush.msra.mxu0 0.0
    %1090 = vmatpush.msra.mxu0 0.0
    %1091 = vmatpush.msra.mxu0 0.0
    %1092 = vmatpush.msra.mxu0 0.0
    %1093 = vmatpush.msra.mxu0 0.0
    %1094 = vmatpush.msra.mxu0 0.0
    %1095 = vmatpush.msra.mxu0 0.0
    %1096 = vmatpush.msra.mxu0 0.0
    %1097 = vmatpush.msra.mxu0 0.0
    %1098 = vmatpush.msra.mxu0 0.0
    %1099 = vmatpush.msra.mxu0 0.0
    %1100 = vmatpush.msra.mxu0 0.0
    %1101 = vmatpush.msra.mxu0 %v380
    %1102 = vmatpush.msra.mxu0 %v379
    %1103 = vmatpush.msra.mxu0 %v378
    %1104 = vmatpush.msra.mxu0 %v377
    %1105 = vmatmul.f32.gmra.mxu0 %v1087
    %v1106 = vpop.f32.mrf.mxu0
    %v1107 = vadd.f32 0.0, %v1106
    %1108 = vdwg.mxu0
    %v1109 = vadd.f32 %v1084, %v1107
    %v1110 = vxor.u32 %v1109, 2147483648
    %v1111 = vmul.f32 %v1110, 1.442695
    %v1112 = vpow.pop %v1111
    %v1113 = vadd.f32 %v1112, 1.0
    %v1114 = vrcp.pop %v1113
    %v1115 = vmul.f32 %v1113, %v1114
    %v1116 = vsub.f32 1.0, %v1115
    %v1117 = vmul.f32 %v1114, %v1116
    %v1118 = vadd.f32 %v1114, %v1117
    %vm1119 = vweird.f32 %v1113
    %vm1120 = vweird.f32 %v1114
    %vm1121 = vmor %vm1119, %vm1120
    %v1122 = vsel %vm1121, %v1114, %v1118
    %v1123 = vand.u32 2147483647, %v1113
    %vm1124 = vcmp.eq.f32.partialorder %v1123, 8.507059e+37
    %v1125 = vand.u32 %v1113, 2147483648
    %v1126 = vor.u32 1.1754944e-38, %v1125
    %v1127 = vsel %vm1124, %v1126, %v1122
    %v1128 = vmul.f32 1.0, %v1127
    %v1129 = vtanh.pop %v1109
    %1131 = vrot.lane.b32.xlu0 %v1065, 32
    %v1132 = vpop.permute.xlu0 %1131
    %v1134 = vmul.f32 %v1128, %v1132
    %1136 = vrot.lane.b32.xlu0 %v1129, 64
    %v1137 = vpop.permute.xlu0 %1136
    %v1139 = vmul.f32 %v1128, %v1137
    %1141 = vrot.lane.b32.xlu0 %v1139, 32
    %v1142 = vpop.permute.xlu0 %1141
    %v1144 = vadd.f32 %v1134, %v1142
    %v1145 = vtanh.pop %v1144
    %1147 = vrot.lane.b32.xlu0 %v1145, 64
    %v1148 = vpop.permute.xlu0 %1147
    %v1150 = vmul.f32 %v1128, %v1148
    %1152 = vrot.lane.b32.xlu0 %v1074, 32
    %v1153 = vpop.permute.xlu0 %1152
    %v1154 = vsel %vm320, %v1153, 0
    %1156 = vmatpush.msra.mxu0 0.0
    %1157 = vmatpush.msra.mxu0 0.0
    %1158 = vmatpush.msra.mxu0 0.0
    %1159 = vmatpush.msra.mxu0 0.0
    %1160 = vmatpush.msra.mxu0 0.0
    %1161 = vmatpush.msra.mxu0 0.0
    %1162 = vmatpush.msra.mxu0 0.0
    %1163 = vmatpush.msra.mxu0 0.0
    %1164 = vmatpush.msra.mxu0 0.0
    %1165 = vmatpush.msra.mxu0 0.0
    %1166 = vmatpush.msra.mxu0 0.0
    %1167 = vmatpush.msra.mxu0 0.0
    %1168 = vmatpush.msra.mxu0 %v384
    %1169 = vmatpush.msra.mxu0 %v383
    %1170 = vmatpush.msra.mxu0 %v382
    %1171 = vmatpush.msra.mxu0 %v381
    %1172 = vmatmul.f32.gmra.mxu0 %v1154
    %v1173 = vpop.f32.mrf.mxu0
    %v1174 = vadd.f32 0.0, %v1173
    %1175 = vdwg.mxu0
    %v1177 = vrot.slane %v1174, 2
    %v1179 = vadd.f32 %v1085, %v1177
    %v1180 = vxor.u32 %v1179, 2147483648
    %v1181 = vmul.f32 %v1180, 1.442695
    %v1182 = vpow.pop %v1181
    %v1183 = vadd.f32 %v1182, 1.0
    %v1184 = vrcp.pop %v1183
    %v1185 = vmul.f32 %v1183, %v1184
    %v1186 = vsub.f32 1.0, %v1185
    %v1187 = vmul.f32 %v1184, %v1186
    %v1188 = vadd.f32 %v1184, %v1187
    %vm1189 = vweird.f32 %v1183
    %vm1190 = vweird.f32 %v1184
    %vm1191 = vmor %vm1189, %vm1190
    %v1192 = vsel %vm1191, %v1184, %v1188
    %v1193 = vand.u32 2147483647, %v1183
    %vm1194 = vcmp.eq.f32.partialorder %v1193, 8.507059e+37
    %v1195 = vand.u32 %v1183, 2147483648
    %v1196 = vor.u32 1.1754944e-38, %v1195
    %v1197 = vsel %vm1194, %v1196, %v1192
    %v1198 = vmul.f32 1.0, %v1197
    %v1199 = vtanh.pop %v1179
    %v1201 = vrot.slane %v1075, 2
    %v1203 = vmul.f32 %v1198, %v1201
    %1205 = vrot.lane.b32.xlu0 %v1199, 64
    %v1206 = vpop.permute.xlu0 %1205
    %v1208 = vmul.f32 %v1198, %v1206
    %1210 = vrot.lane.b32.xlu0 %v1208, 32
    %v1211 = vpop.permute.xlu0 %1210
    %v1213 = vadd.f32 %v1203, %v1211
    %v1214 = vtanh.pop %v1213
    %1216 = vrot.lane.b32.xlu0 %v1214, 64
    %v1217 = vpop.permute.xlu0 %1216
    %v1219 = vmul.f32 %v1198, %v1217
    %1220 = vrot.lane.b32.xlu0 %v1059, 96
    %v1221 = vpop.permute.xlu0 %1220
    %v1223 = vsel %vm1070, %v1150, %v1221
    %v1224 = vsel %vm1070, %v1144, %v1132
    %v1226 = vrot.slane %v1219, 6
    %1227 = vrot.lane.b32.xlu0 %v1226, 32
    %v1228 = vpop.permute.xlu0 %1227
    %v1231 = vsel %vm1053, %v1228, %v1153
    %v1233 = vrot.slane %v1213, 6
    %1234 = vrot.lane.b32.xlu0 %v1233, 96
    %v1235 = vpop.permute.xlu0 %1234
    %1237 = vrot.lane.b32.xlu0 %v1075, 96
    %v1238 = vpop.permute.xlu0 %1237
    %v1240 = vsel %vm1053, %v1235, %v1238
    %v1241 = vsel %vm1070, %v1150, 0.0
    %1243 = vrot.lane.b32.xlu0 %v1241, 32
    %v1244 = vpop.permute.xlu0 %1243
    %1246 = vst.msk [vmem:[#allocation4 + $0x8] sm:$0x3] %vm543, %v1244
    %v1247 = vsel %vm1053, %v1228, 0.0
    %1248 = vst.msk [vmem:[#allocation5 + $0x6] sm:$0x3] %vm543, %v1247
    %v1249 = vld [vmem:[#allocation2 + $0x10] sm:$0xc]
    %v1250 = vld [vmem:[#allocation2 + $0x8] sm:$0x30]
    %1252 = vrot.lane.b32.xlu0 %v1223, 32
    %v1253 = vpop.permute.xlu0 %1252
    %v1254 = vsel %vm320, %v1253, 0
    %1256 = vmatpush.msra.mxu0 0.0
    %1257 = vmatpush.msra.mxu0 0.0
    %1258 = vmatpush.msra.mxu0 0.0
    %1259 = vmatpush.msra.mxu0 0.0
    %1260 = vmatpush.msra.mxu0 0.0
    %1261 = vmatpush.msra.mxu0 0.0
    %1262 = vmatpush.msra.mxu0 0.0
    %1263 = vmatpush.msra.mxu0 0.0
    %1264 = vmatpush.msra.mxu0 0.0
    %1265 = vmatpush.msra.mxu0 0.0
    %1266 = vmatpush.msra.mxu0 0.0
    %1267 = vmatpush.msra.mxu0 0.0
    %1268 = vmatpush.msra.mxu0 %v380
    %1269 = vmatpush.msra.mxu0 %v379
    %1270 = vmatpush.msra.mxu0 %v378
    %1271 = vmatpush.msra.mxu0 %v377
    %1272 = vmatmul.f32.gmra.mxu0 %v1254
    %v1273 = vpop.f32.mrf.mxu0
    %v1274 = vadd.f32 0.0, %v1273
    %1275 = vdwg.mxu0
    %v1277 = vrot.slane %v1274, 6
    %v1279 = vadd.f32 %v1249, %v1277
    %v1280 = vxor.u32 %v1279, 2147483648
    %v1281 = vmul.f32 %v1280, 1.442695
    %v1282 = vpow.pop %v1281
    %v1283 = vadd.f32 %v1282, 1.0
    %v1284 = vrcp.pop %v1283
    %v1285 = vmul.f32 %v1283, %v1284
    %v1286 = vsub.f32 1.0, %v1285
    %v1287 = vmul.f32 %v1284, %v1286
    %v1288 = vadd.f32 %v1284, %v1287
    %vm1289 = vweird.f32 %v1283
    %vm1290 = vweird.f32 %v1284
    %vm1291 = vmor %vm1289, %vm1290
    %v1292 = vsel %vm1291, %v1284, %v1288
    %v1293 = vand.u32 2147483647, %v1283
    %vm1294 = vcmp.eq.f32.partialorder %v1293, 8.507059e+37
    %v1295 = vand.u32 %v1283, 2147483648
    %v1296 = vor.u32 1.1754944e-38, %v1295
    %v1297 = vsel %vm1294, %v1296, %v1292
    %v1298 = vmul.f32 1.0, %v1297
    %v1299 = vtanh.pop %v1279
    %v1301 = vrot.slane %v1224, 6
    %v1303 = vmul.f32 %v1298, %v1301
    %1305 = vrot.lane.b32.xlu0 %v1299, 64
    %v1306 = vpop.permute.xlu0 %1305
    %v1308 = vmul.f32 %v1298, %v1306
    %1310 = vrot.lane.b32.xlu0 %v1308, 32
    %v1311 = vpop.permute.xlu0 %1310
    %v1313 = vadd.f32 %v1303, %v1311
    %v1314 = vtanh.pop %v1313
    %1316 = vrot.lane.b32.xlu0 %v1314, 64
    %v1317 = vpop.permute.xlu0 %1316
    %v1319 = vmul.f32 %v1298, %v1317
    %v1321 = vsel %vm320, %v1231, 0
    %1323 = vmatpush.msra.mxu0 0.0
    %1324 = vmatpush.msra.mxu0 0.0
    %1325 = vmatpush.msra.mxu0 0.0
    %1326 = vmatpush.msra.mxu0 0.0
    %1327 = vmatpush.msra.mxu0 0.0
    %1328 = vmatpush.msra.mxu0 0.0
    %1329 = vmatpush.msra.mxu0 0.0
    %1330 = vmatpush.msra.mxu0 0.0
    %1331 = vmatpush.msra.mxu0 0.0
    %1332 = vmatpush.msra.mxu0 0.0
    %1333 = vmatpush.msra.mxu0 0.0
    %1334 = vmatpush.msra.mxu0 0.0
    %1335 = vmatpush.msra.mxu0 %v384
    %1336 = vmatpush.msra.mxu0 %v383
    %1337 = vmatpush.msra.mxu0 %v382
    %1338 = vmatpush.msra.mxu0 %v381
    %1339 = vmatmul.f32.gmra.mxu0 %v1321
    %v1340 = vpop.f32.mrf.mxu0
    %v1341 = vadd.f32 0.0, %v1340
    %1342 = vdwg.mxu0
    %v1344 = vrot.slane %v1341, 4
    %v1346 = vadd.f32 %v1250, %v1344
    %v1347 = vxor.u32 %v1346, 2147483648
    %v1348 = vmul.f32 %v1347, 1.442695
    %v1349 = vpow.pop %v1348
    %v1350 = vadd.f32 %v1349, 1.0
    %v1351 = vrcp.pop %v1350
    %v1352 = vmul.f32 %v1350, %v1351
    %v1353 = vsub.f32 1.0, %v1352
    %v1354 = vmul.f32 %v1351, %v1353
    %v1355 = vadd.f32 %v1351, %v1354
    %vm1356 = vweird.f32 %v1350
    %vm1357 = vweird.f32 %v1351
    %vm1358 = vmor %vm1356, %vm1357
    %v1359 = vsel %vm1358, %v1351, %v1355
    %v1360 = vand.u32 2147483647, %v1350
    %vm1361 = vcmp.eq.f32.partialorder %v1360, 8.507059e+37
    %v1362 = vand.u32 %v1350, 2147483648
    %v1363 = vor.u32 1.1754944e-38, %v1362
    %v1364 = vsel %vm1361, %v1363, %v1359
    %v1365 = vmul.f32 1.0, %v1364
    %v1366 = vtanh.pop %v1346
    %v1368 = vrot.slane %v1240, 4
    %1369 = vrot.lane.b32.xlu0 %v1368, 32
    %v1370 = vpop.permute.xlu0 %1369
    %v1372 = vmul.f32 %v1365, %v1370
    %1374 = vrot.lane.b32.xlu0 %v1366, 64
    %v1375 = vpop.permute.xlu0 %1374
    %v1377 = vmul.f32 %v1365, %v1375
    %1379 = vrot.lane.b32.xlu0 %v1377, 32
    %v1380 = vpop.permute.xlu0 %1379
    %v1382 = vadd.f32 %v1372, %v1380
    %v1383 = vtanh.pop %v1382
    %1385 = vrot.lane.b32.xlu0 %v1383, 64
    %v1386 = vpop.permute.xlu0 %1385
    %v1388 = vmul.f32 %v1365, %v1386
    %v1390 = vrot.slane %v1319, 2
    %1391 = vrot.lane.b32.xlu0 %v1390, 32
    %v1392 = vpop.permute.xlu0 %1391
    %v1395 = vsel %vm894, %v1392, %v1253
    %v1397 = vrot.slane %v1313, 2
    %1398 = vrot.lane.b32.xlu0 %v1397, 96
    %v1399 = vpop.permute.xlu0 %1398
    %1401 = vrot.lane.b32.xlu0 %v1224, 96
    %v1402 = vpop.permute.xlu0 %1401
    %v1404 = vsel %vm894, %v1399, %v1402
    %v1406 = vrot.slane %v1388, 4
    %1407 = vrot.lane.b32.xlu0 %v1406, 32
    %v1408 = vpop.permute.xlu0 %1407
    %v1410 = vsel %vm877, %v1408, %v1231
    %v1412 = vrot.slane %v1382, 4
    %1413 = vrot.lane.b32.xlu0 %v1412, 96
    %v1414 = vpop.permute.xlu0 %1413
    %v1416 = vsel %vm877, %v1414, %v1240
    %v1417 = vsel %vm894, %v1392, 0.0
    %1418 = vst.msk [vmem:[#allocation4 + $0xa] sm:$0x3] %vm543, %v1417
    %v1419 = vsel %vm877, %v1408, 0.0
    %1420 = vst.msk [vmem:[#allocation5 + $0x4] sm:$0x3] %vm543, %v1419
    %v1421 = vld [vmem:[#allocation2 + $0x10] sm:$0x30]
    %v1422 = vld [vmem:[#allocation2 + $0x8] sm:$0xc]
    %v1424 = vsel %vm320, %v1395, 0
    %1426 = vmatpush.msra.mxu0 0.0
    %1427 = vmatpush.msra.mxu0 0.0
    %1428 = vmatpush.msra.mxu0 0.0
    %1429 = vmatpush.msra.mxu0 0.0
    %1430 = vmatpush.msra.mxu0 0.0
    %1431 = vmatpush.msra.mxu0 0.0
    %1432 = vmatpush.msra.mxu0 0.0
    %1433 = vmatpush.msra.mxu0 0.0
    %1434 = vmatpush.msra.mxu0 0.0
    %1435 = vmatpush.msra.mxu0 0.0
    %1436 = vmatpush.msra.mxu0 0.0
    %1437 = vmatpush.msra.mxu0 0.0
    %1438 = vmatpush.msra.mxu0 %v380
    %1439 = vmatpush.msra.mxu0 %v379
    %1440 = vmatpush.msra.mxu0 %v378
    %1441 = vmatpush.msra.mxu0 %v377
    %1442 = vmatmul.f32.gmra.mxu0 %v1424
    %v1443 = vpop.f32.mrf.mxu0
    %v1444 = vadd.f32 0.0, %v1443
    %1445 = vdwg.mxu0
    %v1447 = vrot.slane %v1444, 4
    %v1449 = vadd.f32 %v1421, %v1447
    %v1450 = vxor.u32 %v1449, 2147483648
    %v1451 = vmul.f32 %v1450, 1.442695
    %v1452 = vpow.pop %v1451
    %v1453 = vadd.f32 %v1452, 1.0
    %v1454 = vrcp.pop %v1453
    %v1455 = vmul.f32 %v1453, %v1454
    %v1456 = vsub.f32 1.0, %v1455
    %v1457 = vmul.f32 %v1454, %v1456
    %v1458 = vadd.f32 %v1454, %v1457
    %vm1459 = vweird.f32 %v1453
    %vm1460 = vweird.f32 %v1454
    %vm1461 = vmor %vm1459, %vm1460
    %v1462 = vsel %vm1461, %v1454, %v1458
    %v1463 = vand.u32 2147483647, %v1453
    %vm1464 = vcmp.eq.f32.partialorder %v1463, 8.507059e+37
    %v1465 = vand.u32 %v1453, 2147483648
    %v1466 = vor.u32 1.1754944e-38, %v1465
    %v1467 = vsel %vm1464, %v1466, %v1462
    %v1468 = vmul.f32 1.0, %v1467
    %v1469 = vtanh.pop %v1449
    %v1471 = vrot.slane %v1404, 4
    %1472 = vrot.lane.b32.xlu0 %v1471, 32
    %v1473 = vpop.permute.xlu0 %1472
    %v1475 = vmul.f32 %v1468, %v1473
    %1477 = vrot.lane.b32.xlu0 %v1469, 64
    %v1478 = vpop.permute.xlu0 %1477
    %v1480 = vmul.f32 %v1468, %v1478
    %1482 = vrot.lane.b32.xlu0 %v1480, 32
    %v1483 = vpop.permute.xlu0 %1482
    %v1485 = vadd.f32 %v1475, %v1483
    %v1486 = vtanh.pop %v1485
    %1488 = vrot.lane.b32.xlu0 %v1486, 64
    %v1489 = vpop.permute.xlu0 %1488
    %v1491 = vmul.f32 %v1468, %v1489
    %v1493 = vsel %vm320, %v1410, 0
    %1495 = vmatpush.msra.mxu0 0.0
    %1496 = vmatpush.msra.mxu0 0.0
    %1497 = vmatpush.msra.mxu0 0.0
    %1498 = vmatpush.msra.mxu0 0.0
    %1499 = vmatpush.msra.mxu0 0.0
    %1500 = vmatpush.msra.mxu0 0.0
    %1501 = vmatpush.msra.mxu0 0.0
    %1502 = vmatpush.msra.mxu0 0.0
    %1503 = vmatpush.msra.mxu0 0.0
    %1504 = vmatpush.msra.mxu0 0.0
    %1505 = vmatpush.msra.mxu0 0.0
    %1506 = vmatpush.msra.mxu0 0.0
    %1507 = vmatpush.msra.mxu0 %v384
    %1508 = vmatpush.msra.mxu0 %v383
    %1509 = vmatpush.msra.mxu0 %v382
    %1510 = vmatpush.msra.mxu0 %v381
    %1511 = vmatmul.f32.gmra.mxu0 %v1493
    %v1512 = vpop.f32.mrf.mxu0
    %v1513 = vadd.f32 0.0, %v1512
    %1514 = vdwg.mxu0
    %v1516 = vrot.slane %v1513, 6
    %v1518 = vadd.f32 %v1422, %v1516
    %v1519 = vxor.u32 %v1518, 2147483648
    %v1520 = vmul.f32 %v1519, 1.442695
    %v1521 = vpow.pop %v1520
    %v1522 = vadd.f32 %v1521, 1.0
    %v1523 = vrcp.pop %v1522
    %v1524 = vmul.f32 %v1522, %v1523
    %v1525 = vsub.f32 1.0, %v1524
    %v1526 = vmul.f32 %v1523, %v1525
    %v1527 = vadd.f32 %v1523, %v1526
    %vm1528 = vweird.f32 %v1522
    %vm1529 = vweird.f32 %v1523
    %vm1530 = vmor %vm1528, %vm1529
    %v1531 = vsel %vm1530, %v1523, %v1527
    %v1532 = vand.u32 2147483647, %v1522
    %vm1533 = vcmp.eq.f32.partialorder %v1532, 8.507059e+37
    %v1534 = vand.u32 %v1522, 2147483648
    %v1535 = vor.u32 1.1754944e-38, %v1534
    %v1536 = vsel %vm1533, %v1535, %v1531
    %v1537 = vmul.f32 1.0, %v1536
    %v1538 = vtanh.pop %v1518
    %v1540 = vrot.slane %v1416, 6
    %1541 = vrot.lane.b32.xlu0 %v1540, 32
    %v1542 = vpop.permute.xlu0 %1541
    %v1544 = vmul.f32 %v1537, %v1542
    %1546 = vrot.lane.b32.xlu0 %v1538, 64
    %v1547 = vpop.permute.xlu0 %1546
    %v1549 = vmul.f32 %v1537, %v1547
    %1551 = vrot.lane.b32.xlu0 %v1549, 32
    %v1552 = vpop.permute.xlu0 %1551
    %v1554 = vadd.f32 %v1544, %v1552
    %v1555 = vtanh.pop %v1554
    %1557 = vrot.lane.b32.xlu0 %v1555, 64
    %v1558 = vpop.permute.xlu0 %1557
    %v1560 = vmul.f32 %v1537, %v1558
    %v1562 = vrot.slane %v1491, 4
    %1563 = vrot.lane.b32.xlu0 %v1562, 32
    %v1564 = vpop.permute.xlu0 %1563
    %v1566 = vsel %vm714, %v1564, %v1395
    %v1568 = vrot.slane %v1485, 4
    %1569 = vrot.lane.b32.xlu0 %v1568, 96
    %v1570 = vpop.permute.xlu0 %1569
    %v1572 = vsel %vm714, %v1570, %v1404
    %v1574 = vrot.slane %v1560, 2
    %1575 = vrot.lane.b32.xlu0 %v1574, 32
    %v1576 = vpop.permute.xlu0 %1575
    %v1578 = vsel %vm693, %v1576, %v1410
    %v1580 = vrot.slane %v1554, 2
    %1581 = vrot.lane.b32.xlu0 %v1580, 96
    %v1582 = vpop.permute.xlu0 %1581
    %v1584 = vsel %vm693, %v1582, %v1416
    %v1585 = vsel %vm714, %v1564, 0.0
    %1586 = vst.msk [vmem:[#allocation4 + $0xc] sm:$0x3] %vm543, %v1585
    %v1587 = vsel %vm693, %v1576, 0.0
    %1588 = vst.msk [vmem:[#allocation5 + $0x2] sm:$0x3] %vm543, %v1587
    %v1589 = vld [vmem:[#allocation2 + $0x10] sm:$0xc0]
    %v1590 = vld [vmem:[#allocation2 + $0x8] sm:$0x3]
    %v1592 = vsel %vm320, %v1566, 0
    %1594 = vmatpush.msra.mxu0 0.0
    %1595 = vmatpush.msra.mxu0 0.0
    %1596 = vmatpush.msra.mxu0 0.0
    %1597 = vmatpush.msra.mxu0 0.0
    %1598 = vmatpush.msra.mxu0 0.0
    %1599 = vmatpush.msra.mxu0 0.0
    %1600 = vmatpush.msra.mxu0 0.0
    %1601 = vmatpush.msra.mxu0 0.0
    %1602 = vmatpush.msra.mxu0 0.0
    %1603 = vmatpush.msra.mxu0 0.0
    %1604 = vmatpush.msra.mxu0 0.0
    %1605 = vmatpush.msra.mxu0 0.0
    %1606 = vmatpush.msra.mxu0 %v380
    %1607 = vmatpush.msra.mxu0 %v379
    %1608 = vmatpush.msra.mxu0 %v378
    %1609 = vmatpush.msra.mxu0 %v377
    %1610 = vmatmul.f32.gmra.mxu0 %v1592
    %v1611 = vpop.f32.mrf.mxu0
    %v1612 = vadd.f32 0.0, %v1611
    %1613 = vdwg.mxu0
    %v1615 = vrot.slane %v1612, 2
    %v1617 = vadd.f32 %v1589, %v1615
    %v1618 = vxor.u32 %v1617, 2147483648
    %v1619 = vmul.f32 %v1618, 1.442695
    %v1620 = vpow.pop %v1619
    %v1621 = vadd.f32 %v1620, 1.0
    %v1622 = vrcp.pop %v1621
    %v1623 = vmul.f32 %v1621, %v1622
    %v1624 = vsub.f32 1.0, %v1623
    %v1625 = vmul.f32 %v1622, %v1624
    %v1626 = vadd.f32 %v1622, %v1625
    %vm1627 = vweird.f32 %v1621
    %vm1628 = vweird.f32 %v1622
    %vm1629 = vmor %vm1627, %vm1628
    %v1630 = vsel %vm1629, %v1622, %v1626
    %v1631 = vand.u32 2147483647, %v1621
    %vm1632 = vcmp.eq.f32.partialorder %v1631, 8.507059e+37
    %v1633 = vand.u32 %v1621, 2147483648
    %v1634 = vor.u32 1.1754944e-38, %v1633
    %v1635 = vsel %vm1632, %v1634, %v1630
    %v1636 = vmul.f32 1.0, %v1635
    %v1637 = vtanh.pop %v1617
    %v1639 = vrot.slane %v1572, 2
    %1640 = vrot.lane.b32.xlu0 %v1639, 32
    %v1641 = vpop.permute.xlu0 %1640
    %v1643 = vmul.f32 %v1636, %v1641
    %1645 = vrot.lane.b32.xlu0 %v1637, 64
    %v1646 = vpop.permute.xlu0 %1645
    %v1648 = vmul.f32 %v1636, %v1646
    %1650 = vrot.lane.b32.xlu0 %v1648, 32
    %v1651 = vpop.permute.xlu0 %1650
    %v1653 = vadd.f32 %v1643, %v1651
    %v1654 = vtanh.pop %v1653
    %1656 = vrot.lane.b32.xlu0 %v1654, 64
    %v1657 = vpop.permute.xlu0 %1656
    %v1659 = vmul.f32 %v1636, %v1657
    %v1661 = vsel %vm320, %v1578, 0
    %1663 = vmatpush.msra.mxu0 0.0
    %1664 = vmatpush.msra.mxu0 0.0
    %1665 = vmatpush.msra.mxu0 0.0
    %1666 = vmatpush.msra.mxu0 0.0
    %1667 = vmatpush.msra.mxu0 0.0
    %1668 = vmatpush.msra.mxu0 0.0
    %1669 = vmatpush.msra.mxu0 0.0
    %1670 = vmatpush.msra.mxu0 0.0
    %1671 = vmatpush.msra.mxu0 0.0
    %1672 = vmatpush.msra.mxu0 0.0
    %1673 = vmatpush.msra.mxu0 0.0
    %1674 = vmatpush.msra.mxu0 0.0
    %1675 = vmatpush.msra.mxu0 %v384
    %1676 = vmatpush.msra.mxu0 %v383
    %1677 = vmatpush.msra.mxu0 %v382
    %1678 = vmatpush.msra.mxu0 %v381
    %1679 = vmatmul.f32.gmra.mxu0 %v1661
    %v1680 = vpop.f32.mrf.mxu0
    %v1681 = vadd.f32 0.0, %v1680
    %1682 = vdwg.mxu0
    %v1683 = vadd.f32 %v1590, %v1681
    %v1684 = vxor.u32 %v1683, 2147483648
    %v1685 = vmul.f32 %v1684, 1.442695
    %v1686 = vpow.pop %v1685
    %v1687 = vadd.f32 %v1686, 1.0
    %v1688 = vrcp.pop %v1687
    %v1689 = vmul.f32 %v1687, %v1688
    %v1690 = vsub.f32 1.0, %v1689
    %v1691 = vmul.f32 %v1688, %v1690
    %v1692 = vadd.f32 %v1688, %v1691
    %vm1693 = vweird.f32 %v1687
    %vm1694 = vweird.f32 %v1688
    %vm1695 = vmor %vm1693, %vm1694
    %v1696 = vsel %vm1695, %v1688, %v1692
    %v1697 = vand.u32 2147483647, %v1687
    %vm1698 = vcmp.eq.f32.partialorder %v1697, 8.507059e+37
    %v1699 = vand.u32 %v1687, 2147483648
    %v1700 = vor.u32 1.1754944e-38, %v1699
    %v1701 = vsel %vm1698, %v1700, %v1696
    %v1702 = vmul.f32 1.0, %v1701
    %v1703 = vtanh.pop %v1683
    %1705 = vrot.lane.b32.xlu0 %v1584, 32
    %v1706 = vpop.permute.xlu0 %1705
    %v1708 = vmul.f32 %v1702, %v1706
    %1710 = vrot.lane.b32.xlu0 %v1703, 64
    %v1711 = vpop.permute.xlu0 %1710
    %v1713 = vmul.f32 %v1702, %v1711
    %1715 = vrot.lane.b32.xlu0 %v1713, 32
    %v1716 = vpop.permute.xlu0 %1715
    %v1718 = vadd.f32 %v1708, %v1716
    %v1719 = vtanh.pop %v1718
    %1721 = vrot.lane.b32.xlu0 %v1719, 64
    %v1722 = vpop.permute.xlu0 %1721
    %v1724 = vmul.f32 %v1702, %v1722
    %v1726 = vrot.slane %v1659, 6
    %1727 = vrot.lane.b32.xlu0 %v1726, 32
    %v1728 = vpop.permute.xlu0 %1727
    %v1730 = vsel %vm525, %v1728, 0.0
    %1731 = vst.msk [vmem:[#allocation4 + $0xe] sm:$0x3] %vm543, %v1730
    %v1732 = vsel %vm515, %v1724, 0.0
    %1734 = vrot.lane.b32.xlu0 %v1732, 32
    %v1735 = vpop.permute.xlu0 %1734
    %1737 = vst.msk [vmem:[#allocation5] sm:$0x3] %vm543, %v1735
    %v1738 = vld [vmem:[#allocation4] sm:$0xff]
    %v1739 = vld [vmem:[#allocation4 + $0x8] sm:$0xff]
    %v1740 = vld [vmem:[%s9] sm:$0xff]
    %v1741 = vld [vmem:[%s9 + $0x8] sm:$0xff]
    %v1742 = vld [vmem:[%s9 + $0x10] sm:$0xff]
    %v1743 = vld [vmem:[%s9 + $0x18] sm:$0xff]
    %v1744 = vld [vmem:[%s9 + $0x20] sm:$0xff]
    %v1745 = vld [vmem:[%s9 + $0x28] sm:$0xff]
    %v1746 = vld [vmem:[%s9 + $0x30] sm:$0xff]
    %v1747 = vld [vmem:[%s9 + $0x38] sm:$0xff]
    %v1748 = vld [vmem:[#allocation5] sm:$0xff]
    %v1749 = vld [vmem:[#allocation5 + $0x8] sm:$0xff]
    %v1750 = vld [vmem:[%s10] sm:$0xff]
    %v1751 = vld [vmem:[%s10 + $0x8] sm:$0xff]
    %v1752 = vld [vmem:[%s10 + $0x10] sm:$0xff]
    %v1753 = vld [vmem:[%s10 + $0x18] sm:$0xff]
    %v1754 = vld [vmem:[%s10 + $0x20] sm:$0xff]
    %v1755 = vld [vmem:[%s10 + $0x28] sm:$0xff]
    %v1756 = vld [vmem:[%s10 + $0x30] sm:$0xff]
    %v1757 = vld [vmem:[%s10 + $0x38] sm:$0xff]
    %v1759 = vsel %vm320, %v1748, 0
    %v1762 = vsel %vm320, %v1749, 0
    %1764 = vmatpush.msra.mxu0 0.0
    %1765 = vmatpush.msra.mxu0 0.0
    %1766 = vmatpush.msra.mxu0 0.0
    %1767 = vmatpush.msra.mxu0 0.0
    %1768 = vmatpush.msra.mxu0 0.0
    %1769 = vmatpush.msra.mxu0 0.0
    %1770 = vmatpush.msra.mxu0 0.0
    %1771 = vmatpush.msra.mxu0 0.0
    %1772 = vmatpush.msra.mxu0 0.0
    %1773 = vmatpush.msra.mxu0 0.0
    %1774 = vmatpush.msra.mxu0 0.0
    %1775 = vmatpush.msra.mxu0 0.0
    %1776 = vmatpush.msra.mxu0 %v1756
    %1777 = vmatpush.msra.mxu0 %v1754
    %1778 = vmatpush.msra.mxu0 %v1752
    %1779 = vmatpush.msra.mxu0 %v1750
    %1780 = vmatmul.f32.gmra.mxu0 %v1759
    %v1781 = vpop.f32.mrf.mxu0
    %v1782 = vadd.f32 0.0, %v1781
    %1783 = vmatmul.f32.gmra.mxu0 %v1762
    %v1784 = vpop.f32.mrf.mxu0
    %v1785 = vadd.f32 0.0, %v1784
    %1786 = vdwg.mxu0
    %1787 = vmatpush.msra.mxu0 0.0
    %1788 = vmatpush.msra.mxu0 0.0
    %1789 = vmatpush.msra.mxu0 0.0
    %1790 = vmatpush.msra.mxu0 0.0
    %1791 = vmatpush.msra.mxu0 0.0
    %1792 = vmatpush.msra.mxu0 0.0
    %1793 = vmatpush.msra.mxu0 0.0
    %1794 = vmatpush.msra.mxu0 0.0
    %1795 = vmatpush.msra.mxu0 0.0
    %1796 = vmatpush.msra.mxu0 0.0
    %1797 = vmatpush.msra.mxu0 0.0
    %1798 = vmatpush.msra.mxu0 0.0
    %1799 = vmatpush.msra.mxu0 %v1757
    %1800 = vmatpush.msra.mxu0 %v1755
    %1801 = vmatpush.msra.mxu0 %v1753
    %1802 = vmatpush.msra.mxu0 %v1751
    %1803 = vmatmul.f32.gmra.mxu0 %v1759
    %v1804 = vpop.f32.mrf.mxu0
    %v1805 = vadd.f32 0.0, %v1804
    %1806 = vmatmul.f32.gmra.mxu0 %v1762
    %v1807 = vpop.f32.mrf.mxu0
    %v1808 = vadd.f32 0.0, %v1807
    %1809 = vdwg.mxu0
    %v1811 = vsel %vm320, %v1738, 0
    %v1814 = vsel %vm320, %v1739, 0
    %1816 = vmatpush.msra.mxu0 0.0
    %1817 = vmatpush.msra.mxu0 0.0
    %1818 = vmatpush.msra.mxu0 0.0
    %1819 = vmatpush.msra.mxu0 0.0
    %1820 = vmatpush.msra.mxu0 0.0
    %1821 = vmatpush.msra.mxu0 0.0
    %1822 = vmatpush.msra.mxu0 0.0
    %1823 = vmatpush.msra.mxu0 0.0
    %1824 = vmatpush.msra.mxu0 0.0
    %1825 = vmatpush.msra.mxu0 0.0
    %1826 = vmatpush.msra.mxu0 0.0
    %1827 = vmatpush.msra.mxu0 0.0
    %1828 = vmatpush.msra.mxu0 %v1746
    %1829 = vmatpush.msra.mxu0 %v1744
    %1830 = vmatpush.msra.mxu0 %v1742
    %1831 = vmatpush.msra.mxu0 %v1740
    %1832 = vmatmul.f32.gmra.mxu0 %v1811
    %v1833 = vpop.f32.mrf.mxu0
    %v1834 = vadd.f32 %v1782, %v1833
    %1835 = vmatmul.f32.gmra.mxu0 %v1814
    %v1836 = vpop.f32.mrf.mxu0
    %v1837 = vadd.f32 %v1785, %v1836
    %1838 = vdwg.mxu0
    %1839 = vmatpush.msra.mxu0 0.0
    %1840 = vmatpush.msra.mxu0 0.0
    %1841 = vmatpush.msra.mxu0 0.0
    %1842 = vmatpush.msra.mxu0 0.0
    %1843 = vmatpush.msra.mxu0 0.0
    %1844 = vmatpush.msra.mxu0 0.0
    %1845 = vmatpush.msra.mxu0 0.0
    %1846 = vmatpush.msra.mxu0 0.0
    %1847 = vmatpush.msra.mxu0 0.0
    %1848 = vmatpush.msra.mxu0 0.0
    %1849 = vmatpush.msra.mxu0 0.0
    %1850 = vmatpush.msra.mxu0 0.0
    %1851 = vmatpush.msra.mxu0 %v1747
    %1852 = vmatpush.msra.mxu0 %v1745
    %1853 = vmatpush.msra.mxu0 %v1743
    %1854 = vmatpush.msra.mxu0 %v1741
    %1855 = vmatmul.f32.gmra.mxu0 %v1811
    %v1856 = vpop.f32.mrf.mxu0
    %v1857 = vadd.f32 %v1805, %v1856
    %1858 = vmatmul.f32.gmra.mxu0 %v1814
    %v1859 = vpop.f32.mrf.mxu0
    %v1860 = vadd.f32 %v1808, %v1859
    %1861 = vdwg.mxu0
    %v1862 = vld [vmem:[%s13] sm:$0x3]
    %v1864 = vperm.slane %v1862, 0
    %v1865 = vperm.slane %v1862, 1
    %v1868 = vadd.f32 %v1834, %v1864
    %v1869 = vadd.f32 %v1857, %v1865
    %v1870 = vadd.f32 %v1837, %v1864
    %v1871 = vadd.f32 %v1860, %v1865
    %1872 = vst [vmem:[#allocation3] sm:$0xff] %v1868
    %1873 = vst [vmem:[#allocation3 + $0x8] sm:$0xff] %v1869
    %1874 = vst [vmem:[#allocation3 + $0x10] sm:$0xff] %v1870
    %1875 = vst [vmem:[#allocation3 + $0x18] sm:$0xff] %v1871
    %v1876 = vld [vmem:[%s11] sm:$0xff]
    %v1877 = vld [vmem:[%s11 + $0x8] sm:$0xff]
    %v1878 = vld [vmem:[%s11 + $0x10] sm:$0xff]
    %v1879 = vld [vmem:[%s11 + $0x18] sm:$0xff]
    %v1880 = vld [vmem:[%s12] sm:$0xff]
    %v1881 = vld [vmem:[%s12 + $0x8] sm:$0xff]
    %v1882 = vld [vmem:[%s12 + $0x10] sm:$0xff]
    %v1883 = vld [vmem:[%s12 + $0x18] sm:$0xff]
    %v1884 = vld [vmem:[#allocation3] sm:$0x3]
    %v1885 = vld [vmem:[#allocation3 + $0x18] sm:$0xc0]
    %1886 = vmatpush.msra.mxu0 0.0
    %1887 = vmatpush.msra.mxu0 0.0
    %1888 = vmatpush.msra.mxu0 0.0
    %1889 = vmatpush.msra.mxu0 0.0
    %1890 = vmatpush.msra.mxu0 0.0
    %1891 = vmatpush.msra.mxu0 0.0
    %1892 = vmatpush.msra.mxu0 0.0
    %1893 = vmatpush.msra.mxu0 0.0
    %1894 = vmatpush.msra.mxu0 0.0
    %1895 = vmatpush.msra.mxu0 0.0
    %1896 = vmatpush.msra.mxu0 0.0
    %1897 = vmatpush.msra.mxu0 0.0
    %1898 = vmatpush.msra.mxu0 %v1879
    %1899 = vmatpush.msra.mxu0 %v1878
    %1900 = vmatpush.msra.mxu0 %v1877
    %1901 = vmatpush.msra.mxu0 %v1876
    %1902 = vmatmul.f32.gmra.mxu0 %v388
    %v1903 = vpop.f32.mrf.mxu0
    %v1904 = vadd.f32 0.0, %v1903
    %1905 = vdwg.mxu0
    %v1906 = vadd.f32 %v1884, %v1904
    %v1907 = vxor.u32 %v1906, 2147483648
    %v1908 = vmul.f32 %v1907, 1.442695
    %v1909 = vpow.pop %v1908
    %v1910 = vadd.f32 %v1909, 1.0
    %v1911 = vrcp.pop %v1910
    %v1912 = vmul.f32 %v1910, %v1911
    %v1913 = vsub.f32 1.0, %v1912
    %v1914 = vmul.f32 %v1911, %v1913
    %v1915 = vadd.f32 %v1911, %v1914
    %vm1916 = vweird.f32 %v1910
    %vm1917 = vweird.f32 %v1911
    %vm1918 = vmor %vm1916, %vm1917
    %v1919 = vsel %vm1918, %v1911, %v1915
    %v1920 = vand.u32 2147483647, %v1910
    %vm1921 = vcmp.eq.f32.partialorder %v1920, 8.507059e+37
    %v1922 = vand.u32 %v1910, 2147483648
    %v1923 = vor.u32 1.1754944e-38, %v1922
    %v1924 = vsel %vm1921, %v1923, %v1919
    %v1925 = vmul.f32 1.0, %v1924
    %v1926 = vtanh.pop %v1906
    %v1927 = vmul.f32 %v1925, 0.0
    %1929 = vrot.lane.b32.xlu0 %v1926, 64
    %v1930 = vpop.permute.xlu0 %1929
    %v1932 = vmul.f32 %v1925, %v1930
    %1934 = vrot.lane.b32.xlu0 %v1932, 32
    %v1935 = vpop.permute.xlu0 %1934
    %v1937 = vadd.f32 %v1927, %v1935
    %v1938 = vtanh.pop %v1937
    %1940 = vrot.lane.b32.xlu0 %v1938, 64
    %v1941 = vpop.permute.xlu0 %1940
    %v1943 = vmul.f32 %v1925, %v1941
    %1944 = vmatpush.msra.mxu0 0.0
    %1945 = vmatpush.msra.mxu0 0.0
    %1946 = vmatpush.msra.mxu0 0.0
    %1947 = vmatpush.msra.mxu0 0.0
    %1948 = vmatpush.msra.mxu0 0.0
    %1949 = vmatpush.msra.mxu0 0.0
    %1950 = vmatpush.msra.mxu0 0.0
    %1951 = vmatpush.msra.mxu0 0.0
    %1952 = vmatpush.msra.mxu0 0.0
    %1953 = vmatpush.msra.mxu0 0.0
    %1954 = vmatpush.msra.mxu0 0.0
    %1955 = vmatpush.msra.mxu0 0.0
    %1956 = vmatpush.msra.mxu0 %v1883
    %1957 = vmatpush.msra.mxu0 %v1882
    %1958 = vmatpush.msra.mxu0 %v1881
    %1959 = vmatpush.msra.mxu0 %v1880
    %1960 = vmatmul.f32.gmra.mxu0 %v388
    %v1961 = vpop.f32.mrf.mxu0
    %v1962 = vadd.f32 0.0, %v1961
    %1963 = vdwg.mxu0
    %v1965 = vrot.slane %v1962, 2
    %v1967 = vadd.f32 %v1885, %v1965
    %v1968 = vxor.u32 %v1967, 2147483648
    %v1969 = vmul.f32 %v1968, 1.442695
    %v1970 = vpow.pop %v1969
    %v1971 = vadd.f32 %v1970, 1.0
    %v1972 = vrcp.pop %v1971
    %v1973 = vmul.f32 %v1971, %v1972
    %v1974 = vsub.f32 1.0, %v1973
    %v1975 = vmul.f32 %v1972, %v1974
    %v1976 = vadd.f32 %v1972, %v1975
    %vm1977 = vweird.f32 %v1971
    %vm1978 = vweird.f32 %v1972
    %vm1979 = vmor %vm1977, %vm1978
    %v1980 = vsel %vm1979, %v1972, %v1976
    %v1981 = vand.u32 2147483647, %v1971
    %vm1982 = vcmp.eq.f32.partialorder %v1981, 8.507059e+37
    %v1983 = vand.u32 %v1971, 2147483648
    %v1984 = vor.u32 1.1754944e-38, %v1983
    %v1985 = vsel %vm1982, %v1984, %v1980
    %v1986 = vmul.f32 1.0, %v1985
    %v1987 = vtanh.pop %v1967
    %v1988 = vmul.f32 %v1986, 0.0
    %1990 = vrot.lane.b32.xlu0 %v1987, 64
    %v1991 = vpop.permute.xlu0 %1990
    %v1993 = vmul.f32 %v1986, %v1991
    %1995 = vrot.lane.b32.xlu0 %v1993, 32
    %v1996 = vpop.permute.xlu0 %1995
    %v1998 = vadd.f32 %v1988, %v1996
    %v1999 = vtanh.pop %v1998
    %2001 = vrot.lane.b32.xlu0 %v1999, 64
    %v2002 = vpop.permute.xlu0 %2001
    %v2004 = vmul.f32 %v1986, %v2002
    %v2005 = vsel %vm515, %v1943, %v517
    %v2006 = vsel %vm515, %v1937, 0.0
    %v2008 = vrot.slane %v2004, 6
    %2009 = vrot.lane.b32.xlu0 %v2008, 32
    %v2010 = vpop.permute.xlu0 %2009
    %v2012 = vsel %vm525, %v2010, %v302
    %v2014 = vrot.slane %v1998, 6
    %2015 = vrot.lane.b32.xlu0 %v2014, 96
    %v2016 = vpop.permute.xlu0 %2015
    %v2018 = vsel %vm525, %v2016, 0.0
    %vm2019 = vcmp.eq.f32.partialorder %v64, 7.0
    %v2020 = vsel %vm2019, 1, 0
    %vm2021 = vcmp.eq.s32.totalorder %v2020, 1
    %vm2022 = vmand %vm2021, %vm510
    %v2023 = vsel %vm2022, 1, 0
    %2024 = vset.pattern.permute.xlu0 0
    %2025 = vperm.xlu0 %2024, %v2023
    %v2026 = vpop.permute.xlu0 %2025
    %vm2027 = vcmp.eq.s32.totalorder %v2026, 1
    %v2028 = vsel %vm2027, %v2010, 0.0
    %v2029 = vld [vmem:[#allocation3] sm:$0xc]
    %v2030 = vld [vmem:[#allocation3 + $0x18] sm:$0x30]
    %2032 = vrot.lane.b32.xlu0 %v2005, 32
    %v2033 = vpop.permute.xlu0 %2032
    %v2034 = vsel %vm320, %v2033, 0
    %2036 = vmatpush.msra.mxu0 0.0
    %2037 = vmatpush.msra.mxu0 0.0
    %2038 = vmatpush.msra.mxu0 0.0
    %2039 = vmatpush.msra.mxu0 0.0
    %2040 = vmatpush.msra.mxu0 0.0
    %2041 = vmatpush.msra.mxu0 0.0
    %2042 = vmatpush.msra.mxu0 0.0
    %2043 = vmatpush.msra.mxu0 0.0
    %2044 = vmatpush.msra.mxu0 0.0
    %2045 = vmatpush.msra.mxu0 0.0
    %2046 = vmatpush.msra.mxu0 0.0
    %2047 = vmatpush.msra.mxu0 0.0
    %2048 = vmatpush.msra.mxu0 %v1879
    %2049 = vmatpush.msra.mxu0 %v1878
    %2050 = vmatpush.msra.mxu0 %v1877
    %2051 = vmatpush.msra.mxu0 %v1876
    %2052 = vmatmul.f32.gmra.mxu0 %v2034
    %v2053 = vpop.f32.mrf.mxu0
    %v2054 = vadd.f32 0.0, %v2053
    %2055 = vdwg.mxu0
    %v2057 = vrot.slane %v2054, 6
    %v2059 = vadd.f32 %v2029, %v2057
    %v2060 = vxor.u32 %v2059, 2147483648
    %v2061 = vmul.f32 %v2060, 1.442695
    %v2062 = vpow.pop %v2061
    %v2063 = vadd.f32 %v2062, 1.0
    %v2064 = vrcp.pop %v2063
    %v2065 = vmul.f32 %v2063, %v2064
    %v2066 = vsub.f32 1.0, %v2065
    %v2067 = vmul.f32 %v2064, %v2066
    %v2068 = vadd.f32 %v2064, %v2067
    %vm2069 = vweird.f32 %v2063
    %vm2070 = vweird.f32 %v2064
    %vm2071 = vmor %vm2069, %vm2070
    %v2072 = vsel %vm2071, %v2064, %v2068
    %v2073 = vand.u32 2147483647, %v2063
    %vm2074 = vcmp.eq.f32.partialorder %v2073, 8.507059e+37
    %v2075 = vand.u32 %v2063, 2147483648
    %v2076 = vor.u32 1.1754944e-38, %v2075
    %v2077 = vsel %vm2074, %v2076, %v2072
    %v2078 = vmul.f32 1.0, %v2077
    %v2079 = vtanh.pop %v2059
    %v2081 = vrot.slane %v2006, 6
    %v2083 = vmul.f32 %v2078, %v2081
    %2085 = vrot.lane.b32.xlu0 %v2079, 64
    %v2086 = vpop.permute.xlu0 %2085
    %v2088 = vmul.f32 %v2078, %v2086
    %2090 = vrot.lane.b32.xlu0 %v2088, 32
    %v2091 = vpop.permute.xlu0 %2090
    %v2093 = vadd.f32 %v2083, %v2091
    %v2094 = vtanh.pop %v2093
    %2096 = vrot.lane.b32.xlu0 %v2094, 64
    %v2097 = vpop.permute.xlu0 %2096
    %v2099 = vmul.f32 %v2078, %v2097
    %v2101 = vsel %vm320, %v2012, 0
    %2103 = vmatpush.msra.mxu0 0.0
    %2104 = vmatpush.msra.mxu0 0.0
    %2105 = vmatpush.msra.mxu0 0.0
    %2106 = vmatpush.msra.mxu0 0.0
    %2107 = vmatpush.msra.mxu0 0.0
    %2108 = vmatpush.msra.mxu0 0.0
    %2109 = vmatpush.msra.mxu0 0.0
    %2110 = vmatpush.msra.mxu0 0.0
    %2111 = vmatpush.msra.mxu0 0.0
    %2112 = vmatpush.msra.mxu0 0.0
    %2113 = vmatpush.msra.mxu0 0.0
    %2114 = vmatpush.msra.mxu0 0.0
    %2115 = vmatpush.msra.mxu0 %v1883
    %2116 = vmatpush.msra.mxu0 %v1882
    %2117 = vmatpush.msra.mxu0 %v1881
    %2118 = vmatpush.msra.mxu0 %v1880
    %2119 = vmatmul.f32.gmra.mxu0 %v2101
    %v2120 = vpop.f32.mrf.mxu0
    %v2121 = vadd.f32 0.0, %v2120
    %2122 = vdwg.mxu0
    %v2124 = vrot.slane %v2121, 4
    %v2126 = vadd.f32 %v2030, %v2124
    %v2127 = vxor.u32 %v2126, 2147483648
    %v2128 = vmul.f32 %v2127, 1.442695
    %v2129 = vpow.pop %v2128
    %v2130 = vadd.f32 %v2129, 1.0
    %v2131 = vrcp.pop %v2130
    %v2132 = vmul.f32 %v2130, %v2131
    %v2133 = vsub.f32 1.0, %v2132
    %v2134 = vmul.f32 %v2131, %v2133
    %v2135 = vadd.f32 %v2131, %v2134
    %vm2136 = vweird.f32 %v2130
    %vm2137 = vweird.f32 %v2131
    %vm2138 = vmor %vm2136, %vm2137
    %v2139 = vsel %vm2138, %v2131, %v2135
    %v2140 = vand.u32 2147483647, %v2130
    %vm2141 = vcmp.eq.f32.partialorder %v2140, 8.507059e+37
    %v2142 = vand.u32 %v2130, 2147483648
    %v2143 = vor.u32 1.1754944e-38, %v2142
    %v2144 = vsel %vm2141, %v2143, %v2139
    %v2145 = vmul.f32 1.0, %v2144
    %v2146 = vtanh.pop %v2126
    %v2148 = vrot.slane %v2018, 4
    %2149 = vrot.lane.b32.xlu0 %v2148, 32
    %v2150 = vpop.permute.xlu0 %2149
    %v2152 = vmul.f32 %v2145, %v2150
    %2154 = vrot.lane.b32.xlu0 %v2146, 64
    %v2155 = vpop.permute.xlu0 %2154
    %v2157 = vmul.f32 %v2145, %v2155
    %2159 = vrot.lane.b32.xlu0 %v2157, 32
    %v2160 = vpop.permute.xlu0 %2159
    %v2162 = vadd.f32 %v2152, %v2160
    %v2163 = vtanh.pop %v2162
    %2165 = vrot.lane.b32.xlu0 %v2163, 64
    %v2166 = vpop.permute.xlu0 %2165
    %v2168 = vmul.f32 %v2145, %v2166
    %v2170 = vrot.slane %v2099, 2
    %2171 = vrot.lane.b32.xlu0 %v2170, 32
    %v2172 = vpop.permute.xlu0 %2171
    %v2175 = vsel %vm693, %v2172, %v2033
    %v2177 = vrot.slane %v2093, 2
    %2178 = vrot.lane.b32.xlu0 %v2177, 96
    %v2179 = vpop.permute.xlu0 %2178
    %2181 = vrot.lane.b32.xlu0 %v2006, 96
    %v2182 = vpop.permute.xlu0 %2181
    %v2184 = vsel %vm693, %v2179, %v2182
    %v2186 = vrot.slane %v2168, 4
    %2187 = vrot.lane.b32.xlu0 %v2186, 32
    %v2188 = vpop.permute.xlu0 %2187
    %v2190 = vsel %vm714, %v2188, %v2012
    %v2192 = vrot.slane %v2162, 4
    %2193 = vrot.lane.b32.xlu0 %v2192, 96
    %v2194 = vpop.permute.xlu0 %2193
    %v2196 = vsel %vm714, %v2194, %v2018
    %vm2197 = vcmp.eq.f32.partialorder %v64, 6.0
    %v2198 = vsel %vm2197, 1, 0
    %vm2199 = vcmp.eq.s32.totalorder %v2198, 1
    %vm2200 = vmand %vm2199, %vm688
    %v2201 = vsel %vm2200, 1, 0
    %2202 = vset.pattern.permute.xlu0 0
    %2203 = vperm.xlu0 %2202, %v2201
    %v2204 = vpop.permute.xlu0 %2203
    %vm2205 = vcmp.eq.s32.totalorder %v2204, 1
    %v2206 = vsel %vm2205, %v2188, %v2028
    %v2207 = vld [vmem:[#allocation3] sm:$0x30]
    %v2208 = vld [vmem:[#allocation3 + $0x18] sm:$0xc]
    %v2210 = vsel %vm320, %v2175, 0
    %2212 = vmatpush.msra.mxu0 0.0
    %2213 = vmatpush.msra.mxu0 0.0
    %2214 = vmatpush.msra.mxu0 0.0
    %2215 = vmatpush.msra.mxu0 0.0
    %2216 = vmatpush.msra.mxu0 0.0
    %2217 = vmatpush.msra.mxu0 0.0
    %2218 = vmatpush.msra.mxu0 0.0
    %2219 = vmatpush.msra.mxu0 0.0
    %2220 = vmatpush.msra.mxu0 0.0
    %2221 = vmatpush.msra.mxu0 0.0
    %2222 = vmatpush.msra.mxu0 0.0
    %2223 = vmatpush.msra.mxu0 0.0
    %2224 = vmatpush.msra.mxu0 %v1879
    %2225 = vmatpush.msra.mxu0 %v1878
    %2226 = vmatpush.msra.mxu0 %v1877
    %2227 = vmatpush.msra.mxu0 %v1876
    %2228 = vmatmul.f32.gmra.mxu0 %v2210
    %v2229 = vpop.f32.mrf.mxu0
    %v2230 = vadd.f32 0.0, %v2229
    %2231 = vdwg.mxu0
    %v2233 = vrot.slane %v2230, 4
    %v2235 = vadd.f32 %v2207, %v2233
    %v2236 = vxor.u32 %v2235, 2147483648
    %v2237 = vmul.f32 %v2236, 1.442695
    %v2238 = vpow.pop %v2237
    %v2239 = vadd.f32 %v2238, 1.0
    %v2240 = vrcp.pop %v2239
    %v2241 = vmul.f32 %v2239, %v2240
    %v2242 = vsub.f32 1.0, %v2241
    %v2243 = vmul.f32 %v2240, %v2242
    %v2244 = vadd.f32 %v2240, %v2243
    %vm2245 = vweird.f32 %v2239
    %vm2246 = vweird.f32 %v2240
    %vm2247 = vmor %vm2245, %vm2246
    %v2248 = vsel %vm2247, %v2240, %v2244
    %v2249 = vand.u32 2147483647, %v2239
    %vm2250 = vcmp.eq.f32.partialorder %v2249, 8.507059e+37
    %v2251 = vand.u32 %v2239, 2147483648
    %v2252 = vor.u32 1.1754944e-38, %v2251
    %v2253 = vsel %vm2250, %v2252, %v2248
    %v2254 = vmul.f32 1.0, %v2253
    %v2255 = vtanh.pop %v2235
    %v2257 = vrot.slane %v2184, 4
    %2258 = vrot.lane.b32.xlu0 %v2257, 32
    %v2259 = vpop.permute.xlu0 %2258
    %v2261 = vmul.f32 %v2254, %v2259
    %2263 = vrot.lane.b32.xlu0 %v2255, 64
    %v2264 = vpop.permute.xlu0 %2263
    %v2266 = vmul.f32 %v2254, %v2264
    %2268 = vrot.lane.b32.xlu0 %v2266, 32
    %v2269 = vpop.permute.xlu0 %2268
    %v2271 = vadd.f32 %v2261, %v2269
    %v2272 = vtanh.pop %v2271
    %2274 = vrot.lane.b32.xlu0 %v2272, 64
    %v2275 = vpop.permute.xlu0 %2274
    %v2277 = vmul.f32 %v2254, %v2275
    %v2279 = vsel %vm320, %v2190, 0
    %2281 = vmatpush.msra.mxu0 0.0
    %2282 = vmatpush.msra.mxu0 0.0
    %2283 = vmatpush.msra.mxu0 0.0
    %2284 = vmatpush.msra.mxu0 0.0
    %2285 = vmatpush.msra.mxu0 0.0
    %2286 = vmatpush.msra.mxu0 0.0
    %2287 = vmatpush.msra.mxu0 0.0
    %2288 = vmatpush.msra.mxu0 0.0
    %2289 = vmatpush.msra.mxu0 0.0
    %2290 = vmatpush.msra.mxu0 0.0
    %2291 = vmatpush.msra.mxu0 0.0
    %2292 = vmatpush.msra.mxu0 0.0
    %2293 = vmatpush.msra.mxu0 %v1883
    %2294 = vmatpush.msra.mxu0 %v1882
    %2295 = vmatpush.msra.mxu0 %v1881
    %2296 = vmatpush.msra.mxu0 %v1880
    %2297 = vmatmul.f32.gmra.mxu0 %v2279
    %v2298 = vpop.f32.mrf.mxu0
    %v2299 = vadd.f32 0.0, %v2298
    %2300 = vdwg.mxu0
    %v2302 = vrot.slane %v2299, 6
    %v2304 = vadd.f32 %v2208, %v2302
    %v2305 = vxor.u32 %v2304, 2147483648
    %v2306 = vmul.f32 %v2305, 1.442695
    %v2307 = vpow.pop %v2306
    %v2308 = vadd.f32 %v2307, 1.0
    %v2309 = vrcp.pop %v2308
    %v2310 = vmul.f32 %v2308, %v2309
    %v2311 = vsub.f32 1.0, %v2310
    %v2312 = vmul.f32 %v2309, %v2311
    %v2313 = vadd.f32 %v2309, %v2312
    %vm2314 = vweird.f32 %v2308
    %vm2315 = vweird.f32 %v2309
    %vm2316 = vmor %vm2314, %vm2315
    %v2317 = vsel %vm2316, %v2309, %v2313
    %v2318 = vand.u32 2147483647, %v2308
    %vm2319 = vcmp.eq.f32.partialorder %v2318, 8.507059e+37
    %v2320 = vand.u32 %v2308, 2147483648
    %v2321 = vor.u32 1.1754944e-38, %v2320
    %v2322 = vsel %vm2319, %v2321, %v2317
    %v2323 = vmul.f32 1.0, %v2322
    %v2324 = vtanh.pop %v2304
    %v2326 = vrot.slane %v2196, 6
    %2327 = vrot.lane.b32.xlu0 %v2326, 32
    %v2328 = vpop.permute.xlu0 %2327
    %v2330 = vmul.f32 %v2323, %v2328
    %2332 = vrot.lane.b32.xlu0 %v2324, 64
    %v2333 = vpop.permute.xlu0 %2332
    %v2335 = vmul.f32 %v2323, %v2333
    %2337 = vrot.lane.b32.xlu0 %v2335, 32
    %v2338 = vpop.permute.xlu0 %2337
    %v2340 = vadd.f32 %v2330, %v2338
    %v2341 = vtanh.pop %v2340
    %2343 = vrot.lane.b32.xlu0 %v2341, 64
    %v2344 = vpop.permute.xlu0 %2343
    %v2346 = vmul.f32 %v2323, %v2344
    %v2348 = vrot.slane %v2277, 4
    %2349 = vrot.lane.b32.xlu0 %v2348, 32
    %v2350 = vpop.permute.xlu0 %2349
    %v2352 = vsel %vm877, %v2350, %v2175
    %v2354 = vrot.slane %v2271, 4
    %2355 = vrot.lane.b32.xlu0 %v2354, 96
    %v2356 = vpop.permute.xlu0 %2355
    %v2358 = vsel %vm877, %v2356, %v2184
    %v2360 = vrot.slane %v2346, 2
    %2361 = vrot.lane.b32.xlu0 %v2360, 32
    %v2362 = vpop.permute.xlu0 %2361
    %v2364 = vsel %vm894, %v2362, %v2190
    %v2366 = vrot.slane %v2340, 2
    %2367 = vrot.lane.b32.xlu0 %v2366, 96
    %v2368 = vpop.permute.xlu0 %2367
    %v2370 = vsel %vm894, %v2368, %v2196
    %vm2371 = vcmp.eq.f32.partialorder %v64, 5.0
    %v2372 = vsel %vm2371, 1, 0
    %vm2373 = vcmp.eq.s32.totalorder %v2372, 1
    %vm2374 = vmand %vm2373, %vm872
    %v2375 = vsel %vm2374, 1, 0
    %2376 = vset.pattern.permute.xlu0 0
    %2377 = vperm.xlu0 %2376, %v2375
    %v2378 = vpop.permute.xlu0 %2377
    %vm2379 = vcmp.eq.s32.totalorder %v2378, 1
    %v2380 = vsel %vm2379, %v2362, %v2206
    %v2381 = vld [vmem:[#allocation3] sm:$0xc0]
    %v2382 = vld [vmem:[#allocation3 + $0x18] sm:$0x3]
    %v2384 = vsel %vm320, %v2352, 0
    %2386 = vmatpush.msra.mxu0 0.0
    %2387 = vmatpush.msra.mxu0 0.0
    %2388 = vmatpush.msra.mxu0 0.0
    %2389 = vmatpush.msra.mxu0 0.0
    %2390 = vmatpush.msra.mxu0 0.0
    %2391 = vmatpush.msra.mxu0 0.0
    %2392 = vmatpush.msra.mxu0 0.0
    %2393 = vmatpush.msra.mxu0 0.0
    %2394 = vmatpush.msra.mxu0 0.0
    %2395 = vmatpush.msra.mxu0 0.0
    %2396 = vmatpush.msra.mxu0 0.0
    %2397 = vmatpush.msra.mxu0 0.0
    %2398 = vmatpush.msra.mxu0 %v1879
    %2399 = vmatpush.msra.mxu0 %v1878
    %2400 = vmatpush.msra.mxu0 %v1877
    %2401 = vmatpush.msra.mxu0 %v1876
    %2402 = vmatmul.f32.gmra.mxu0 %v2384
    %v2403 = vpop.f32.mrf.mxu0
    %v2404 = vadd.f32 0.0, %v2403
    %2405 = vdwg.mxu0
    %v2407 = vrot.slane %v2404, 2
    %v2409 = vadd.f32 %v2381, %v2407
    %v2410 = vxor.u32 %v2409, 2147483648
    %v2411 = vmul.f32 %v2410, 1.442695
    %v2412 = vpow.pop %v2411
    %v2413 = vadd.f32 %v2412, 1.0
    %v2414 = vrcp.pop %v2413
    %v2415 = vmul.f32 %v2413, %v2414
    %v2416 = vsub.f32 1.0, %v2415
    %v2417 = vmul.f32 %v2414, %v2416
    %v2418 = vadd.f32 %v2414, %v2417
    %vm2419 = vweird.f32 %v2413
    %vm2420 = vweird.f32 %v2414
    %vm2421 = vmor %vm2419, %vm2420
    %v2422 = vsel %vm2421, %v2414, %v2418
    %v2423 = vand.u32 2147483647, %v2413
    %vm2424 = vcmp.eq.f32.partialorder %v2423, 8.507059e+37
    %v2425 = vand.u32 %v2413, 2147483648
    %v2426 = vor.u32 1.1754944e-38, %v2425
    %v2427 = vsel %vm2424, %v2426, %v2422
    %v2428 = vmul.f32 1.0, %v2427
    %v2429 = vtanh.pop %v2409
    %v2431 = vrot.slane %v2358, 2
    %2432 = vrot.lane.b32.xlu0 %v2431, 32
    %v2433 = vpop.permute.xlu0 %2432
    %v2435 = vmul.f32 %v2428, %v2433
    %2437 = vrot.lane.b32.xlu0 %v2429, 64
    %v2438 = vpop.permute.xlu0 %2437
    %v2440 = vmul.f32 %v2428, %v2438
    %2442 = vrot.lane.b32.xlu0 %v2440, 32
    %v2443 = vpop.permute.xlu0 %2442
    %v2445 = vadd.f32 %v2435, %v2443
    %v2446 = vtanh.pop %v2445
    %2448 = vrot.lane.b32.xlu0 %v2446, 64
    %v2449 = vpop.permute.xlu0 %2448
    %v2451 = vmul.f32 %v2428, %v2449
    %v2453 = vsel %vm320, %v2364, 0
    %2455 = vmatpush.msra.mxu0 0.0
    %2456 = vmatpush.msra.mxu0 0.0
    %2457 = vmatpush.msra.mxu0 0.0
    %2458 = vmatpush.msra.mxu0 0.0
    %2459 = vmatpush.msra.mxu0 0.0
    %2460 = vmatpush.msra.mxu0 0.0
    %2461 = vmatpush.msra.mxu0 0.0
    %2462 = vmatpush.msra.mxu0 0.0
    %2463 = vmatpush.msra.mxu0 0.0
    %2464 = vmatpush.msra.mxu0 0.0
    %2465 = vmatpush.msra.mxu0 0.0
    %2466 = vmatpush.msra.mxu0 0.0
    %2467 = vmatpush.msra.mxu0 %v1883
    %2468 = vmatpush.msra.mxu0 %v1882
    %2469 = vmatpush.msra.mxu0 %v1881
    %2470 = vmatpush.msra.mxu0 %v1880
    %2471 = vmatmul.f32.gmra.mxu0 %v2453
    %v2472 = vpop.f32.mrf.mxu0
    %v2473 = vadd.f32 0.0, %v2472
    %2474 = vdwg.mxu0
    %v2475 = vadd.f32 %v2382, %v2473
    %v2476 = vxor.u32 %v2475, 2147483648
    %v2477 = vmul.f32 %v2476, 1.442695
    %v2478 = vpow.pop %v2477
    %v2479 = vadd.f32 %v2478, 1.0
    %v2480 = vrcp.pop %v2479
    %v2481 = vmul.f32 %v2479, %v2480
    %v2482 = vsub.f32 1.0, %v2481
    %v2483 = vmul.f32 %v2480, %v2482
    %v2484 = vadd.f32 %v2480, %v2483
    %vm2485 = vweird.f32 %v2479
    %vm2486 = vweird.f32 %v2480
    %vm2487 = vmor %vm2485, %vm2486
    %v2488 = vsel %vm2487, %v2480, %v2484
    %v2489 = vand.u32 2147483647, %v2479
    %vm2490 = vcmp.eq.f32.partialorder %v2489, 8.507059e+37
    %v2491 = vand.u32 %v2479, 2147483648
    %v2492 = vor.u32 1.1754944e-38, %v2491
    %v2493 = vsel %vm2490, %v2492, %v2488
    %v2494 = vmul.f32 1.0, %v2493
    %v2495 = vtanh.pop %v2475
    %2497 = vrot.lane.b32.xlu0 %v2370, 32
    %v2498 = vpop.permute.xlu0 %2497
    %v2500 = vmul.f32 %v2494, %v2498
    %2502 = vrot.lane.b32.xlu0 %v2495, 64
    %v2503 = vpop.permute.xlu0 %2502
    %v2505 = vmul.f32 %v2494, %v2503
    %2507 = vrot.lane.b32.xlu0 %v2505, 32
    %v2508 = vpop.permute.xlu0 %2507
    %v2510 = vadd.f32 %v2500, %v2508
    %v2511 = vtanh.pop %v2510
    %2513 = vrot.lane.b32.xlu0 %v2511, 64
    %v2514 = vpop.permute.xlu0 %2513
    %v2516 = vmul.f32 %v2494, %v2514
    %v2518 = vrot.slane %v2451, 6
    %2519 = vrot.lane.b32.xlu0 %v2518, 32
    %v2520 = vpop.permute.xlu0 %2519
    %v2522 = vsel %vm1053, %v2520, %v2352
    %v2524 = vrot.slane %v2445, 6
    %2525 = vrot.lane.b32.xlu0 %v2524, 96
    %v2526 = vpop.permute.xlu0 %2525
    %v2528 = vsel %vm1053, %v2526, %v2358
    %2529 = vrot.lane.b32.xlu0 %v2364, 96
    %v2530 = vpop.permute.xlu0 %2529
    %v2532 = vsel %vm1070, %v2516, %v2530
    %v2533 = vsel %vm1070, %v2510, %v2498
    %vm2534 = vcmp.eq.f32.partialorder %v64, 4.0
    %v2535 = vsel %vm2534, 1, 0
    %vm2536 = vcmp.eq.s32.totalorder %v2535, 1
    %vm2537 = vmand %vm2536, %vm1048
    %v2538 = vsel %vm2537, 1, 0
    %2539 = vset.pattern.permute.xlu0 0
    %2540 = vperm.xlu0 %2539, %v2538
    %v2541 = vpop.permute.xlu0 %2540
    %vm2542 = vcmp.eq.s32.totalorder %v2541, 1
    %2544 = vrot.lane.b32.xlu0 %v2380, 96
    %v2545 = vpop.permute.xlu0 %2544
    %v2547 = vsel %vm2542, %v2516, %v2545
    %v2548 = vld [vmem:[#allocation3 + $0x10] sm:$0x3]
    %v2549 = vld [vmem:[#allocation3 + $0x8] sm:$0xc0]
    %v2551 = vsel %vm320, %v2522, 0
    %2553 = vmatpush.msra.mxu0 0.0
    %2554 = vmatpush.msra.mxu0 0.0
    %2555 = vmatpush.msra.mxu0 0.0
    %2556 = vmatpush.msra.mxu0 0.0
    %2557 = vmatpush.msra.mxu0 0.0
    %2558 = vmatpush.msra.mxu0 0.0
    %2559 = vmatpush.msra.mxu0 0.0
    %2560 = vmatpush.msra.mxu0 0.0
    %2561 = vmatpush.msra.mxu0 0.0
    %2562 = vmatpush.msra.mxu0 0.0
    %2563 = vmatpush.msra.mxu0 0.0
    %2564 = vmatpush.msra.mxu0 0.0
    %2565 = vmatpush.msra.mxu0 %v1879
    %2566 = vmatpush.msra.mxu0 %v1878
    %2567 = vmatpush.msra.mxu0 %v1877
    %2568 = vmatpush.msra.mxu0 %v1876
    %2569 = vmatmul.f32.gmra.mxu0 %v2551
    %v2570 = vpop.f32.mrf.mxu0
    %v2571 = vadd.f32 0.0, %v2570
    %2572 = vdwg.mxu0
    %v2573 = vadd.f32 %v2548, %v2571
    %v2574 = vxor.u32 %v2573, 2147483648
    %v2575 = vmul.f32 %v2574, 1.442695
    %v2576 = vpow.pop %v2575
    %v2577 = vadd.f32 %v2576, 1.0
    %v2578 = vrcp.pop %v2577
    %v2579 = vmul.f32 %v2577, %v2578
    %v2580 = vsub.f32 1.0, %v2579
    %v2581 = vmul.f32 %v2578, %v2580
    %v2582 = vadd.f32 %v2578, %v2581
    %vm2583 = vweird.f32 %v2577
    %vm2584 = vweird.f32 %v2578
    %vm2585 = vmor %vm2583, %vm2584
    %v2586 = vsel %vm2585, %v2578, %v2582
    %v2587 = vand.u32 2147483647, %v2577
    %vm2588 = vcmp.eq.f32.partialorder %v2587, 8.507059e+37
    %v2589 = vand.u32 %v2577, 2147483648
    %v2590 = vor.u32 1.1754944e-38, %v2589
    %v2591 = vsel %vm2588, %v2590, %v2586
    %v2592 = vmul.f32 1.0, %v2591
    %v2593 = vtanh.pop %v2573
    %2595 = vrot.lane.b32.xlu0 %v2528, 32
    %v2596 = vpop.permute.xlu0 %2595
    %v2598 = vmul.f32 %v2592, %v2596
    %2600 = vrot.lane.b32.xlu0 %v2593, 64
    %v2601 = vpop.permute.xlu0 %2600
    %v2603 = vmul.f32 %v2592, %v2601
    %2605 = vrot.lane.b32.xlu0 %v2603, 32
    %v2606 = vpop.permute.xlu0 %2605
    %v2608 = vadd.f32 %v2598, %v2606
    %v2609 = vtanh.pop %v2608
    %2611 = vrot.lane.b32.xlu0 %v2609, 64
    %v2612 = vpop.permute.xlu0 %2611
    %v2614 = vmul.f32 %v2592, %v2612
    %2616 = vrot.lane.b32.xlu0 %v2532, 32
    %v2617 = vpop.permute.xlu0 %2616
    %v2618 = vsel %vm320, %v2617, 0
    %2620 = vmatpush.msra.mxu0 0.0
    %2621 = vmatpush.msra.mxu0 0.0
    %2622 = vmatpush.msra.mxu0 0.0
    %2623 = vmatpush.msra.mxu0 0.0
    %2624 = vmatpush.msra.mxu0 0.0
    %2625 = vmatpush.msra.mxu0 0.0
    %2626 = vmatpush.msra.mxu0 0.0
    %2627 = vmatpush.msra.mxu0 0.0
    %2628 = vmatpush.msra.mxu0 0.0
    %2629 = vmatpush.msra.mxu0 0.0
    %2630 = vmatpush.msra.mxu0 0.0
    %2631 = vmatpush.msra.mxu0 0.0
    %2632 = vmatpush.msra.mxu0 %v1883
    %2633 = vmatpush.msra.mxu0 %v1882
    %2634 = vmatpush.msra.mxu0 %v1881
    %2635 = vmatpush.msra.mxu0 %v1880
    %2636 = vmatmul.f32.gmra.mxu0 %v2618
    %v2637 = vpop.f32.mrf.mxu0
    %v2638 = vadd.f32 0.0, %v2637
    %2639 = vdwg.mxu0
    %v2641 = vrot.slane %v2638, 2
    %v2643 = vadd.f32 %v2549, %v2641
    %v2644 = vxor.u32 %v2643, 2147483648
    %v2645 = vmul.f32 %v2644, 1.442695
    %v2646 = vpow.pop %v2645
    %v2647 = vadd.f32 %v2646, 1.0
    %v2648 = vrcp.pop %v2647
    %v2649 = vmul.f32 %v2647, %v2648
    %v2650 = vsub.f32 1.0, %v2649
    %v2651 = vmul.f32 %v2648, %v2650
    %v2652 = vadd.f32 %v2648, %v2651
    %vm2653 = vweird.f32 %v2647
    %vm2654 = vweird.f32 %v2648
    %vm2655 = vmor %vm2653, %vm2654
    %v2656 = vsel %vm2655, %v2648, %v2652
    %v2657 = vand.u32 2147483647, %v2647
    %vm2658 = vcmp.eq.f32.partialorder %v2657, 8.507059e+37
    %v2659 = vand.u32 %v2647, 2147483648
    %v2660 = vor.u32 1.1754944e-38, %v2659
    %v2661 = vsel %vm2658, %v2660, %v2656
    %v2662 = vmul.f32 1.0, %v2661
    %v2663 = vtanh.pop %v2643
    %v2665 = vrot.slane %v2533, 2
    %v2667 = vmul.f32 %v2662, %v2665
    %2669 = vrot.lane.b32.xlu0 %v2663, 64
    %v2670 = vpop.permute.xlu0 %2669
    %v2672 = vmul.f32 %v2662, %v2670
    %2674 = vrot.lane.b32.xlu0 %v2672, 32
    %v2675 = vpop.permute.xlu0 %2674
    %v2677 = vadd.f32 %v2667, %v2675
    %v2678 = vtanh.pop %v2677
    %2680 = vrot.lane.b32.xlu0 %v2678, 64
    %v2681 = vpop.permute.xlu0 %2680
    %v2683 = vmul.f32 %v2662, %v2681
    %2684 = vrot.lane.b32.xlu0 %v2522, 96
    %v2685 = vpop.permute.xlu0 %2684
    %v2687 = vsel %vm1070, %v2614, %v2685
    %v2688 = vsel %vm1070, %v2608, %v2596
    %v2690 = vrot.slane %v2683, 6
    %2691 = vrot.lane.b32.xlu0 %v2690, 32
    %v2692 = vpop.permute.xlu0 %2691
    %v2695 = vsel %vm1053, %v2692, %v2617
    %v2697 = vrot.slane %v2677, 6
    %2698 = vrot.lane.b32.xlu0 %v2697, 96
    %v2699 = vpop.permute.xlu0 %2698
    %2701 = vrot.lane.b32.xlu0 %v2533, 96
    %v2702 = vpop.permute.xlu0 %2701
    %v2704 = vsel %vm1053, %v2699, %v2702
    %vm2705 = vcmp.eq.f32.partialorder %v64, 3.0
    %v2706 = vsel %vm2705, 1, 0
    %vm2707 = vcmp.eq.s32.totalorder %v2706, 1
    %vm2708 = vmand %vm2707, %vm1047
    %v2709 = vsel %vm2708, 1, 0
    %2710 = vset.pattern.permute.xlu0 0
    %2711 = vperm.xlu0 %2710, %v2709
    %v2712 = vpop.permute.xlu0 %2711
    %vm2713 = vcmp.eq.s32.totalorder %v2712, 1
    %2715 = vrot.lane.b32.xlu0 %v2547, 32
    %v2716 = vpop.permute.xlu0 %2715
    %v2718 = vsel %vm2713, %v2692, %v2716
    %v2719 = vld [vmem:[#allocation3 + $0x10] sm:$0xc]
    %v2720 = vld [vmem:[#allocation3 + $0x8] sm:$0x30]
    %2722 = vrot.lane.b32.xlu0 %v2687, 32
    %v2723 = vpop.permute.xlu0 %2722
    %v2724 = vsel %vm320, %v2723, 0
    %2726 = vmatpush.msra.mxu0 0.0
    %2727 = vmatpush.msra.mxu0 0.0
    %2728 = vmatpush.msra.mxu0 0.0
    %2729 = vmatpush.msra.mxu0 0.0
    %2730 = vmatpush.msra.mxu0 0.0
    %2731 = vmatpush.msra.mxu0 0.0
    %2732 = vmatpush.msra.mxu0 0.0
    %2733 = vmatpush.msra.mxu0 0.0
    %2734 = vmatpush.msra.mxu0 0.0
    %2735 = vmatpush.msra.mxu0 0.0
    %2736 = vmatpush.msra.mxu0 0.0
    %2737 = vmatpush.msra.mxu0 0.0
    %2738 = vmatpush.msra.mxu0 %v1879
    %2739 = vmatpush.msra.mxu0 %v1878
    %2740 = vmatpush.msra.mxu0 %v1877
    %2741 = vmatpush.msra.mxu0 %v1876
    %2742 = vmatmul.f32.gmra.mxu0 %v2724
    %v2743 = vpop.f32.mrf.mxu0
    %v2744 = vadd.f32 0.0, %v2743
    %2745 = vdwg.mxu0
    %v2747 = vrot.slane %v2744, 6
    %v2749 = vadd.f32 %v2719, %v2747
    %v2750 = vxor.u32 %v2749, 2147483648
    %v2751 = vmul.f32 %v2750, 1.442695
    %v2752 = vpow.pop %v2751
    %v2753 = vadd.f32 %v2752, 1.0
    %v2754 = vrcp.pop %v2753
    %v2755 = vmul.f32 %v2753, %v2754
    %v2756 = vsub.f32 1.0, %v2755
    %v2757 = vmul.f32 %v2754, %v2756
    %v2758 = vadd.f32 %v2754, %v2757
    %vm2759 = vweird.f32 %v2753
    %vm2760 = vweird.f32 %v2754
    %vm2761 = vmor %vm2759, %vm2760
    %v2762 = vsel %vm2761, %v2754, %v2758
    %v2763 = vand.u32 2147483647, %v2753
    %vm2764 = vcmp.eq.f32.partialorder %v2763, 8.507059e+37
    %v2765 = vand.u32 %v2753, 2147483648
    %v2766 = vor.u32 1.1754944e-38, %v2765
    %v2767 = vsel %vm2764, %v2766, %v2762
    %v2768 = vmul.f32 1.0, %v2767
    %v2769 = vtanh.pop %v2749
    %v2771 = vrot.slane %v2688, 6
    %v2773 = vmul.f32 %v2768, %v2771
    %2775 = vrot.lane.b32.xlu0 %v2769, 64
    %v2776 = vpop.permute.xlu0 %2775
    %v2778 = vmul.f32 %v2768, %v2776
    %2780 = vrot.lane.b32.xlu0 %v2778, 32
    %v2781 = vpop.permute.xlu0 %2780
    %v2783 = vadd.f32 %v2773, %v2781
    %v2784 = vtanh.pop %v2783
    %2786 = vrot.lane.b32.xlu0 %v2784, 64
    %v2787 = vpop.permute.xlu0 %2786
    %v2789 = vmul.f32 %v2768, %v2787
    %v2791 = vsel %vm320, %v2695, 0
    %2793 = vmatpush.msra.mxu0 0.0
    %2794 = vmatpush.msra.mxu0 0.0
    %2795 = vmatpush.msra.mxu0 0.0
    %2796 = vmatpush.msra.mxu0 0.0
    %2797 = vmatpush.msra.mxu0 0.0
    %2798 = vmatpush.msra.mxu0 0.0
    %2799 = vmatpush.msra.mxu0 0.0
    %2800 = vmatpush.msra.mxu0 0.0
    %2801 = vmatpush.msra.mxu0 0.0
    %2802 = vmatpush.msra.mxu0 0.0
    %2803 = vmatpush.msra.mxu0 0.0
    %2804 = vmatpush.msra.mxu0 0.0
    %2805 = vmatpush.msra.mxu0 %v1883
    %2806 = vmatpush.msra.mxu0 %v1882
    %2807 = vmatpush.msra.mxu0 %v1881
    %2808 = vmatpush.msra.mxu0 %v1880
    %2809 = vmatmul.f32.gmra.mxu0 %v2791
    %v2810 = vpop.f32.mrf.mxu0
    %v2811 = vadd.f32 0.0, %v2810
    %2812 = vdwg.mxu0
    %v2814 = vrot.slane %v2811, 4
    %v2816 = vadd.f32 %v2720, %v2814
    %v2817 = vxor.u32 %v2816, 2147483648
    %v2818 = vmul.f32 %v2817, 1.442695
    %v2819 = vpow.pop %v2818
    %v2820 = vadd.f32 %v2819, 1.0
    %v2821 = vrcp.pop %v2820
    %v2822 = vmul.f32 %v2820, %v2821
    %v2823 = vsub.f32 1.0, %v2822
    %v2824 = vmul.f32 %v2821, %v2823
    %v2825 = vadd.f32 %v2821, %v2824
    %vm2826 = vweird.f32 %v2820
    %vm2827 = vweird.f32 %v2821
    %vm2828 = vmor %vm2826, %vm2827
    %v2829 = vsel %vm2828, %v2821, %v2825
    %v2830 = vand.u32 2147483647, %v2820
    %vm2831 = vcmp.eq.f32.partialorder %v2830, 8.507059e+37
    %v2832 = vand.u32 %v2820, 2147483648
    %v2833 = vor.u32 1.1754944e-38, %v2832
    %v2834 = vsel %vm2831, %v2833, %v2829
    %v2835 = vmul.f32 1.0, %v2834
    %v2836 = vtanh.pop %v2816
    %v2838 = vrot.slane %v2704, 4
    %2839 = vrot.lane.b32.xlu0 %v2838, 32
    %v2840 = vpop.permute.xlu0 %2839
    %v2842 = vmul.f32 %v2835, %v2840
    %2844 = vrot.lane.b32.xlu0 %v2836, 64
    %v2845 = vpop.permute.xlu0 %2844
    %v2847 = vmul.f32 %v2835, %v2845
    %2849 = vrot.lane.b32.xlu0 %v2847, 32
    %v2850 = vpop.permute.xlu0 %2849
    %v2852 = vadd.f32 %v2842, %v2850
    %v2853 = vtanh.pop %v2852
    %2855 = vrot.lane.b32.xlu0 %v2853, 64
    %v2856 = vpop.permute.xlu0 %2855
    %v2858 = vmul.f32 %v2835, %v2856
    %v2860 = vrot.slane %v2789, 2
    %2861 = vrot.lane.b32.xlu0 %v2860, 32
    %v2862 = vpop.permute.xlu0 %2861
    %v2865 = vsel %vm894, %v2862, %v2723
    %v2867 = vrot.slane %v2783, 2
    %2868 = vrot.lane.b32.xlu0 %v2867, 96
    %v2869 = vpop.permute.xlu0 %2868
    %2871 = vrot.lane.b32.xlu0 %v2688, 96
    %v2872 = vpop.permute.xlu0 %2871
    %v2874 = vsel %vm894, %v2869, %v2872
    %v2876 = vrot.slane %v2858, 4
    %2877 = vrot.lane.b32.xlu0 %v2876, 32
    %v2878 = vpop.permute.xlu0 %2877
    %v2880 = vsel %vm877, %v2878, %v2695
    %v2882 = vrot.slane %v2852, 4
    %2883 = vrot.lane.b32.xlu0 %v2882, 96
    %v2884 = vpop.permute.xlu0 %2883
    %v2886 = vsel %vm877, %v2884, %v2704
    %vm2887 = vcmp.eq.f32.partialorder %v64, 2.0
    %v2888 = vsel %vm2887, 1, 0
    %vm2889 = vcmp.eq.s32.totalorder %v2888, 1
    %vm2890 = vmand %vm2889, %vm871
    %v2891 = vsel %vm2890, 1, 0
    %2892 = vset.pattern.permute.xlu0 0
    %2893 = vperm.xlu0 %2892, %v2891
    %v2894 = vpop.permute.xlu0 %2893
    %vm2895 = vcmp.eq.s32.totalorder %v2894, 1
    %v2896 = vsel %vm2895, %v2878, %v2718
    %v2897 = vld [vmem:[#allocation3 + $0x10] sm:$0x30]
    %v2898 = vld [vmem:[#allocation3 + $0x8] sm:$0xc]
    %v2900 = vsel %vm320, %v2865, 0
    %2902 = vmatpush.msra.mxu0 0.0
    %2903 = vmatpush.msra.mxu0 0.0
    %2904 = vmatpush.msra.mxu0 0.0
    %2905 = vmatpush.msra.mxu0 0.0
    %2906 = vmatpush.msra.mxu0 0.0
    %2907 = vmatpush.msra.mxu0 0.0
    %2908 = vmatpush.msra.mxu0 0.0
    %2909 = vmatpush.msra.mxu0 0.0
    %2910 = vmatpush.msra.mxu0 0.0
    %2911 = vmatpush.msra.mxu0 0.0
    %2912 = vmatpush.msra.mxu0 0.0
    %2913 = vmatpush.msra.mxu0 0.0
    %2914 = vmatpush.msra.mxu0 %v1879
    %2915 = vmatpush.msra.mxu0 %v1878
    %2916 = vmatpush.msra.mxu0 %v1877
    %2917 = vmatpush.msra.mxu0 %v1876
    %2918 = vmatmul.f32.gmra.mxu0 %v2900
    %v2919 = vpop.f32.mrf.mxu0
    %v2920 = vadd.f32 0.0, %v2919
    %2921 = vdwg.mxu0
    %v2923 = vrot.slane %v2920, 4
    %v2925 = vadd.f32 %v2897, %v2923
    %v2926 = vxor.u32 %v2925, 2147483648
    %v2927 = vmul.f32 %v2926, 1.442695
    %v2928 = vpow.pop %v2927
    %v2929 = vadd.f32 %v2928, 1.0
    %v2930 = vrcp.pop %v2929
    %v2931 = vmul.f32 %v2929, %v2930
    %v2932 = vsub.f32 1.0, %v2931
    %v2933 = vmul.f32 %v2930, %v2932
    %v2934 = vadd.f32 %v2930, %v2933
    %vm2935 = vweird.f32 %v2929
    %vm2936 = vweird.f32 %v2930
    %vm2937 = vmor %vm2935, %vm2936
    %v2938 = vsel %vm2937, %v2930, %v2934
    %v2939 = vand.u32 2147483647, %v2929
    %vm2940 = vcmp.eq.f32.partialorder %v2939, 8.507059e+37
    %v2941 = vand.u32 %v2929, 2147483648
    %v2942 = vor.u32 1.1754944e-38, %v2941
    %v2943 = vsel %vm2940, %v2942, %v2938
    %v2944 = vmul.f32 1.0, %v2943
    %v2945 = vtanh.pop %v2925
    %v2947 = vrot.slane %v2874, 4
    %2948 = vrot.lane.b32.xlu0 %v2947, 32
    %v2949 = vpop.permute.xlu0 %2948
    %v2951 = vmul.f32 %v2944, %v2949
    %2953 = vrot.lane.b32.xlu0 %v2945, 64
    %v2954 = vpop.permute.xlu0 %2953
    %v2956 = vmul.f32 %v2944, %v2954
    %2958 = vrot.lane.b32.xlu0 %v2956, 32
    %v2959 = vpop.permute.xlu0 %2958
    %v2961 = vadd.f32 %v2951, %v2959
    %v2962 = vtanh.pop %v2961
    %2964 = vrot.lane.b32.xlu0 %v2962, 64
    %v2965 = vpop.permute.xlu0 %2964
    %v2967 = vmul.f32 %v2944, %v2965
    %v2969 = vsel %vm320, %v2880, 0
    %2971 = vmatpush.msra.mxu0 0.0
    %2972 = vmatpush.msra.mxu0 0.0
    %2973 = vmatpush.msra.mxu0 0.0
    %2974 = vmatpush.msra.mxu0 0.0
    %2975 = vmatpush.msra.mxu0 0.0
    %2976 = vmatpush.msra.mxu0 0.0
    %2977 = vmatpush.msra.mxu0 0.0
    %2978 = vmatpush.msra.mxu0 0.0
    %2979 = vmatpush.msra.mxu0 0.0
    %2980 = vmatpush.msra.mxu0 0.0
    %2981 = vmatpush.msra.mxu0 0.0
    %2982 = vmatpush.msra.mxu0 0.0
    %2983 = vmatpush.msra.mxu0 %v1883
    %2984 = vmatpush.msra.mxu0 %v1882
    %2985 = vmatpush.msra.mxu0 %v1881
    %2986 = vmatpush.msra.mxu0 %v1880
    %2987 = vmatmul.f32.gmra.mxu0 %v2969
    %v2988 = vpop.f32.mrf.mxu0
    %v2989 = vadd.f32 0.0, %v2988
    %2990 = vdwg.mxu0
    %v2992 = vrot.slane %v2989, 6
    %v2994 = vadd.f32 %v2898, %v2992
    %v2995 = vxor.u32 %v2994, 2147483648
    %v2996 = vmul.f32 %v2995, 1.442695
    %v2997 = vpow.pop %v2996
    %v2998 = vadd.f32 %v2997, 1.0
    %v2999 = vrcp.pop %v2998
    %v3000 = vmul.f32 %v2998, %v2999
    %v3001 = vsub.f32 1.0, %v3000
    %v3002 = vmul.f32 %v2999, %v3001
    %v3003 = vadd.f32 %v2999, %v3002
    %vm3004 = vweird.f32 %v2998
    %vm3005 = vweird.f32 %v2999
    %vm3006 = vmor %vm3004, %vm3005
    %v3007 = vsel %vm3006, %v2999, %v3003
    %v3008 = vand.u32 2147483647, %v2998
    %vm3009 = vcmp.eq.f32.partialorder %v3008, 8.507059e+37
    %v3010 = vand.u32 %v2998, 2147483648
    %v3011 = vor.u32 1.1754944e-38, %v3010
    %v3012 = vsel %vm3009, %v3011, %v3007
    %v3013 = vmul.f32 1.0, %v3012
    %v3014 = vtanh.pop %v2994
    %v3016 = vrot.slane %v2886, 6
    %3017 = vrot.lane.b32.xlu0 %v3016, 32
    %v3018 = vpop.permute.xlu0 %3017
    %v3020 = vmul.f32 %v3013, %v3018
    %3022 = vrot.lane.b32.xlu0 %v3014, 64
    %v3023 = vpop.permute.xlu0 %3022
    %v3025 = vmul.f32 %v3013, %v3023
    %3027 = vrot.lane.b32.xlu0 %v3025, 32
    %v3028 = vpop.permute.xlu0 %3027
    %v3030 = vadd.f32 %v3020, %v3028
    %v3031 = vtanh.pop %v3030
    %3033 = vrot.lane.b32.xlu0 %v3031, 64
    %v3034 = vpop.permute.xlu0 %3033
    %v3036 = vmul.f32 %v3013, %v3034
    %v3038 = vrot.slane %v2967, 4
    %3039 = vrot.lane.b32.xlu0 %v3038, 32
    %v3040 = vpop.permute.xlu0 %3039
    %v3042 = vsel %vm714, %v3040, %v2865
    %v3044 = vrot.slane %v2961, 4
    %3045 = vrot.lane.b32.xlu0 %v3044, 96
    %v3046 = vpop.permute.xlu0 %3045
    %v3048 = vsel %vm714, %v3046, %v2874
    %v3050 = vrot.slane %v3036, 2
    %3051 = vrot.lane.b32.xlu0 %v3050, 32
    %v3052 = vpop.permute.xlu0 %3051
    %v3054 = vsel %vm693, %v3052, %v2880
    %v3056 = vrot.slane %v3030, 2
    %3057 = vrot.lane.b32.xlu0 %v3056, 96
    %v3058 = vpop.permute.xlu0 %3057
    %v3060 = vsel %vm693, %v3058, %v2886
    %vm3061 = vcmp.eq.f32.partialorder %v64, 1.0
    %v3062 = vsel %vm3061, 1, 0
    %vm3063 = vcmp.eq.s32.totalorder %v3062, 1
    %vm3064 = vmand %vm3063, %vm687
    %v3065 = vsel %vm3064, 1, 0
    %3066 = vset.pattern.permute.xlu0 0
    %3067 = vperm.xlu0 %3066, %v3065
    %v3068 = vpop.permute.xlu0 %3067
    %vm3069 = vcmp.eq.s32.totalorder %v3068, 1
    %v3070 = vsel %vm3069, %v3052, %v2896
    %v3071 = vld [vmem:[#allocation3 + $0x10] sm:$0xc0]
    %v3072 = vld [vmem:[#allocation3 + $0x8] sm:$0x3]
    %v3074 = vsel %vm320, %v3042, 0
    %3076 = vmatpush.msra.mxu0 0.0
    %3077 = vmatpush.msra.mxu0 0.0
    %3078 = vmatpush.msra.mxu0 0.0
    %3079 = vmatpush.msra.mxu0 0.0
    %3080 = vmatpush.msra.mxu0 0.0
    %3081 = vmatpush.msra.mxu0 0.0
    %3082 = vmatpush.msra.mxu0 0.0
    %3083 = vmatpush.msra.mxu0 0.0
    %3084 = vmatpush.msra.mxu0 0.0
    %3085 = vmatpush.msra.mxu0 0.0
    %3086 = vmatpush.msra.mxu0 0.0
    %3087 = vmatpush.msra.mxu0 0.0
    %3088 = vmatpush.msra.mxu0 %v1879
    %3089 = vmatpush.msra.mxu0 %v1878
    %3090 = vmatpush.msra.mxu0 %v1877
    %3091 = vmatpush.msra.mxu0 %v1876
    %3092 = vmatmul.f32.gmra.mxu0 %v3074
    %v3093 = vpop.f32.mrf.mxu0
    %v3094 = vadd.f32 0.0, %v3093
    %3095 = vdwg.mxu0
    %v3097 = vrot.slane %v3094, 2
    %v3099 = vadd.f32 %v3071, %v3097
    %v3100 = vxor.u32 %v3099, 2147483648
    %v3101 = vmul.f32 %v3100, 1.442695
    %v3102 = vpow.pop %v3101
    %v3103 = vadd.f32 %v3102, 1.0
    %v3104 = vrcp.pop %v3103
    %v3105 = vmul.f32 %v3103, %v3104
    %v3106 = vsub.f32 1.0, %v3105
    %v3107 = vmul.f32 %v3104, %v3106
    %v3108 = vadd.f32 %v3104, %v3107
    %vm3109 = vweird.f32 %v3103
    %vm3110 = vweird.f32 %v3104
    %vm3111 = vmor %vm3109, %vm3110
    %v3112 = vsel %vm3111, %v3104, %v3108
    %v3113 = vand.u32 2147483647, %v3103
    %vm3114 = vcmp.eq.f32.partialorder %v3113, 8.507059e+37
    %v3115 = vand.u32 %v3103, 2147483648
    %v3116 = vor.u32 1.1754944e-38, %v3115
    %v3117 = vsel %vm3114, %v3116, %v3112
    %v3118 = vmul.f32 1.0, %v3117
    %v3119 = vtanh.pop %v3099
    %v3121 = vrot.slane %v3048, 2
    %3122 = vrot.lane.b32.xlu0 %v3121, 32
    %v3123 = vpop.permute.xlu0 %3122
    %v3125 = vmul.f32 %v3118, %v3123
    %3127 = vrot.lane.b32.xlu0 %v3119, 64
    %v3128 = vpop.permute.xlu0 %3127
    %v3130 = vmul.f32 %v3118, %v3128
    %3132 = vrot.lane.b32.xlu0 %v3130, 32
    %v3133 = vpop.permute.xlu0 %3132
    %v3135 = vadd.f32 %v3125, %v3133
    %v3136 = vtanh.pop %v3135
    %3138 = vrot.lane.b32.xlu0 %v3136, 64
    %v3139 = vpop.permute.xlu0 %3138
    %v3141 = vmul.f32 %v3118, %v3139
    %v3143 = vsel %vm320, %v3054, 0
    %3145 = vmatpush.msra.mxu0 0.0
    %3146 = vmatpush.msra.mxu0 0.0
    %3147 = vmatpush.msra.mxu0 0.0
    %3148 = vmatpush.msra.mxu0 0.0
    %3149 = vmatpush.msra.mxu0 0.0
    %3150 = vmatpush.msra.mxu0 0.0
    %3151 = vmatpush.msra.mxu0 0.0
    %3152 = vmatpush.msra.mxu0 0.0
    %3153 = vmatpush.msra.mxu0 0.0
    %3154 = vmatpush.msra.mxu0 0.0
    %3155 = vmatpush.msra.mxu0 0.0
    %3156 = vmatpush.msra.mxu0 0.0
    %3157 = vmatpush.msra.mxu0 %v1883
    %3158 = vmatpush.msra.mxu0 %v1882
    %3159 = vmatpush.msra.mxu0 %v1881
    %3160 = vmatpush.msra.mxu0 %v1880
    %3161 = vmatmul.f32.gmra.mxu0 %v3143
    %v3162 = vpop.f32.mrf.mxu0
    %v3163 = vadd.f32 0.0, %v3162
    %3164 = vdwg.mxu0
    %v3165 = vadd.f32 %v3072, %v3163
    %v3166 = vxor.u32 %v3165, 2147483648
    %v3167 = vmul.f32 %v3166, 1.442695
    %v3168 = vpow.pop %v3167
    %v3169 = vadd.f32 %v3168, 1.0
    %v3170 = vrcp.pop %v3169
    %v3171 = vmul.f32 %v3169, %v3170
    %v3172 = vsub.f32 1.0, %v3171
    %v3173 = vmul.f32 %v3170, %v3172
    %v3174 = vadd.f32 %v3170, %v3173
    %vm3175 = vweird.f32 %v3169
    %vm3176 = vweird.f32 %v3170
    %vm3177 = vmor %vm3175, %vm3176
    %v3178 = vsel %vm3177, %v3170, %v3174
    %v3179 = vand.u32 2147483647, %v3169
    %vm3180 = vcmp.eq.f32.partialorder %v3179, 8.507059e+37
    %v3181 = vand.u32 %v3169, 2147483648
    %v3182 = vor.u32 1.1754944e-38, %v3181
    %v3183 = vsel %vm3180, %v3182, %v3178
    %v3184 = vmul.f32 1.0, %v3183
    %v3185 = vtanh.pop %v3165
    %3187 = vrot.lane.b32.xlu0 %v3060, 32
    %v3188 = vpop.permute.xlu0 %3187
    %v3190 = vmul.f32 %v3184, %v3188
    %3192 = vrot.lane.b32.xlu0 %v3185, 64
    %v3193 = vpop.permute.xlu0 %3192
    %v3195 = vmul.f32 %v3184, %v3193
    %3197 = vrot.lane.b32.xlu0 %v3195, 32
    %v3198 = vpop.permute.xlu0 %3197
    %v3200 = vadd.f32 %v3190, %v3198
    %v3201 = vtanh.pop %v3200
    %3203 = vrot.lane.b32.xlu0 %v3201, 64
    %v3204 = vpop.permute.xlu0 %3203
    %v3206 = vmul.f32 %v3184, %v3204
    %v3208 = vrot.slane %v3141, 6
    %3209 = vrot.lane.b32.xlu0 %v3208, 32
    %v3210 = vpop.permute.xlu0 %3209
    %v3212 = vsel %vm525, %v3210, %v3042
    %vm3213 = vcmp.eq.f32.partialorder %v64, 0.0
    %v3214 = vsel %vm3213, 1, 0
    %vm3215 = vcmp.eq.s32.totalorder %v3214, 1
    %vm3216 = vmand %vm3215, %vm509
    %v3217 = vsel %vm3216, 1, 0
    %3218 = vset.pattern.permute.xlu0 0
    %3219 = vperm.xlu0 %3218, %v3217
    %v3220 = vpop.permute.xlu0 %3219
    %vm3221 = vcmp.eq.s32.totalorder %v3220, 1
    %3223 = vrot.lane.b32.xlu0 %v3070, 96
    %v3224 = vpop.permute.xlu0 %3223
    %v3226 = vsel %vm3221, %v3206, %v3224
    %vm3227 = vcmp.gt.f32.partialorder %v55, %v64
    %v3228 = vsel %vm3227, 1, 0
    %3229 = vset.pattern.permute.xlu0 0
    %3230 = vperm.xlu0 %3229, %v3228
    %v3231 = vpop.permute.xlu0 %3230
    %vm3232 = vcmp.eq.s32.totalorder %v3231, 1
    %v3233 = vsel %vm3232, %v3212, 0.0
    %v3234 = vld [vmem:[%s14] sm:$0xff]
    %v3235 = vld [vmem:[%s14 + $0x8] sm:$0xff]
    %v3236 = vld [vmem:[%s14 + $0x10] sm:$0xff]
    %v3237 = vld [vmem:[%s14 + $0x18] sm:$0xff]
    %v3238 = vld [vmem:[%s14 + $0x20] sm:$0xff]
    %v3239 = vld [vmem:[%s14 + $0x28] sm:$0xff]
    %v3240 = vld [vmem:[%s14 + $0x30] sm:$0xff]
    %v3241 = vld [vmem:[%s14 + $0x38] sm:$0xff]
    %3243 = vrot.lane.b32.xlu0 %v3226, 32
    %v3244 = vpop.permute.xlu0 %3243
    %v3245 = vsel %vm320, %v3244, 0
    %3247 = vmatpush.msra.mxu0 0.0
    %3248 = vmatpush.msra.mxu0 0.0
    %3249 = vmatpush.msra.mxu0 0.0
    %3250 = vmatpush.msra.mxu0 0.0
    %3251 = vmatpush.msra.mxu0 0.0
    %3252 = vmatpush.msra.mxu0 0.0
    %3253 = vmatpush.msra.mxu0 0.0
    %3254 = vmatpush.msra.mxu0 0.0
    %3255 = vmatpush.msra.mxu0 0.0
    %3256 = vmatpush.msra.mxu0 0.0
    %3257 = vmatpush.msra.mxu0 0.0
    %3258 = vmatpush.msra.mxu0 0.0
    %3259 = vmatpush.msra.mxu0 %v3241
    %3260 = vmatpush.msra.mxu0 %v3240
    %3261 = vmatpush.msra.mxu0 %v3239
    %3262 = vmatpush.msra.mxu0 %v3238
    %3263 = vmatmul.f32.gmra.mxu0 %v3245
    %v3264 = vpop.f32.mrf.mxu0
    %v3265 = vadd.f32 0.0, %v3264
    %3266 = vdwg.mxu0
    %v3268 = vsel %vm320, %v3233, 0
    %3270 = vmatpush.msra.mxu0 0.0
    %3271 = vmatpush.msra.mxu0 0.0
    %3272 = vmatpush.msra.mxu0 0.0
    %3273 = vmatpush.msra.mxu0 0.0
    %3274 = vmatpush.msra.mxu0 0.0
    %3275 = vmatpush.msra.mxu0 0.0
    %3276 = vmatpush.msra.mxu0 0.0
    %3277 = vmatpush.msra.mxu0 0.0
    %3278 = vmatpush.msra.mxu0 0.0
    %3279 = vmatpush.msra.mxu0 0.0
    %3280 = vmatpush.msra.mxu0 0.0
    %3281 = vmatpush.msra.mxu0 0.0
    %3282 = vmatpush.msra.mxu0 %v3237
    %3283 = vmatpush.msra.mxu0 %v3236
    %3284 = vmatpush.msra.mxu0 %v3235
    %3285 = vmatpush.msra.mxu0 %v3234
    %3286 = vmatmul.f32.gmra.mxu0 %v3268
    %v3287 = vpop.f32.mrf.mxu0
    %v3288 = vadd.f32 %v3265, %v3287
    %3289 = vdwg.mxu0
    %v3290 = vld [vmem:[%s15] sm:$0x1]
    %v3292 = vperm.slane %v3290, 0
    %v3294 = vadd.f32 %v3288, %v3292
    %vm3295 = vcmask 123904
    %3296 = vst.msk [vmem:[#allocation6] sm:$0x3] %vm3295, %v3294
    // Predicated region
    $region66: #{tpu_custom_call.1} parent=1 // pred_check
      _
    $region67: #{tpu_custom_call.1} parent=1 // pred_check_branch
      %3298 = sbr.rel (0) target = $region69
    $region68: #{tpu_custom_call.1} parent=1 // pred_region
      %3300 = vsyncadd [#allocation7], 0
      %s3302 = sshll.u32 [#allocation6], 4
      %s3303 = int_to_ptr.vmem [resolvable:$true] %s3302
      %s3304 = sshll.u32 %s16, 4
      %s3305 = int_to_ptr.hbm [resolvable:$true] %s3304
      %3307 = dma.vmem_to_hbm [thread:$0]  %s3303, 32, %s3305, [#allocation7]
    $region69: #{tpu_custom_call.1} parent=1 // pred_fallthru
      _
    // Predicated region
    $region70: #{tpu_custom_call.1} parent=1 // pred_check
      _
    $region71: #{tpu_custom_call.1} parent=1 // pred_check_branch
      %3309 = sbr.rel (0) target = $region73
    $region72: #{tpu_custom_call.1} parent=1 // pred_region
      %3311 = dma.done [#allocation7], 32
    $region73: #{tpu_custom_call.1} parent=1 // pred_fallthru
      _
    %3312 = vsyncpa [#allocation7], 1

</llo_original>
